<compile_context>
chip_gen: v6e
topology: v6e:2x2x1
jax: 0.10.0
libtpu: 0.0.40
codegen_flags: <defaults>
</compile_context>

<pallas_src>
from collections import namedtuple

import jax
import jax.numpy as jnp
from jax.experimental import pallas as pl
from jax.experimental.pallas import tpu as pltpu

LossTuple = namedtuple(
    "LossTuple",
    ["rpn_loc_loss", "rpn_cls_loss", "roi_loc_loss", "roi_cls_loss", "total_loss"],
)

RPN_SIGMA = 3.0
ROI_SIGMA = 1.0
LOC_NORM_MEAN = jnp.array([0.0, 0.0, 0.0, 0.0], jnp.float32)
LOC_NORM_STD = jnp.array([0.1, 0.1, 0.2, 0.2], jnp.float32)

# 40 MiB: above the 16/32 MiB scoped defaults (v5e/v6e), safely below v7x's
# 64 MiB physical VMEM.
VMEM_LIMIT = 40 * 1024 * 1024


def _round_up(x, m):
    return ((x + m - 1) // m) * m


def _pad2(x, rows, cols, value=0.0):
    r, c = x.shape
    if r == rows and c == cols:
        return x
    return jnp.pad(x, ((0, rows - r), (0, cols - c)), constant_values=value)


# ---------------------------------------------------------------------------
# Pallas kernels
# ---------------------------------------------------------------------------

def pallas_matmul(a, w, b=None, relu=False, tm=256, tn=256, tk=512):
    """Tiled (M,K)@(K,N)+bias(+ReLU).  bf16 operands, f32 accumulation."""
    M, K = a.shape
    K2, N = w.shape
    assert K == K2
    if b is None:
        b = jnp.zeros((N,), jnp.float32)

    tm_e = min(tm, _round_up(M, 8))
    tn_e = min(tn, _round_up(N, 128))
    tk_e = min(tk, _round_up(K, 128))
    Mp, Np, Kp = _round_up(M, tm_e), _round_up(N, tn_e), _round_up(K, tk_e)

    a_p = _pad2(a.astype(jnp.bfloat16), Mp, Kp)
    w_p = _pad2(w.astype(jnp.bfloat16), Kp, Np)
    b_p = _pad2(b.reshape(1, N).astype(jnp.float32), 1, Np)

    def kernel(a_ref, w_ref, b_ref, o_ref, acc_ref):
        @pl.when(pl.program_id(2) == 0)
        def _():
            acc_ref[...] = jnp.zeros_like(acc_ref)

        acc_ref[...] += jnp.dot(a_ref[...], w_ref[...],
                                preferred_element_type=jnp.float32)

        @pl.when(pl.program_id(2) == pl.num_programs(2) - 1)
        def _():
            y = acc_ref[...] + b_ref[...]
            if relu:
                y = jnp.maximum(y, 0.0)
            o_ref[...] = y

    out = pl.pallas_call(
        kernel,
        out_shape=jax.ShapeDtypeStruct((Mp, Np), jnp.float32),
        grid=(Mp // tm_e, Np // tn_e, Kp // tk_e),
        in_specs=[
            pl.BlockSpec((tm_e, tk_e), lambda i, j, k: (i, k)),
            pl.BlockSpec((tk_e, tn_e), lambda i, j, k: (k, j)),
            pl.BlockSpec((1, tn_e), lambda i, j, k: (0, j)),
        ],
        out_specs=pl.BlockSpec((tm_e, tn_e), lambda i, j, k: (i, j)),
        scratch_shapes=[pltpu.VMEM((tm_e, tn_e), jnp.float32)],
        compiler_params=pltpu.CompilerParams(
            dimension_semantics=("parallel", "parallel", "arbitrary"),
            vmem_limit_bytes=VMEM_LIMIT),
    )(a_p, w_p, b_p)
    return out[:M, :N]


def rpn_head_fused(patches, w_mid, b_mid, w_cat_t, b_cat_t, tm=256):
    """Fused RPN head: mid-conv matmul + ReLU (kept in VMEM) then the
    concatenated (loc|score) 1x1 head.  Output is lane-dense (4+2, H*W)."""
    M, K = patches.shape
    Cmid = w_mid.shape[1]
    n_out = w_cat_t.shape[0]

    tm_e = min(tm, _round_up(M, 8))
    Mp = _round_up(M, tm_e)
    Kp = _round_up(K, 128)

    p_p = _pad2(patches.astype(jnp.bfloat16), Mp, Kp)
    wm_p = _pad2(w_mid.astype(jnp.bfloat16), Kp, Cmid)
    bm = b_mid.reshape(1, Cmid).astype(jnp.float32)
    wc = w_cat_t.astype(jnp.float32)
    bc = b_cat_t.astype(jnp.float32)

    def kernel(p_ref, wm_ref, bm_ref, wc_ref, bc_ref, o_ref):
        mid = jnp.dot(p_ref[...], wm_ref[...],
                      preferred_element_type=jnp.float32)
        mid = jnp.maximum(mid + bm_ref[...], 0.0)
        out_t = jax.lax.dot_general(
            wc_ref[...], mid, (((1,), (1,)), ((), ())),
            preferred_element_type=jnp.float32)
        o_ref[...] = out_t + bc_ref[...]

    out = pl.pallas_call(
        kernel,
        out_shape=jax.ShapeDtypeStruct((n_out, Mp), jnp.float32),
        grid=(Mp // tm_e,),
        in_specs=[
            pl.BlockSpec((tm_e, Kp), lambda i: (i, 0)),
            pl.BlockSpec((Kp, Cmid), lambda i: (0, 0)),
            pl.BlockSpec((1, Cmid), lambda i: (0, 0)),
            pl.BlockSpec((n_out, Cmid), lambda i: (0, 0)),
            pl.BlockSpec((n_out, 1), lambda i: (0, 0)),
        ],
        out_specs=pl.BlockSpec((n_out, tm_e), lambda i: (0, i)),
        compiler_params=pltpu.CompilerParams(
            dimension_semantics=("parallel",),
            vmem_limit_bytes=VMEM_LIMIT),
    )(p_p, wm_p, bm, wc, bc)
    return out[:, :M]


def roi_head_fused(feat_flat, sample_roi, H, W, w_fc1, b_fc1, w_cat_t, b_cat_t,
                   t_hw=512):
    """Fused ROI head: in-kernel RoI average-pool mask, accumulated over H*W
    blocks, then fc1+ReLU and the concatenated (cls_loc|score) head.
    Output lane-dense (n_class*4 + n_class, n_roi)."""
    # TODO(synk): RoIPool 7x7 replaced with RoI average pooling (mask matmul).
    HW, C = feat_flat.shape
    n_roi = sample_roi.shape[0]
    hidden = w_fc1.shape[1]
    n_out = w_cat_t.shape[0]

    t_e = min(t_hw, _round_up(HW, 8))
    HWp = _round_up(HW, t_e)

    feat_p = _pad2(feat_flat.astype(jnp.bfloat16), HWp, C)
    ys = (jnp.arange(HW, dtype=jnp.int32) // W).astype(jnp.float32) + 0.5
    xs = (jnp.arange(HW, dtype=jnp.int32) % W).astype(jnp.float32) + 0.5
    coords = jnp.stack([ys, xs], axis=0)                        # (2, HW)
    coords = _pad2(coords, 2, HWp, value=-1e6)                  # pads are outside any roi

    roi = sample_roi.astype(jnp.float32)
    wf = w_fc1.astype(jnp.bfloat16)
    bf = b_fc1.reshape(1, hidden).astype(jnp.float32)
    wc = w_cat_t.astype(jnp.float32)
    bc = b_cat_t.astype(jnp.float32)

    def kernel(roi_ref, coord_ref, feat_ref, wf_ref, bf_ref, wc_ref, bc_ref,
               o_ref, accf, accc):
        i = pl.program_id(0)

        @pl.when(i == 0)
        def _():
            accf[...] = jnp.zeros_like(accf)
            accc[...] = jnp.zeros_like(accc)

        py = coord_ref[0:1, :]
        px = coord_ref[1:2, :]
        y0 = roi_ref[:, 0:1]
        x0 = roi_ref[:, 1:2]
        y1 = roi_ref[:, 2:3]
        x1 = roi_ref[:, 3:4]
        mask = ((py >= y0) & (py <= y1) & (px >= x0) & (px <= x1)).astype(jnp.float32)
        accc[...] += jnp.sum(mask, axis=1, keepdims=True)
        accf[...] += jnp.dot(mask.astype(jnp.bfloat16), feat_ref[...],
                             preferred_element_type=jnp.float32)

        @pl.when(i == pl.num_programs(0) - 1)
        def _():
            roi_feat = accf[...] / jnp.maximum(accc[...], 1.0)
            h1 = jnp.dot(roi_feat.astype(jnp.bfloat16), wf_ref[...],
                         preferred_element_type=jnp.float32)
            h1 = jnp.maximum(h1 + bf_ref[...], 0.0)
            out_t = jax.lax.dot_general(
                wc_ref[...], h1, (((1,), (1,)), ((), ())),
                preferred_element_type=jnp.float32)
            o_ref[...] = out_t + bc_ref[...]

    out = pl.pallas_call(
        kernel,
        out_shape=jax.ShapeDtypeStruct((n_out, n_roi), jnp.float32),
        grid=(HWp // t_e,),
        in_specs=[
            pl.BlockSpec((n_roi, 4), lambda i: (0, 0)),
            pl.BlockSpec((2, t_e), lambda i: (0, i)),
            pl.BlockSpec((t_e, C), lambda i: (i, 0)),
            pl.BlockSpec((C, hidden), lambda i: (0, 0)),
            pl.BlockSpec((1, hidden), lambda i: (0, 0)),
            pl.BlockSpec((n_out, hidden), lambda i: (0, 0)),
            pl.BlockSpec((n_out, 1), lambda i: (0, 0)),
        ],
        out_specs=pl.BlockSpec((n_out, n_roi), lambda i: (0, 0)),
        scratch_shapes=[pltpu.VMEM((n_roi, C), jnp.float32),
                        pltpu.VMEM((n_roi, 1), jnp.float32)],
        compiler_params=pltpu.CompilerParams(
            dimension_semantics=("arbitrary",),
            vmem_limit_bytes=VMEM_LIMIT),
    )(roi, coords, feat_p, wf, bf, wc, bc)
    return out


def pallas_iou_stats(boxes, gt, inside):
    """Per-box IoU statistics vs a small gt set, reduced in-kernel over gt.
    Returns (max_iou (N,), argmax (N,) int32, gt_argmax_mask (N,) f32)."""
    N = boxes.shape[0]
    K = gt.shape[0]
    boxes_t = boxes.T.astype(jnp.float32)                 # (4, N)   N lane-dense
    inside_f = inside.reshape(1, N).astype(jnp.float32)
    gt_s = gt.astype(jnp.float32)                         # (K, 4)   scalars via SMEM

    def kernel(bt_ref, in_ref, gt_ref, max_ref, arg_ref, gtm_ref):
        ay0 = bt_ref[0:1, :]
        ax0 = bt_ref[1:2, :]
        ay1 = bt_ref[2:3, :]
        ax1 = bt_ref[3:4, :]
        area_a = (ay1 - ay0) * (ax1 - ax0)
        inside_v = in_ref[...]
        best = jnp.full(area_a.shape, -1.0, jnp.float32)
        best_idx = jnp.zeros(area_a.shape, jnp.int32)
        gt_mask = jnp.zeros(area_a.shape, jnp.float32)
        for k in range(K):
            by0 = gt_ref[k, 0]
            bx0 = gt_ref[k, 1]
            by1 = gt_ref[k, 2]
            bx1 = gt_ref[k, 3]
            tl_y = jnp.maximum(ay0, by0)
            tl_x = jnp.maximum(ax0, bx0)
            br_y = jnp.minimum(ay1, by1)
            br_x = jnp.minimum(ax1, bx1)
            h = br_y - tl_y
            w = br_x - tl_x
            inter = jnp.where((h > 0) & (w > 0), h * w, 0.0)
            area_b = (by1 - by0) * (bx1 - bx0)
            iou_k = inter / (area_a + area_b - inter + 1e-10)
            better = iou_k > best
            best = jnp.where(better, iou_k, best)
            best_idx = jnp.where(better, k, best_idx)
            iou_in = jnp.where(inside_v > 0, iou_k, -1.0)
            gt_max_k = jnp.max(iou_in, axis=1, keepdims=True)
            gt_mask = jnp.maximum(gt_mask, (iou_in >= gt_max_k).astype(jnp.float32))
        max_ref[...] = best
        arg_ref[...] = best_idx
        gtm_ref[...] = gt_mask

    max_iou, argmax, gt_mask = pl.pallas_call(
        kernel,
        out_shape=(jax.ShapeDtypeStruct((1, N), jnp.float32),
                   jax.ShapeDtypeStruct((1, N), jnp.int32),
                   jax.ShapeDtypeStruct((1, N), jnp.float32)),
        grid=(1,),
        in_specs=[
            pl.BlockSpec((4, N), lambda i: (0, 0)),
            pl.BlockSpec((1, N), lambda i: (0, 0)),
            pl.BlockSpec(memory_space=pltpu.MemorySpace.SMEM),
        ],
        out_specs=(pl.BlockSpec((1, N), lambda i: (0, 0)),
                   pl.BlockSpec((1, N), lambda i: (0, 0)),
                   pl.BlockSpec((1, N), lambda i: (0, 0))),
    )(boxes_t, inside_f, gt_s)
    return max_iou[0], argmax[0], gt_mask[0]


def pallas_fused_losses(rpn_loc_t, gt_rpn_loc_t, gt_rpn_label, rpn_score_t,
                        roi_loc_t, gt_roi_loc_t, gt_roi_label, roi_score_t):
    """All four losses in one pallas_call.  Inputs are lane-dense (rows, N)."""
    A = rpn_loc_t.shape[1]
    R = roi_loc_t.shape[1]
    C = roi_score_t.shape[0]
    rpn_lab = gt_rpn_label.reshape(1, A).astype(jnp.int32)
    roi_lab = gt_roi_label.reshape(1, R).astype(jnp.int32)
    rpn_sigma2 = float(RPN_SIGMA) ** 2
    roi_sigma2 = float(ROI_SIGMA) ** 2

    def smooth_l1(x, t, lab, sigma2):
        w = (lab > 0).astype(jnp.float32)
        diff = w * (x - t)
        ad = jnp.abs(diff)
        flag = (ad < (1.0 / sigma2)).astype(jnp.float32)
        y = flag * (sigma2 / 2.0) * diff * diff + (1.0 - flag) * (ad - 0.5 / sigma2)
        denom = jnp.maximum(jnp.sum((lab >= 0).astype(jnp.float32)), 1.0)
        return jnp.sum(y) / denom

    def cross_entropy(logits, lab, ignore):
        m = jnp.max(logits, axis=0, keepdims=True)
        lse = jnp.log(jnp.sum(jnp.exp(logits - m), axis=0, keepdims=True)) + m
        logp = logits - lse
        cls_ids = jax.lax.broadcasted_iota(jnp.int32, logits.shape, 0)
        onehot = (cls_ids == lab).astype(jnp.float32)
        picked = jnp.sum(logp * onehot, axis=0, keepdims=True)
        if ignore:
            valid = (lab >= 0).astype(jnp.float32)
        else:
            valid = jnp.ones_like(picked)
        denom = jnp.maximum(jnp.sum(valid), 1.0)
        return -jnp.sum(picked * valid) / denom

    def kernel(rl_ref, grl_ref, rlab_ref, rs_ref,
               ol_ref, gol_ref, olab_ref, os_ref,
               o0_ref, o1_ref, o2_ref, o3_ref):
        one = jnp.ones((1, 1), jnp.float32)
        rlab = rlab_ref[...]
        olab = olab_ref[...]
        o0_ref[...] = smooth_l1(rl_ref[...], grl_ref[...], rlab, rpn_sigma2) * one
        o1_ref[...] = cross_entropy(rs_ref[...], rlab, True) * one
        o2_ref[...] = smooth_l1(ol_ref[...], gol_ref[...], olab, roi_sigma2) * one
        o3_ref[...] = cross_entropy(os_ref[...], olab, False) * one

    outs = pl.pallas_call(
        kernel,
        out_shape=tuple(jax.ShapeDtypeStruct((1, 1), jnp.float32) for _ in range(4)),
        grid=(1,),
        in_specs=[
            pl.BlockSpec((4, A), lambda i: (0, 0)),
            pl.BlockSpec((4, A), lambda i: (0, 0)),
            pl.BlockSpec((1, A), lambda i: (0, 0)),
            pl.BlockSpec((2, A), lambda i: (0, 0)),
            pl.BlockSpec((4, R), lambda i: (0, 0)),
            pl.BlockSpec((4, R), lambda i: (0, 0)),
            pl.BlockSpec((1, R), lambda i: (0, 0)),
            pl.BlockSpec((C, R), lambda i: (0, 0)),
        ],
        out_specs=tuple(pl.BlockSpec((1, 1), lambda i: (0, 0)) for _ in range(4)),
    )(rpn_loc_t.astype(jnp.float32), gt_rpn_loc_t.astype(jnp.float32), rpn_lab,
      rpn_score_t.astype(jnp.float32),
      roi_loc_t.astype(jnp.float32), gt_roi_loc_t.astype(jnp.float32), roi_lab,
      roi_score_t.astype(jnp.float32))
    return [o[0, 0] for o in outs]


# ---------------------------------------------------------------------------
# JAX glue: box utils, im2col, target creators
# ---------------------------------------------------------------------------

def bbox2loc_t(src_bbox, dst_bbox):
    """(N,4) src/dst boxes -> (4,N) loc, built by stacking 1-D arrays (no transpose)."""
    h = src_bbox[:, 2] - src_bbox[:, 0]
    w = src_bbox[:, 3] - src_bbox[:, 1]
    cy = src_bbox[:, 0] + 0.5 * h
    cx = src_bbox[:, 1] + 0.5 * w
    bh = dst_bbox[:, 2] - dst_bbox[:, 0]
    bw = dst_bbox[:, 3] - dst_bbox[:, 1]
    bcy = dst_bbox[:, 0] + 0.5 * bh
    bcx = dst_bbox[:, 1] + 0.5 * bw
    eps = jnp.finfo(jnp.float32).eps
    h = jnp.maximum(h, eps)
    w = jnp.maximum(w, eps)
    dy = (bcy - cy) / h
    dx = (bcx - cx) / w
    dh = jnp.log(bh / h)
    dw = jnp.log(bw / w)
    return jnp.stack([dy, dx, dh, dw], axis=0)


def loc2bbox_t(src_bbox, loc_t):
    """src (N,4), loc_t (4,N) -> decoded boxes (N,4)."""
    h = src_bbox[:, 2] - src_bbox[:, 0]
    w = src_bbox[:, 3] - src_bbox[:, 1]
    cy = src_bbox[:, 0] + 0.5 * h
    cx = src_bbox[:, 1] + 0.5 * w
    ncy = loc_t[0] * h + cy
    ncx = loc_t[1] * w + cx
    nh = jnp.exp(loc_t[2]) * h
    nw = jnp.exp(loc_t[3]) * w
    return jnp.stack(
        [ncy - 0.5 * nh, ncx - 0.5 * nw, ncy + 0.5 * nh, ncx + 0.5 * nw], axis=1)


def im2col_hwc(x_hwc, kh, kw, pad):
    """Build conv patches directly in (Ho*Wo, kh*kw*C) layout (no transposes)."""
    H, W, C = x_hwc.shape
    Ho = H + 2 * pad - kh + 1
    Wo = W + 2 * pad - kw + 1
    xp = jnp.pad(x_hwc, ((pad, pad), (pad, pad), (0, 0)))
    cols = [xp[i:i + Ho, j:j + Wo, :] for i in range(kh) for j in range(kw)]
    patches = jnp.concatenate(cols, axis=-1)              # (Ho, Wo, kh*kw*C)
    return patches.reshape(Ho * Wo, kh * kw * C)


def make_anchors(H, W, size=8.0):
    ys = jnp.arange(H, dtype=jnp.float32)
    xs = jnp.arange(W, dtype=jnp.float32)
    cy, cx = jnp.meshgrid(ys, xs, indexing="ij")
    half = size / 2.0
    return jnp.stack([cy - half, cx - half, cy + half, cx + half], axis=-1).reshape(-1, 4)


def proposal_target_creator(roi, bbox, label, loc_mean, loc_std,
                            n_sample=128, pos_ratio=0.25, pos_iou_thresh=0.5,
                            neg_hi=0.5, neg_lo=0.0):
    roi_all = jnp.concatenate([roi, bbox], axis=0)
    R = roi_all.shape[0]
    max_iou, gt_assignment, _ = pallas_iou_stats(
        roi_all, bbox, jnp.ones((R,), jnp.float32))

    pos_per_image = int(round(n_sample * pos_ratio))
    pos_mask = max_iou >= pos_iou_thresh
    pos_sel = pos_mask & (jnp.cumsum(pos_mask.astype(jnp.int32)) <= pos_per_image)
    n_pos = jnp.sum(pos_sel.astype(jnp.int32))
    neg_mask = (max_iou < neg_hi) & (max_iou >= neg_lo)
    neg_sel = neg_mask & (jnp.cumsum(neg_mask.astype(jnp.int32)) <= (n_sample - n_pos))
    # TODO(synk): np.random.choice subsampling replaced by deterministic first-N selection.
    idx = jnp.arange(R, dtype=jnp.int32)
    key = jnp.where(pos_sel, idx, jnp.where(neg_sel, R + idx, 2 * R + idx))
    keep = jnp.argsort(key)[:n_sample]

    sample_roi = roi_all[keep]
    kept_pos = pos_sel[keep]
    gt_roi_label = jnp.where(kept_pos, label[gt_assignment[keep]] + 1, 0).astype(jnp.int32)
    gt_roi_loc_t = bbox2loc_t(sample_roi, bbox[gt_assignment[keep]])
    gt_roi_loc_t = (gt_roi_loc_t - loc_mean[:, None]) / loc_std[:, None]
    return sample_roi, gt_roi_loc_t, gt_roi_label


def anchor_target_creator(bbox, anchor, img_size,
                          n_sample=256, pos_thresh=0.7, neg_thresh=0.3, pos_ratio=0.5):
    H, W = img_size
    A = anchor.shape[0]
    inside = (anchor[:, 0] >= 0) & (anchor[:, 1] >= 0) & (anchor[:, 2] <= H) & (anchor[:, 3] <= W)
    max_ious, argmax_ious, gt_argmax = pallas_iou_stats(
        anchor, bbox, inside.astype(jnp.float32))
    gt_argmax_mask = (gt_argmax > 0) & inside

    label = jnp.full((A,), -1, dtype=jnp.int32)
    label = jnp.where(inside & (max_ious < neg_thresh), 0, label)
    label = jnp.where(gt_argmax_mask, 1, label)
    label = jnp.where(inside & (max_ious >= pos_thresh), 1, label)

    # TODO(synk): random pos/neg disabling replaced by deterministic first-N selection.
    n_pos_lim = int(pos_ratio * n_sample)
    pos_mask = label == 1
    pos_keep = pos_mask & (jnp.cumsum(pos_mask.astype(jnp.int32)) <= n_pos_lim)
    label = jnp.where(pos_mask & (~pos_keep), -1, label)
    n_pos = jnp.sum((label == 1).astype(jnp.int32))
    neg_mask = label == 0
    neg_keep = neg_mask & (jnp.cumsum(neg_mask.astype(jnp.int32)) <= (n_sample - n_pos))
    label = jnp.where(neg_mask & (~neg_keep), -1, label)

    loc_t = bbox2loc_t(anchor, bbox[argmax_ious])
    loc_t = jnp.where(inside[None, :], loc_t, 0.0)
    return loc_t, label


# ---------------------------------------------------------------------------
# FasterRCNNTrainer.forward
# ---------------------------------------------------------------------------

def faster_rcnn_trainer_forward(imgs, bboxes, labels, scale, params):
    n = bboxes.shape[0]
    if n != 1:
        raise ValueError("Currently only batch size 1 is supported.")
    _, C_in, H, W = imgs.shape
    img_size = (H, W)

    # ---- weight flattening (tiny, trace-time constants) ----
    w_ext = params["w_ext"]
    C_feat = w_ext.shape[0]
    w_ext_f = jnp.transpose(w_ext, (2, 3, 1, 0)).reshape(-1, C_feat)
    w_mid = params["w_rpn_mid"]
    C_mid = w_mid.shape[0]
    w_mid_f = jnp.transpose(w_mid, (2, 3, 1, 0)).reshape(-1, C_mid)
    w_rpn_cat_t = jnp.concatenate(
        [params["w_rpn_loc"].reshape(4, C_mid),
         params["w_rpn_score"].reshape(2, C_mid)], axis=0)
    b_rpn_cat_t = jnp.concatenate(
        [params["b_rpn_loc"], params["b_rpn_score"]]).reshape(-1, 1)
    w_roi_cat_t = jnp.concatenate(
        [params["w_cls_loc"].T, params["w_score"].T], axis=0)
    b_roi_cat_t = jnp.concatenate(
        [params["b_cls_loc"], params["b_score"]]).reshape(-1, 1)
    n_class = params["w_score"].shape[1]

    # ---- extractor (tiled MXU matmul, activations kept in (H*W, C)) ----
    x_hwc = jnp.transpose(imgs[0], (1, 2, 0))            # NCHW input -> HWC once
    ext_patches = im2col_hwc(x_hwc, 3, 3, 1)             # (H*W, 9*C_in)
    feat_flat = pallas_matmul(ext_patches, w_ext_f, params["b_ext"], relu=True)
    anchor = make_anchors(H, W)

    # ---- RPN (single fused kernel, lane-dense (4,A)/(2,A) outputs) ----
    rpn_patches = im2col_hwc(feat_flat.reshape(H, W, C_feat), 3, 3, 1)
    rpn_out_t = rpn_head_fused(rpn_patches, w_mid_f, params["b_rpn_mid"],
                               w_rpn_cat_t, b_rpn_cat_t)
    rpn_loc_t = rpn_out_t[:4]                            # (4, A)
    rpn_score_t = rpn_out_t[4:6]                         # (2, A)
    rois = loc2bbox_t(anchor, rpn_loc_t)
    rois = jnp.stack(
        [jnp.clip(rois[:, 0], 0.0, H), jnp.clip(rois[:, 1], 0.0, W),
         jnp.clip(rois[:, 2], 0.0, H), jnp.clip(rois[:, 3], 0.0, W)], axis=1)
    # TODO(synk): ProposalCreator NMS / min_size / top-N filtering omitted; all decoded anchors used as rois.

    bbox = bboxes[0]
    label = labels[0]

    # ---- proposal targets + fused ROI head ----
    sample_roi, gt_roi_loc_t, gt_roi_label = proposal_target_creator(
        rois, bbox, label, LOC_NORM_MEAN, LOC_NORM_STD)
    roi_out_t = roi_head_fused(feat_flat, sample_roi, H, W,
                               params["w_fc1"], params["b_fc1"],
                               w_roi_cat_t, b_roi_cat_t)
    roi_cls_loc_t = roi_out_t[:n_class * 4]              # (n_class*4, n_roi)
    roi_score_t = roi_out_t[n_class * 4:]                # (n_class, n_roi)

    # ---- anchor targets ----
    gt_rpn_loc_t, gt_rpn_label = anchor_target_creator(bbox, anchor, img_size)

    # ---- pick per-sample loc of the gt class (small lane-dense gather) ----
    sel = gt_roi_label[None, :] * 4 + jnp.arange(4, dtype=jnp.int32)[:, None]
    roi_loc_t = jnp.take_along_axis(roi_cls_loc_t, sel, axis=0)   # (4, n_roi)

    # ---- all four losses in a single fused kernel ----
    rpn_loc_loss, rpn_cls_loss, roi_loc_loss, roi_cls_loss = pallas_fused_losses(
        rpn_loc_t, gt_rpn_loc_t, gt_rpn_label, rpn_score_t,
        roi_loc_t, gt_roi_loc_t, gt_roi_label, roi_score_t)

    total = rpn_loc_loss + rpn_cls_loss + roi_loc_loss + roi_cls_loss
    # TODO(synk): ConfusionMeter / AverageValueMeter bookkeeping and optimizer are host-side utilities, not ported.
    return LossTuple(rpn_loc_loss, rpn_cls_loss, roi_loc_loss, roi_cls_loss, total)


# ---------------------------------------------------------------------------
# Main
# ---------------------------------------------------------------------------

if __name__ == "__main__":
    key = jax.random.PRNGKey(0)
    ks = jax.random.split(key, 10)

    C_in, H, W = 3, 16, 16
    C_feat, hidden, n_fg = 32, 64, 2
    n_class = n_fg + 1

    params = {
        "w_ext": 0.1 * jax.random.normal(ks[0], (C_feat, C_in, 3, 3), jnp.float32),
        "b_ext": jnp.zeros((C_feat,), jnp.float32),
        "w_rpn_mid": 0.05 * jax.random.normal(ks[1], (C_feat, C_feat, 3, 3), jnp.float32),
        "b_rpn_mid": jnp.zeros((C_feat,), jnp.float32),
        "w_rpn_loc": 0.01 * jax.random.normal(ks[2], (4, C_feat, 1, 1), jnp.float32),
        "b_rpn_loc": jnp.zeros((4,), jnp.float32),
        "w_rpn_score": 0.05 * jax.random.normal(ks[3], (2, C_feat, 1, 1), jnp.float32),
        "b_rpn_score": jnp.zeros((2,), jnp.float32),
        "w_fc1": 0.1 * jax.random.normal(ks[4], (C_feat, hidden), jnp.float32),
        "b_fc1": jnp.zeros((hidden,), jnp.float32),
        "w_cls_loc": 0.01 * jax.random.normal(ks[5], (hidden, n_class * 4), jnp.float32),
        "b_cls_loc": jnp.zeros((n_class * 4,), jnp.float32),
        "w_score": 0.05 * jax.random.normal(ks[6], (hidden, n_class), jnp.float32),
        "b_score": jnp.zeros((n_class,), jnp.float32),
    }

    imgs = jax.random.normal(ks[7], (1, C_in, H, W), jnp.float32)
    bboxes = jnp.array(
        [[[2.0, 2.0, 10.0, 10.0],
          [5.0, 6.0, 13.0, 15.0],
          [0.0, 0.0, 8.0, 7.0]]], jnp.float32)
    labels = jnp.array([[0, 1, 0]], jnp.int32)
    scale = 1.0

    fwd = jax.jit(lambda im, bb, lb: faster_rcnn_trainer_forward(im, bb, lb, scale, params))
    losses = fwd(imgs, bboxes, labels)
    jax.block_until_ready(losses.total_loss)
    print("KERNEL_OK")
</pallas_src>

<mosaic_0001>
module attributes {stable_mosaic.version = 11 : i64} {
  func.func @kernel(%arg0: i32, %arg1: i32, %arg2: i32, %arg3: memref<256x128xbf16, #tpu.memory_space<vmem>>, %arg4: memref<128x128xbf16, #tpu.memory_space<vmem>>, %arg5: memref<1x128xf32, #tpu.memory_space<vmem>>, %arg6: memref<256x128xf32, #tpu.memory_space<vmem>>, %arg7: memref<256x128xf32, #tpu.memory_space<vmem>>) attributes {dimension_semantics = [#tpu.dimension_semantics<parallel>, #tpu.dimension_semantics<parallel>, #tpu.dimension_semantics<arbitrary>], iteration_bounds = array<i64: 1, 1, 1>, scalar_prefetch = 0 : i64, scratch_operands = 1 : i64, tpu.core_type = #tpu.core_type<tc>, window_params = [{transform_indices = @transform_0, window_bounds = array<i64: 256, 128>}, {transform_indices = @transform_1, window_bounds = array<i64: 128, 128>}, {transform_indices = @transform_2, window_bounds = array<i64: 1, 128>}, {transform_indices = @transform_3, window_bounds = array<i64: 256, 128>}]} {
    %c0_i32 = arith.constant 0 : i32
    %0 = arith.cmpi eq, %arg2, %c0_i32 : i32
    %1 = arith.extui %0 : i1 to i32
    %c0_i32_0 = arith.constant 0 : i32
    %2 = arith.cmpi ne, %1, %c0_i32_0 : i32
    scf.if %2 {
      %cst_10 = arith.constant 0.000000e+00 : f32
      %12 = vector.broadcast %cst_10 : f32 to vector<256x128xf32>
      %c0_11 = arith.constant 0 : index
      %c0_12 = arith.constant 0 : index
      %13 = vector.load %arg7[%c0_11, %c0_12] : memref<256x128xf32, #tpu.memory_space<vmem>>, vector<256x128xf32>
      tpu.vector_store %arg7[%c0_11, %c0_12], %12 {strides = array<i32>} : memref<256x128xf32, #tpu.memory_space<vmem>>, vector<256x128xf32>,
    } else {
    }
    %c0 = arith.constant 0 : index
    %c0_1 = arith.constant 0 : index
    %3 = vector.load %arg7[%c0, %c0_1] : memref<256x128xf32, #tpu.memory_space<vmem>>, vector<256x128xf32>
    %c0_2 = arith.constant 0 : index
    %c0_3 = arith.constant 0 : index
    %4 = vector.load %arg3[%c0_2, %c0_3] : memref<256x128xbf16, #tpu.memory_space<vmem>>, vector<256x128xbf16>
    %c0_4 = arith.constant 0 : index
    %c0_5 = arith.constant 0 : index
    %5 = vector.load %arg4[%c0_4, %c0_5] : memref<128x128xbf16, #tpu.memory_space<vmem>>, vector<128x128xbf16>
    %cst = arith.constant dense<0.000000e+00> : vector<256x128xf32>
    %6 = tpu.matmul %4, %5, %cst {dimension_numbers = #tpu.dot_dimension_numbers<[1], [0], [0], [1], [0, 0, 1, 1], [], []>} : vector<256x128xbf16>, vector<128x128xbf16>, vector<256x128xf32> -> vector<256x128xf32>
    %7 = arith.addf %3, %6 : vector<256x128xf32>
    %c0_6 = arith.constant 0 : index
    %c0_7 = arith.constant 0 : index
    %8 = vector.load %arg7[%c0_6, %c0_7] : memref<256x128xf32, #tpu.memory_space<vmem>>, vector<256x128xf32>
    tpu.vector_store %arg7[%c0_6, %c0_7], %7 {strides = array<i32>} : memref<256x128xf32, #tpu.memory_space<vmem>>, vector<256x128xf32>,
    %c0_i32_8 = arith.constant 0 : i32
    %9 = arith.cmpi eq, %arg2, %c0_i32_8 : i32
    %10 = arith.extui %9 : i1 to i32
    %c0_i32_9 = arith.constant 0 : i32
    %11 = arith.cmpi ne, %10, %c0_i32_9 : i32
    scf.if %11 {
      %c0_10 = arith.constant 0 : index
      %c0_11 = arith.constant 0 : index
      %12 = vector.load %arg7[%c0_10, %c0_11] : memref<256x128xf32, #tpu.memory_space<vmem>>, vector<256x128xf32>
      %c0_12 = arith.constant 0 : index
      %c0_13 = arith.constant 0 : index
      %13 = vector.load %arg5[%c0_12, %c0_13] : memref<1x128xf32, #tpu.memory_space<vmem>>, vector<1x128xf32>
      %14 = vector.broadcast %13 : vector<1x128xf32> to vector<256x128xf32>
      %15 = arith.addf %12, %14 : vector<256x128xf32>
      %cst_14 = arith.constant 0.000000e+00 : f32
      %16 = vector.broadcast %cst_14 : f32 to vector<256x128xf32>
      %17 = arith.maximumf %15, %16 : vector<256x128xf32>
      %c0_15 = arith.constant 0 : index
      %c0_16 = arith.constant 0 : index
      %18 = vector.load %arg6[%c0_15, %c0_16] : memref<256x128xf32, #tpu.memory_space<vmem>>, vector<256x128xf32>
      tpu.vector_store %arg6[%c0_15, %c0_16], %17 {strides = array<i32>} : memref<256x128xf32, #tpu.memory_space<vmem>>, vector<256x128xf32>,
    } else {
    }
    return
  }
  func.func @transform_0(%arg0: i32, %arg1: i32, %arg2: i32) -> (i32, i32) {
    %c0_i32 = arith.constant 0 : i32
    return %arg0, %arg2 : i32, i32
  }
  func.func @transform_1(%arg0: i32, %arg1: i32, %arg2: i32) -> (i32, i32) {
    %c0_i32 = arith.constant 0 : i32
    return %arg2, %arg1 : i32, i32
  }
  func.func @transform_2(%arg0: i32, %arg1: i32, %arg2: i32) -> (i32, i32) {
    %c0_i32 = arith.constant 0 : i32
    %c0_i32_0 = arith.constant 0 : i32
    return %c0_i32, %arg1 : i32, i32
  }
  func.func @transform_3(%arg0: i32, %arg1: i32, %arg2: i32) -> (i32, i32) {
    %c0_i32 = arith.constant 0 : i32
    return %arg0, %arg1 : i32, i32
  }
}

module attributes {stable_mosaic.version = 11 : i64} {
  func.func @kernel(%arg0: i32, %arg1: memref<256x384xbf16, #tpu.memory_space<vmem>>, %arg2: memref<384x32xbf16, #tpu.memory_space<vmem>>, %arg3: memref<1x32xf32, #tpu.memory_space<vmem>>, %arg4: memref<6x32xf32, #tpu.memory_space<vmem>>, %arg5: memref<6x1xf32, #tpu.memory_space<vmem>>, %arg6: memref<6x256xf32, #tpu.memory_space<vmem>>) attributes {dimension_semantics = [#tpu.dimension_semantics<parallel>], iteration_bounds = array<i64: 1>, scalar_prefetch = 0 : i64, scratch_operands = 0 : i64, tpu.core_type = #tpu.core_type<tc>, window_params = [{transform_indices = @transform_0, window_bounds = array<i64: 256, 384>}, {pipeline_mode = #tpu.pipeline_mode<synchronous>, transform_indices = @transform_1, window_bounds = array<i64: 384, 32>}, {pipeline_mode = #tpu.pipeline_mode<synchronous>, transform_indices = @transform_2, window_bounds = array<i64: 1, 32>}, {pipeline_mode = #tpu.pipeline_mode<synchronous>, transform_indices = @transform_3, window_bounds = array<i64: 6, 32>}, {pipeline_mode = #tpu.pipeline_mode<synchronous>, transform_indices = @transform_4, window_bounds = array<i64: 6, 1>}, {transform_indices = @transform_5, window_bounds = array<i64: 6, 256>}]} {
    %c0 = arith.constant 0 : index
    %c0_0 = arith.constant 0 : index
    %0 = vector.load %arg1[%c0, %c0_0] : memref<256x384xbf16, #tpu.memory_space<vmem>>, vector<256x384xbf16>
    %c0_1 = arith.constant 0 : index
    %c0_2 = arith.constant 0 : index
    %1 = vector.load %arg2[%c0_1, %c0_2] : memref<384x32xbf16, #tpu.memory_space<vmem>>, vector<384x32xbf16>
    %cst = arith.constant dense<0.000000e+00> : vector<256x32xf32>
    %2 = tpu.matmul %0, %1, %cst {dimension_numbers = #tpu.dot_dimension_numbers<[1], [0], [0], [1], [0, 0, 1, 1], [], []>} : vector<256x384xbf16>, vector<384x32xbf16>, vector<256x32xf32> -> vector<256x32xf32>
    %c0_3 = arith.constant 0 : index
    %c0_4 = arith.constant 0 : index
    %3 = vector.load %arg3[%c0_3, %c0_4] : memref<1x32xf32, #tpu.memory_space<vmem>>, vector<1x32xf32>
    %4 = vector.broadcast %3 : vector<1x32xf32> to vector<256x32xf32>
    %5 = arith.addf %2, %4 : vector<256x32xf32>
    %cst_5 = arith.constant 0.000000e+00 : f32
    %6 = vector.broadcast %cst_5 : f32 to vector<256x32xf32>
    %7 = arith.maximumf %5, %6 : vector<256x32xf32>
    %c0_6 = arith.constant 0 : index
    %c0_7 = arith.constant 0 : index
    %8 = vector.load %arg4[%c0_6, %c0_7] : memref<6x32xf32, #tpu.memory_space<vmem>>, vector<6x32xf32>
    %cst_8 = arith.constant dense<0.000000e+00> : vector<6x256xf32>
    %9 = tpu.matmul %8, %7, %cst_8 {dimension_numbers = #tpu.dot_dimension_numbers<[1], [1], [0], [0], [0, 0, 1, 0], [], []>} : vector<6x32xf32>, vector<256x32xf32>, vector<6x256xf32> -> vector<6x256xf32>
    %c0_9 = arith.constant 0 : index
    %c0_10 = arith.constant 0 : index
    %10 = vector.load %arg5[%c0_9, %c0_10] : memref<6x1xf32, #tpu.memory_space<vmem>>, vector<6x1xf32>
    %11 = vector.broadcast %10 : vector<6x1xf32> to vector<6x256xf32>
    %12 = arith.addf %9, %11 : vector<6x256xf32>
    %c0_11 = arith.constant 0 : index
    %c0_12 = arith.constant 0 : index
    %13 = vector.load %arg6[%c0_11, %c0_12] : memref<6x256xf32, #tpu.memory_space<vmem>>, vector<6x256xf32>
    tpu.vector_store %arg6[%c0_11, %c0_12], %12 {strides = array<i32>} : memref<6x256xf32, #tpu.memory_space<vmem>>, vector<6x256xf32>,
    return
  }
  func.func @transform_0(%arg0: i32) -> (i32, i32) {
    %c0_i32 = arith.constant 0 : i32
    %c0_i32_0 = arith.constant 0 : i32
    return %arg0, %c0_i32 : i32, i32
  }
  func.func @transform_1(%arg0: i32) -> (i32, i32) {
    %c0_i32 = arith.constant 0 : i32
    %c0_i32_0 = arith.constant 0 : i32
    %c0_i32_1 = arith.constant 0 : i32
    return %c0_i32, %c0_i32_0 : i32, i32
  }
  func.func @transform_2(%arg0: i32) -> (i32, i32) {
    %c0_i32 = arith.constant 0 : i32
    %c0_i32_0 = arith.constant 0 : i32
    %c0_i32_1 = arith.constant 0 : i32
    return %c0_i32, %c0_i32_0 : i32, i32
  }
  func.func @transform_3(%arg0: i32) -> (i32, i32) {
    %c0_i32 = arith.constant 0 : i32
    %c0_i32_0 = arith.constant 0 : i32
    %c0_i32_1 = arith.constant 0 : i32
    return %c0_i32, %c0_i32_0 : i32, i32
  }
  func.func @transform_4(%arg0: i32) -> (i32, i32) {
    %c0_i32 = arith.constant 0 : i32
    %c0_i32_0 = arith.constant 0 : i32
    %c0_i32_1 = arith.constant 0 : i32
    return %c0_i32, %c0_i32_0 : i32, i32
  }
  func.func @transform_5(%arg0: i32) -> (i32, i32) {
    %c0_i32 = arith.constant 0 : i32
    %c0_i32_0 = arith.constant 0 : i32
    return %c0_i32, %arg0 : i32, i32
  }
}

module attributes {stable_mosaic.version = 11 : i64} {
  func.func @kernel(%arg0: i32, %arg1: memref<4x259xf32, #tpu.memory_space<vmem>>, %arg2: memref<1x259xf32, #tpu.memory_space<vmem>>, %arg3: memref<3x4xf32, #tpu.memory_space<smem>>, %arg4: memref<1x259xf32, #tpu.memory_space<vmem>>, %arg5: memref<1x259xi32, #tpu.memory_space<vmem>>, %arg6: memref<1x259xf32, #tpu.memory_space<vmem>>) attributes {dimension_semantics = [#tpu.dimension_semantics<arbitrary>], iteration_bounds = array<i64: 1>, scalar_prefetch = 0 : i64, scratch_operands = 0 : i64, tpu.core_type = #tpu.core_type<tc>, window_params = [{pipeline_mode = #tpu.pipeline_mode<synchronous>, transform_indices = @transform_0, window_bounds = array<i64: 4, 259>}, {pipeline_mode = #tpu.pipeline_mode<synchronous>, transform_indices = @transform_1, window_bounds = array<i64: 1, 259>}, {transform_indices = @transform_2, window_bounds = array<i64: 3, 4>}, {pipeline_mode = #tpu.pipeline_mode<synchronous>, transform_indices = @transform_3, window_bounds = array<i64: 1, 259>}, {pipeline_mode = #tpu.pipeline_mode<synchronous>, transform_indices = @transform_4, window_bounds = array<i64: 1, 259>}, {pipeline_mode = #tpu.pipeline_mode<synchronous>, transform_indices = @transform_5, window_bounds = array<i64: 1, 259>}]} {
    %c0 = arith.constant 0 : index
    %c0_0 = arith.constant 0 : index
    %0 = vector.load %arg1[%c0, %c0_0] : memref<4x259xf32, #tpu.memory_space<vmem>>, vector<1x259xf32>
    %c1 = arith.constant 1 : index
    %c0_1 = arith.constant 0 : index
    %1 = vector.load %arg1[%c1, %c0_1] : memref<4x259xf32, #tpu.memory_space<vmem>>, vector<1x259xf32>
    %c2 = arith.constant 2 : index
    %c0_2 = arith.constant 0 : index
    %2 = vector.load %arg1[%c2, %c0_2] : memref<4x259xf32, #tpu.memory_space<vmem>>, vector<1x259xf32>
    %c3 = arith.constant 3 : index
    %c0_3 = arith.constant 0 : index
    %3 = vector.load %arg1[%c3, %c0_3] : memref<4x259xf32, #tpu.memory_space<vmem>>, vector<1x259xf32>
    %4 = arith.subf %2, %0 : vector<1x259xf32>
    %5 = arith.subf %3, %1 : vector<1x259xf32>
    %6 = arith.mulf %4, %5 : vector<1x259xf32>
    %c0_4 = arith.constant 0 : index
    %c0_5 = arith.constant 0 : index
    %7 = vector.load %arg2[%c0_4, %c0_5] : memref<1x259xf32, #tpu.memory_space<vmem>>, vector<1x259xf32>
    %cst = arith.constant -1.000000e+00 : f32
    %8 = vector.broadcast %cst : f32 to vector<1x259xf32>
    %c0_i32 = arith.constant 0 : i32
    %9 = vector.broadcast %c0_i32 : i32 to vector<1x259xi32>
    %cst_6 = arith.constant 0.000000e+00 : f32
    %10 = vector.broadcast %cst_6 : f32 to vector<1x259xf32>
    %c0_7 = arith.constant 0 : index
    %c0_8 = arith.constant 0 : index
    %11 = memref.load %arg3[%c0_7, %c0_8] : memref<3x4xf32, #tpu.memory_space<smem>>
    %c0_9 = arith.constant 0 : index
    %c1_10 = arith.constant 1 : index
    %12 = memref.load %arg3[%c0_9, %c1_10] : memref<3x4xf32, #tpu.memory_space<smem>>
    %c0_11 = arith.constant 0 : index
    %c2_12 = arith.constant 2 : index
    %13 = memref.load %arg3[%c0_11, %c2_12] : memref<3x4xf32, #tpu.memory_space<smem>>
    %c0_13 = arith.constant 0 : index
    %c3_14 = arith.constant 3 : index
    %14 = memref.load %arg3[%c0_13, %c3_14] : memref<3x4xf32, #tpu.memory_space<smem>>
    %15 = vector.broadcast %11 : f32 to vector<1x259xf32>
    %16 = arith.maximumf %0, %15 : vector<1x259xf32>
    %17 = vector.broadcast %12 : f32 to vector<1x259xf32>
    %18 = arith.maximumf %1, %17 : vector<1x259xf32>
    %19 = vector.broadcast %13 : f32 to vector<1x259xf32>
    %20 = arith.minimumf %2, %19 : vector<1x259xf32>
    %21 = vector.broadcast %14 : f32 to vector<1x259xf32>
    %22 = arith.minimumf %3, %21 : vector<1x259xf32>
    %23 = arith.subf %20, %16 : vector<1x259xf32>
    %24 = arith.subf %22, %18 : vector<1x259xf32>
    %cst_15 = arith.constant 0.000000e+00 : f32
    %25 = vector.broadcast %cst_15 : f32 to vector<1x259xf32>
    %26 = arith.cmpf ogt, %23, %25 : vector<1x259xf32>
    %cst_16 = arith.constant 0.000000e+00 : f32
    %27 = vector.broadcast %cst_16 : f32 to vector<1x259xf32>
    %28 = arith.cmpf ogt, %24, %27 : vector<1x259xf32>
    %29 = arith.andi %26, %28 : vector<1x259xi1>
    %30 = arith.mulf %23, %24 : vector<1x259xf32>
    %cst_17 = arith.constant 0.000000e+00 : f32
    %31 = vector.broadcast %cst_17 : f32 to vector<1x259xf32>
    %32 = arith.select %29, %30, %31 : vector<1x259xi1>, vector<1x259xf32>
    %33 = arith.subf %13, %11 : f32
    %34 = arith.subf %14, %12 : f32
    %35 = arith.mulf %33, %34 : f32
    %36 = vector.broadcast %35 : f32 to vector<1x259xf32>
    %37 = arith.addf %6, %36 : vector<1x259xf32>
    %38 = arith.subf %37, %32 : vector<1x259xf32>
    %cst_18 = arith.constant 1.000000e-10 : f32
    %39 = vector.broadcast %cst_18 : f32 to vector<1x259xf32>
    %40 = arith.addf %38, %39 : vector<1x259xf32>
    %41 = arith.divf %32, %40 : vector<1x259xf32>
    %42 = arith.cmpf ogt, %41, %8 : vector<1x259xf32>
    %43 = arith.select %42, %41, %8 : vector<1x259xi1>, vector<1x259xf32>
    %c0_i32_19 = arith.constant 0 : i32
    %44 = vector.broadcast %c0_i32_19 : i32 to vector<1x259xi32>
    %45 = arith.select %42, %44, %9 : vector<1x259xi1>, vector<1x259xi32>
    %cst_20 = arith.constant 0.000000e+00 : f32
    %46 = vector.broadcast %cst_20 : f32 to vector<1x259xf32>
    %47 = arith.cmpf ogt, %7, %46 : vector<1x259xf32>
    %cst_21 = arith.constant -1.000000e+00 : f32
    %48 = vector.broadcast %cst_21 : f32 to vector<1x259xf32>
    %49 = arith.select %47, %41, %48 : vector<1x259xi1>, vector<1x259xf32>
    %cst_22 = arith.constant dense<0xFF800000> : vector<1xf32>
    %50 = vector.multi_reduction <maximumf>, %49, %cst_22 [1] : vector<1x259xf32> to vector<1xf32>
    %51 = vector.shape_cast %50 : vector<1xf32> to vector<1x1xf32>
    %52 = vector.broadcast %51 : vector<1x1xf32> to vector<1x259xf32>
    %53 = arith.cmpf oge, %49, %52 : vector<1x259xf32>
    %54 = arith.extui %53 : vector<1x259xi1> to vector<1x259xi32>
    %55 = arith.sitofp %54 : vector<1x259xi32> to vector<1x259xf32>
    %56 = arith.maximumf %10, %55 : vector<1x259xf32>
    %c1_23 = arith.constant 1 : index
    %c0_24 = arith.constant 0 : index
    %57 = memref.load %arg3[%c1_23, %c0_24] : memref<3x4xf32, #tpu.memory_space<smem>>
    %c1_25 = arith.constant 1 : index
    %c1_26 = arith.constant 1 : index
    %58 = memref.load %arg3[%c1_25, %c1_26] : memref<3x4xf32, #tpu.memory_space<smem>>
    %c1_27 = arith.constant 1 : index
    %c2_28 = arith.constant 2 : index
    %59 = memref.load %arg3[%c1_27, %c2_28] : memref<3x4xf32, #tpu.memory_space<smem>>
    %c1_29 = arith.constant 1 : index
    %c3_30 = arith.constant 3 : index
    %60 = memref.load %arg3[%c1_29, %c3_30] : memref<3x4xf32, #tpu.memory_space<smem>>
    %61 = vector.broadcast %57 : f32 to vector<1x259xf32>
    %62 = arith.maximumf %0, %61 : vector<1x259xf32>
    %63 = vector.broadcast %58 : f32 to vector<1x259xf32>
    %64 = arith.maximumf %1, %63 : vector<1x259xf32>
    %65 = vector.broadcast %59 : f32 to vector<1x259xf32>
    %66 = arith.minimumf %2, %65 : vector<1x259xf32>
    %67 = vector.broadcast %60 : f32 to vector<1x259xf32>
    %68 = arith.minimumf %3, %67 : vector<1x259xf32>
    %69 = arith.subf %66, %62 : vector<1x259xf32>
    %70 = arith.subf %68, %64 : vector<1x259xf32>
    %cst_31 = arith.constant 0.000000e+00 : f32
    %71 = vector.broadcast %cst_31 : f32 to vector<1x259xf32>
    %72 = arith.cmpf ogt, %69, %71 : vector<1x259xf32>
    %cst_32 = arith.constant 0.000000e+00 : f32
    %73 = vector.broadcast %cst_32 : f32 to vector<1x259xf32>
    %74 = arith.cmpf ogt, %70, %73 : vector<1x259xf32>
    %75 = arith.andi %72, %74 : vector<1x259xi1>
    %76 = arith.mulf %69, %70 : vector<1x259xf32>
    %cst_33 = arith.constant 0.000000e+00 : f32
    %77 = vector.broadcast %cst_33 : f32 to vector<1x259xf32>
    %78 = arith.select %75, %76, %77 : vector<1x259xi1>, vector<1x259xf32>
    %79 = arith.subf %59, %57 : f32
    %80 = arith.subf %60, %58 : f32
    %81 = arith.mulf %79, %80 : f32
    %82 = vector.broadcast %81 : f32 to vector<1x259xf32>
    %83 = arith.addf %6, %82 : vector<1x259xf32>
    %84 = arith.subf %83, %78 : vector<1x259xf32>
    %cst_34 = arith.constant 1.000000e-10 : f32
    %85 = vector.broadcast %cst_34 : f32 to vector<1x259xf32>
    %86 = arith.addf %84, %85 : vector<1x259xf32>
    %87 = arith.divf %78, %86 : vector<1x259xf32>
    %88 = arith.cmpf ogt, %87, %43 : vector<1x259xf32>
    %89 = arith.select %88, %87, %43 : vector<1x259xi1>, vector<1x259xf32>
    %c1_i32 = arith.constant 1 : i32
    %90 = vector.broadcast %c1_i32 : i32 to vector<1x259xi32>
    %91 = arith.select %88, %90, %45 : vector<1x259xi1>, vector<1x259xi32>
    %cst_35 = arith.constant 0.000000e+00 : f32
    %92 = vector.broadcast %cst_35 : f32 to vector<1x259xf32>
    %93 = arith.cmpf ogt, %7, %92 : vector<1x259xf32>
    %cst_36 = arith.constant -1.000000e+00 : f32
    %94 = vector.broadcast %cst_36 : f32 to vector<1x259xf32>
    %95 = arith.select %93, %87, %94 : vector<1x259xi1>, vector<1x259xf32>
    %cst_37 = arith.constant dense<0xFF800000> : vector<1xf32>
    %96 = vector.multi_reduction <maximumf>, %95, %cst_37 [1] : vector<1x259xf32> to vector<1xf32>
    %97 = vector.shape_cast %96 : vector<1xf32> to vector<1x1xf32>
    %98 = vector.broadcast %97 : vector<1x1xf32> to vector<1x259xf32>
    %99 = arith.cmpf oge, %95, %98 : vector<1x259xf32>
    %100 = arith.extui %99 : vector<1x259xi1> to vector<1x259xi32>
    %101 = arith.sitofp %100 : vector<1x259xi32> to vector<1x259xf32>
    %102 = arith.maximumf %56, %101 : vector<1x259xf32>
    %c2_38 = arith.constant 2 : index
    %c0_39 = arith.constant 0 : index
    %103 = memref.load %arg3[%c2_38, %c0_39] : memref<3x4xf32, #tpu.memory_space<smem>>
    %c2_40 = arith.constant 2 : index
    %c1_41 = arith.constant 1 : index
    %104 = memref.load %arg3[%c2_40, %c1_41] : memref<3x4xf32, #tpu.memory_space<smem>>
    %c2_42 = arith.constant 2 : index
    %c2_43 = arith.constant 2 : index
    %105 = memref.load %arg3[%c2_42, %c2_43] : memref<3x4xf32, #tpu.memory_space<smem>>
    %c2_44 = arith.constant 2 : index
    %c3_45 = arith.constant 3 : index
    %106 = memref.load %arg3[%c2_44, %c3_45] : memref<3x4xf32, #tpu.memory_space<smem>>
    %107 = vector.broadcast %103 : f32 to vector<1x259xf32>
    %108 = arith.maximumf %0, %107 : vector<1x259xf32>
    %109 = vector.broadcast %104 : f32 to vector<1x259xf32>
    %110 = arith.maximumf %1, %109 : vector<1x259xf32>
    %111 = vector.broadcast %105 : f32 to vector<1x259xf32>
    %112 = arith.minimumf %2, %111 : vector<1x259xf32>
    %113 = vector.broadcast %106 : f32 to vector<1x259xf32>
    %114 = arith.minimumf %3, %113 : vector<1x259xf32>
    %115 = arith.subf %112, %108 : vector<1x259xf32>
    %116 = arith.subf %114, %110 : vector<1x259xf32>
    %cst_46 = arith.constant 0.000000e+00 : f32
    %117 = vector.broadcast %cst_46 : f32 to vector<1x259xf32>
    %118 = arith.cmpf ogt, %115, %117 : vector<1x259xf32>
    %cst_47 = arith.constant 0.000000e+00 : f32
    %119 = vector.broadcast %cst_47 : f32 to vector<1x259xf32>
    %120 = arith.cmpf ogt, %116, %119 : vector<1x259xf32>
    %121 = arith.andi %118, %120 : vector<1x259xi1>
    %122 = arith.mulf %115, %116 : vector<1x259xf32>
    %cst_48 = arith.constant 0.000000e+00 : f32
    %123 = vector.broadcast %cst_48 : f32 to vector<1x259xf32>
    %124 = arith.select %121, %122, %123 : vector<1x259xi1>, vector<1x259xf32>
    %125 = arith.subf %105, %103 : f32
    %126 = arith.subf %106, %104 : f32
    %127 = arith.mulf %125, %126 : f32
    %128 = vector.broadcast %127 : f32 to vector<1x259xf32>
    %129 = arith.addf %6, %128 : vector<1x259xf32>
    %130 = arith.subf %129, %124 : vector<1x259xf32>
    %cst_49 = arith.constant 1.000000e-10 : f32
    %131 = vector.broadcast %cst_49 : f32 to vector<1x259xf32>
    %132 = arith.addf %130, %131 : vector<1x259xf32>
    %133 = arith.divf %124, %132 : vector<1x259xf32>
    %134 = arith.cmpf ogt, %133, %89 : vector<1x259xf32>
    %135 = arith.select %134, %133, %89 : vector<1x259xi1>, vector<1x259xf32>
    %c2_i32 = arith.constant 2 : i32
    %136 = vector.broadcast %c2_i32 : i32 to vector<1x259xi32>
    %137 = arith.select %134, %136, %91 : vector<1x259xi1>, vector<1x259xi32>
    %cst_50 = arith.constant 0.000000e+00 : f32
    %138 = vector.broadcast %cst_50 : f32 to vector<1x259xf32>
    %139 = arith.cmpf ogt, %7, %138 : vector<1x259xf32>
    %cst_51 = arith.constant -1.000000e+00 : f32
    %140 = vector.broadcast %cst_51 : f32 to vector<1x259xf32>
    %141 = arith.select %139, %133, %140 : vector<1x259xi1>, vector<1x259xf32>
    %cst_52 = arith.constant dense<0xFF800000> : vector<1xf32>
    %142 = vector.multi_reduction <maximumf>, %141, %cst_52 [1] : vector<1x259xf32> to vector<1xf32>
    %143 = vector.shape_cast %142 : vector<1xf32> to vector<1x1xf32>
    %144 = vector.broadcast %143 : vector<1x1xf32> to vector<1x259xf32>
    %145 = arith.cmpf oge, %141, %144 : vector<1x259xf32>
    %146 = arith.extui %145 : vector<1x259xi1> to vector<1x259xi32>
    %147 = arith.sitofp %146 : vector<1x259xi32> to vector<1x259xf32>
    %148 = arith.maximumf %102, %147 : vector<1x259xf32>
    %c0_53 = arith.constant 0 : index
    %c0_54 = arith.constant 0 : index
    %149 = vector.load %arg4[%c0_53, %c0_54] : memref<1x259xf32, #tpu.memory_space<vmem>>, vector<1x259xf32>
    tpu.vector_store %arg4[%c0_53, %c0_54], %135 {strides = array<i32>} : memref<1x259xf32, #tpu.memory_space<vmem>>, vector<1x259xf32>,
    %c0_55 = arith.constant 0 : index
    %c0_56 = arith.constant 0 : index
    %150 = vector.load %arg5[%c0_55, %c0_56] : memref<1x259xi32, #tpu.memory_space<vmem>>, vector<1x259xi32>
    tpu.vector_store %arg5[%c0_55, %c0_56], %137 {strides = array<i32>} : memref<1x259xi32, #tpu.memory_space<vmem>>, vector<1x259xi32>,
    %c0_57 = arith.constant 0 : index
    %c0_58 = arith.constant 0 : index
    %151 = vector.load %arg6[%c0_57, %c0_58] : memref<1x259xf32, #tpu.memory_space<vmem>>, vector<1x259xf32>
    tpu.vector_store %arg6[%c0_57, %c0_58], %148 {strides = array<i32>} : memref<1x259xf32, #tpu.memory_space<vmem>>, vector<1x259xf32>,
    return
  }
  func.func @transform_0(%arg0: i32) -> (i32, i32) {
    %c0_i32 = arith.constant 0 : i32
    %c0_i32_0 = arith.constant 0 : i32
    %c0_i32_1 = arith.constant 0 : i32
    return %c0_i32, %c0_i32_0 : i32, i32
  }
  func.func @transform_1(%arg0: i32) -> (i32, i32) {
    %c0_i32 = arith.constant 0 : i32
    %c0_i32_0 = arith.constant 0 : i32
    %c0_i32_1 = arith.constant 0 : i32
    return %c0_i32, %c0_i32_0 : i32, i32
  }
  func.func @transform_2(%arg0: i32) -> (i32, i32) {
    %c0_i32 = arith.constant 0 : i32
    %c0_i32_0 = arith.constant 0 : i32
    %c0_i32_1 = arith.constant 0 : i32
    return %c0_i32, %c0_i32_0 : i32, i32
  }
  func.func @transform_3(%arg0: i32) -> (i32, i32) {
    %c0_i32 = arith.constant 0 : i32
    %c0_i32_0 = arith.constant 0 : i32
    %c0_i32_1 = arith.constant 0 : i32
    return %c0_i32, %c0_i32_0 : i32, i32
  }
  func.func @transform_4(%arg0: i32) -> (i32, i32) {
    %c0_i32 = arith.constant 0 : i32
    %c0_i32_0 = arith.constant 0 : i32
    %c0_i32_1 = arith.constant 0 : i32
    return %c0_i32, %c0_i32_0 : i32, i32
  }
  func.func @transform_5(%arg0: i32) -> (i32, i32) {
    %c0_i32 = arith.constant 0 : i32
    %c0_i32_0 = arith.constant 0 : i32
    %c0_i32_1 = arith.constant 0 : i32
    return %c0_i32, %c0_i32_0 : i32, i32
  }
}

module attributes {stable_mosaic.version = 11 : i64} {
  func.func @kernel(%arg0: i32, %arg1: memref<4x256xf32, #tpu.memory_space<vmem>>, %arg2: memref<1x256xf32, #tpu.memory_space<vmem>>, %arg3: memref<3x4xf32, #tpu.memory_space<smem>>, %arg4: memref<1x256xf32, #tpu.memory_space<vmem>>, %arg5: memref<1x256xi32, #tpu.memory_space<vmem>>, %arg6: memref<1x256xf32, #tpu.memory_space<vmem>>) attributes {dimension_semantics = [#tpu.dimension_semantics<arbitrary>], iteration_bounds = array<i64: 1>, scalar_prefetch = 0 : i64, scratch_operands = 0 : i64, tpu.core_type = #tpu.core_type<tc>, window_params = [{pipeline_mode = #tpu.pipeline_mode<synchronous>, transform_indices = @transform_0, window_bounds = array<i64: 4, 256>}, {pipeline_mode = #tpu.pipeline_mode<synchronous>, transform_indices = @transform_1, window_bounds = array<i64: 1, 256>}, {transform_indices = @transform_2, window_bounds = array<i64: 3, 4>}, {pipeline_mode = #tpu.pipeline_mode<synchronous>, transform_indices = @transform_3, window_bounds = array<i64: 1, 256>}, {pipeline_mode = #tpu.pipeline_mode<synchronous>, transform_indices = @transform_4, window_bounds = array<i64: 1, 256>}, {pipeline_mode = #tpu.pipeline_mode<synchronous>, transform_indices = @transform_5, window_bounds = array<i64: 1, 256>}]} {
    %c0 = arith.constant 0 : index
    %c0_0 = arith.constant 0 : index
    %0 = vector.load %arg1[%c0, %c0_0] : memref<4x256xf32, #tpu.memory_space<vmem>>, vector<1x256xf32>
    %c1 = arith.constant 1 : index
    %c0_1 = arith.constant 0 : index
    %1 = vector.load %arg1[%c1, %c0_1] : memref<4x256xf32, #tpu.memory_space<vmem>>, vector<1x256xf32>
    %c2 = arith.constant 2 : index
    %c0_2 = arith.constant 0 : index
    %2 = vector.load %arg1[%c2, %c0_2] : memref<4x256xf32, #tpu.memory_space<vmem>>, vector<1x256xf32>
    %c3 = arith.constant 3 : index
    %c0_3 = arith.constant 0 : index
    %3 = vector.load %arg1[%c3, %c0_3] : memref<4x256xf32, #tpu.memory_space<vmem>>, vector<1x256xf32>
    %4 = arith.subf %2, %0 : vector<1x256xf32>
    %5 = arith.subf %3, %1 : vector<1x256xf32>
    %6 = arith.mulf %4, %5 : vector<1x256xf32>
    %c0_4 = arith.constant 0 : index
    %c0_5 = arith.constant 0 : index
    %7 = vector.load %arg2[%c0_4, %c0_5] : memref<1x256xf32, #tpu.memory_space<vmem>>, vector<1x256xf32>
    %cst = arith.constant -1.000000e+00 : f32
    %8 = vector.broadcast %cst : f32 to vector<1x256xf32>
    %c0_i32 = arith.constant 0 : i32
    %9 = vector.broadcast %c0_i32 : i32 to vector<1x256xi32>
    %cst_6 = arith.constant 0.000000e+00 : f32
    %10 = vector.broadcast %cst_6 : f32 to vector<1x256xf32>
    %c0_7 = arith.constant 0 : index
    %c0_8 = arith.constant 0 : index
    %11 = memref.load %arg3[%c0_7, %c0_8] : memref<3x4xf32, #tpu.memory_space<smem>>
    %c0_9 = arith.constant 0 : index
    %c1_10 = arith.constant 1 : index
    %12 = memref.load %arg3[%c0_9, %c1_10] : memref<3x4xf32, #tpu.memory_space<smem>>
    %c0_11 = arith.constant 0 : index
    %c2_12 = arith.constant 2 : index
    %13 = memref.load %arg3[%c0_11, %c2_12] : memref<3x4xf32, #tpu.memory_space<smem>>
    %c0_13 = arith.constant 0 : index
    %c3_14 = arith.constant 3 : index
    %14 = memref.load %arg3[%c0_13, %c3_14] : memref<3x4xf32, #tpu.memory_space<smem>>
    %15 = vector.broadcast %11 : f32 to vector<1x256xf32>
    %16 = arith.maximumf %0, %15 : vector<1x256xf32>
    %17 = vector.broadcast %12 : f32 to vector<1x256xf32>
    %18 = arith.maximumf %1, %17 : vector<1x256xf32>
    %19 = vector.broadcast %13 : f32 to vector<1x256xf32>
    %20 = arith.minimumf %2, %19 : vector<1x256xf32>
    %21 = vector.broadcast %14 : f32 to vector<1x256xf32>
    %22 = arith.minimumf %3, %21 : vector<1x256xf32>
    %23 = arith.subf %20, %16 : vector<1x256xf32>
    %24 = arith.subf %22, %18 : vector<1x256xf32>
    %cst_15 = arith.constant 0.000000e+00 : f32
    %25 = vector.broadcast %cst_15 : f32 to vector<1x256xf32>
    %26 = arith.cmpf ogt, %23, %25 : vector<1x256xf32>
    %cst_16 = arith.constant 0.000000e+00 : f32
    %27 = vector.broadcast %cst_16 : f32 to vector<1x256xf32>
    %28 = arith.cmpf ogt, %24, %27 : vector<1x256xf32>
    %29 = arith.andi %26, %28 : vector<1x256xi1>
    %30 = arith.mulf %23, %24 : vector<1x256xf32>
    %cst_17 = arith.constant 0.000000e+00 : f32
    %31 = vector.broadcast %cst_17 : f32 to vector<1x256xf32>
    %32 = arith.select %29, %30, %31 : vector<1x256xi1>, vector<1x256xf32>
    %33 = arith.subf %13, %11 : f32
    %34 = arith.subf %14, %12 : f32
    %35 = arith.mulf %33, %34 : f32
    %36 = vector.broadcast %35 : f32 to vector<1x256xf32>
    %37 = arith.addf %6, %36 : vector<1x256xf32>
    %38 = arith.subf %37, %32 : vector<1x256xf32>
    %cst_18 = arith.constant 1.000000e-10 : f32
    %39 = vector.broadcast %cst_18 : f32 to vector<1x256xf32>
    %40 = arith.addf %38, %39 : vector<1x256xf32>
    %41 = arith.divf %32, %40 : vector<1x256xf32>
    %42 = arith.cmpf ogt, %41, %8 : vector<1x256xf32>
    %43 = arith.select %42, %41, %8 : vector<1x256xi1>, vector<1x256xf32>
    %c0_i32_19 = arith.constant 0 : i32
    %44 = vector.broadcast %c0_i32_19 : i32 to vector<1x256xi32>
    %45 = arith.select %42, %44, %9 : vector<1x256xi1>, vector<1x256xi32>
    %cst_20 = arith.constant 0.000000e+00 : f32
    %46 = vector.broadcast %cst_20 : f32 to vector<1x256xf32>
    %47 = arith.cmpf ogt, %7, %46 : vector<1x256xf32>
    %cst_21 = arith.constant -1.000000e+00 : f32
    %48 = vector.broadcast %cst_21 : f32 to vector<1x256xf32>
    %49 = arith.select %47, %41, %48 : vector<1x256xi1>, vector<1x256xf32>
    %cst_22 = arith.constant dense<0xFF800000> : vector<1xf32>
    %50 = vector.multi_reduction <maximumf>, %49, %cst_22 [1] : vector<1x256xf32> to vector<1xf32>
    %51 = vector.shape_cast %50 : vector<1xf32> to vector<1x1xf32>
    %52 = vector.broadcast %51 : vector<1x1xf32> to vector<1x256xf32>
    %53 = arith.cmpf oge, %49, %52 : vector<1x256xf32>
    %54 = arith.extui %53 : vector<1x256xi1> to vector<1x256xi32>
    %55 = arith.sitofp %54 : vector<1x256xi32> to vector<1x256xf32>
    %56 = arith.maximumf %10, %55 : vector<1x256xf32>
    %c1_23 = arith.constant 1 : index
    %c0_24 = arith.constant 0 : index
    %57 = memref.load %arg3[%c1_23, %c0_24] : memref<3x4xf32, #tpu.memory_space<smem>>
    %c1_25 = arith.constant 1 : index
    %c1_26 = arith.constant 1 : index
    %58 = memref.load %arg3[%c1_25, %c1_26] : memref<3x4xf32, #tpu.memory_space<smem>>
    %c1_27 = arith.constant 1 : index
    %c2_28 = arith.constant 2 : index
    %59 = memref.load %arg3[%c1_27, %c2_28] : memref<3x4xf32, #tpu.memory_space<smem>>
    %c1_29 = arith.constant 1 : index
    %c3_30 = arith.constant 3 : index
    %60 = memref.load %arg3[%c1_29, %c3_30] : memref<3x4xf32, #tpu.memory_space<smem>>
    %61 = vector.broadcast %57 : f32 to vector<1x256xf32>
    %62 = arith.maximumf %0, %61 : vector<1x256xf32>
    %63 = vector.broadcast %58 : f32 to vector<1x256xf32>
    %64 = arith.maximumf %1, %63 : vector<1x256xf32>
    %65 = vector.broadcast %59 : f32 to vector<1x256xf32>
    %66 = arith.minimumf %2, %65 : vector<1x256xf32>
    %67 = vector.broadcast %60 : f32 to vector<1x256xf32>
    %68 = arith.minimumf %3, %67 : vector<1x256xf32>
    %69 = arith.subf %66, %62 : vector<1x256xf32>
    %70 = arith.subf %68, %64 : vector<1x256xf32>
    %cst_31 = arith.constant 0.000000e+00 : f32
    %71 = vector.broadcast %cst_31 : f32 to vector<1x256xf32>
    %72 = arith.cmpf ogt, %69, %71 : vector<1x256xf32>
    %cst_32 = arith.constant 0.000000e+00 : f32
    %73 = vector.broadcast %cst_32 : f32 to vector<1x256xf32>
    %74 = arith.cmpf ogt, %70, %73 : vector<1x256xf32>
    %75 = arith.andi %72, %74 : vector<1x256xi1>
    %76 = arith.mulf %69, %70 : vector<1x256xf32>
    %cst_33 = arith.constant 0.000000e+00 : f32
    %77 = vector.broadcast %cst_33 : f32 to vector<1x256xf32>
    %78 = arith.select %75, %76, %77 : vector<1x256xi1>, vector<1x256xf32>
    %79 = arith.subf %59, %57 : f32
    %80 = arith.subf %60, %58 : f32
    %81 = arith.mulf %79, %80 : f32
    %82 = vector.broadcast %81 : f32 to vector<1x256xf32>
    %83 = arith.addf %6, %82 : vector<1x256xf32>
    %84 = arith.subf %83, %78 : vector<1x256xf32>
    %cst_34 = arith.constant 1.000000e-10 : f32
    %85 = vector.broadcast %cst_34 : f32 to vector<1x256xf32>
    %86 = arith.addf %84, %85 : vector<1x256xf32>
    %87 = arith.divf %78, %86 : vector<1x256xf32>
    %88 = arith.cmpf ogt, %87, %43 : vector<1x256xf32>
    %89 = arith.select %88, %87, %43 : vector<1x256xi1>, vector<1x256xf32>
    %c1_i32 = arith.constant 1 : i32
    %90 = vector.broadcast %c1_i32 : i32 to vector<1x256xi32>
    %91 = arith.select %88, %90, %45 : vector<1x256xi1>, vector<1x256xi32>
    %cst_35 = arith.constant 0.000000e+00 : f32
    %92 = vector.broadcast %cst_35 : f32 to vector<1x256xf32>
    %93 = arith.cmpf ogt, %7, %92 : vector<1x256xf32>
    %cst_36 = arith.constant -1.000000e+00 : f32
    %94 = vector.broadcast %cst_36 : f32 to vector<1x256xf32>
    %95 = arith.select %93, %87, %94 : vector<1x256xi1>, vector<1x256xf32>
    %cst_37 = arith.constant dense<0xFF800000> : vector<1xf32>
    %96 = vector.multi_reduction <maximumf>, %95, %cst_37 [1] : vector<1x256xf32> to vector<1xf32>
    %97 = vector.shape_cast %96 : vector<1xf32> to vector<1x1xf32>
    %98 = vector.broadcast %97 : vector<1x1xf32> to vector<1x256xf32>
    %99 = arith.cmpf oge, %95, %98 : vector<1x256xf32>
    %100 = arith.extui %99 : vector<1x256xi1> to vector<1x256xi32>
    %101 = arith.sitofp %100 : vector<1x256xi32> to vector<1x256xf32>
    %102 = arith.maximumf %56, %101 : vector<1x256xf32>
    %c2_38 = arith.constant 2 : index
    %c0_39 = arith.constant 0 : index
    %103 = memref.load %arg3[%c2_38, %c0_39] : memref<3x4xf32, #tpu.memory_space<smem>>
    %c2_40 = arith.constant 2 : index
    %c1_41 = arith.constant 1 : index
    %104 = memref.load %arg3[%c2_40, %c1_41] : memref<3x4xf32, #tpu.memory_space<smem>>
    %c2_42 = arith.constant 2 : index
    %c2_43 = arith.constant 2 : index
    %105 = memref.load %arg3[%c2_42, %c2_43] : memref<3x4xf32, #tpu.memory_space<smem>>
    %c2_44 = arith.constant 2 : index
    %c3_45 = arith.constant 3 : index
    %106 = memref.load %arg3[%c2_44, %c3_45] : memref<3x4xf32, #tpu.memory_space<smem>>
    %107 = vector.broadcast %103 : f32 to vector<1x256xf32>
    %108 = arith.maximumf %0, %107 : vector<1x256xf32>
    %109 = vector.broadcast %104 : f32 to vector<1x256xf32>
    %110 = arith.maximumf %1, %109 : vector<1x256xf32>
    %111 = vector.broadcast %105 : f32 to vector<1x256xf32>
    %112 = arith.minimumf %2, %111 : vector<1x256xf32>
    %113 = vector.broadcast %106 : f32 to vector<1x256xf32>
    %114 = arith.minimumf %3, %113 : vector<1x256xf32>
    %115 = arith.subf %112, %108 : vector<1x256xf32>
    %116 = arith.subf %114, %110 : vector<1x256xf32>
    %cst_46 = arith.constant 0.000000e+00 : f32
    %117 = vector.broadcast %cst_46 : f32 to vector<1x256xf32>
    %118 = arith.cmpf ogt, %115, %117 : vector<1x256xf32>
    %cst_47 = arith.constant 0.000000e+00 : f32
    %119 = vector.broadcast %cst_47 : f32 to vector<1x256xf32>
    %120 = arith.cmpf ogt, %116, %119 : vector<1x256xf32>
    %121 = arith.andi %118, %120 : vector<1x256xi1>
    %122 = arith.mulf %115, %116 : vector<1x256xf32>
    %cst_48 = arith.constant 0.000000e+00 : f32
    %123 = vector.broadcast %cst_48 : f32 to vector<1x256xf32>
    %124 = arith.select %121, %122, %123 : vector<1x256xi1>, vector<1x256xf32>
    %125 = arith.subf %105, %103 : f32
    %126 = arith.subf %106, %104 : f32
    %127 = arith.mulf %125, %126 : f32
    %128 = vector.broadcast %127 : f32 to vector<1x256xf32>
    %129 = arith.addf %6, %128 : vector<1x256xf32>
    %130 = arith.subf %129, %124 : vector<1x256xf32>
    %cst_49 = arith.constant 1.000000e-10 : f32
    %131 = vector.broadcast %cst_49 : f32 to vector<1x256xf32>
    %132 = arith.addf %130, %131 : vector<1x256xf32>
    %133 = arith.divf %124, %132 : vector<1x256xf32>
    %134 = arith.cmpf ogt, %133, %89 : vector<1x256xf32>
    %135 = arith.select %134, %133, %89 : vector<1x256xi1>, vector<1x256xf32>
    %c2_i32 = arith.constant 2 : i32
    %136 = vector.broadcast %c2_i32 : i32 to vector<1x256xi32>
    %137 = arith.select %134, %136, %91 : vector<1x256xi1>, vector<1x256xi32>
    %cst_50 = arith.constant 0.000000e+00 : f32
    %138 = vector.broadcast %cst_50 : f32 to vector<1x256xf32>
    %139 = arith.cmpf ogt, %7, %138 : vector<1x256xf32>
    %cst_51 = arith.constant -1.000000e+00 : f32
    %140 = vector.broadcast %cst_51 : f32 to vector<1x256xf32>
    %141 = arith.select %139, %133, %140 : vector<1x256xi1>, vector<1x256xf32>
    %cst_52 = arith.constant dense<0xFF800000> : vector<1xf32>
    %142 = vector.multi_reduction <maximumf>, %141, %cst_52 [1] : vector<1x256xf32> to vector<1xf32>
    %143 = vector.shape_cast %142 : vector<1xf32> to vector<1x1xf32>
    %144 = vector.broadcast %143 : vector<1x1xf32> to vector<1x256xf32>
    %145 = arith.cmpf oge, %141, %144 : vector<1x256xf32>
    %146 = arith.extui %145 : vector<1x256xi1> to vector<1x256xi32>
    %147 = arith.sitofp %146 : vector<1x256xi32> to vector<1x256xf32>
    %148 = arith.maximumf %102, %147 : vector<1x256xf32>
    %c0_53 = arith.constant 0 : index
    %c0_54 = arith.constant 0 : index
    %149 = vector.load %arg4[%c0_53, %c0_54] : memref<1x256xf32, #tpu.memory_space<vmem>>, vector<1x256xf32>
    tpu.vector_store %arg4[%c0_53, %c0_54], %135 {strides = array<i32>} : memref<1x256xf32, #tpu.memory_space<vmem>>, vector<1x256xf32>,
    %c0_55 = arith.constant 0 : index
    %c0_56 = arith.constant 0 : index
    %150 = vector.load %arg5[%c0_55, %c0_56] : memref<1x256xi32, #tpu.memory_space<vmem>>, vector<1x256xi32>
    tpu.vector_store %arg5[%c0_55, %c0_56], %137 {strides = array<i32>} : memref<1x256xi32, #tpu.memory_space<vmem>>, vector<1x256xi32>,
    %c0_57 = arith.constant 0 : index
    %c0_58 = arith.constant 0 : index
    %151 = vector.load %arg6[%c0_57, %c0_58] : memref<1x256xf32, #tpu.memory_space<vmem>>, vector<1x256xf32>
    tpu.vector_store %arg6[%c0_57, %c0_58], %148 {strides = array<i32>} : memref<1x256xf32, #tpu.memory_space<vmem>>, vector<1x256xf32>,
    return
  }
  func.func @transform_0(%arg0: i32) -> (i32, i32) {
    %c0_i32 = arith.constant 0 : i32
    %c0_i32_0 = arith.constant 0 : i32
    %c0_i32_1 = arith.constant 0 : i32
    return %c0_i32, %c0_i32_0 : i32, i32
  }
  func.func @transform_1(%arg0: i32) -> (i32, i32) {
    %c0_i32 = arith.constant 0 : i32
    %c0_i32_0 = arith.constant 0 : i32
    %c0_i32_1 = arith.constant 0 : i32
    return %c0_i32, %c0_i32_0 : i32, i32
  }
  func.func @transform_2(%arg0: i32) -> (i32, i32) {
    %c0_i32 = arith.constant 0 : i32
    %c0_i32_0 = arith.constant 0 : i32
    %c0_i32_1 = arith.constant 0 : i32
    return %c0_i32, %c0_i32_0 : i32, i32
  }
  func.func @transform_3(%arg0: i32) -> (i32, i32) {
    %c0_i32 = arith.constant 0 : i32
    %c0_i32_0 = arith.constant 0 : i32
    %c0_i32_1 = arith.constant 0 : i32
    return %c0_i32, %c0_i32_0 : i32, i32
  }
  func.func @transform_4(%arg0: i32) -> (i32, i32) {
    %c0_i32 = arith.constant 0 : i32
    %c0_i32_0 = arith.constant 0 : i32
    %c0_i32_1 = arith.constant 0 : i32
    return %c0_i32, %c0_i32_0 : i32, i32
  }
  func.func @transform_5(%arg0: i32) -> (i32, i32) {
    %c0_i32 = arith.constant 0 : i32
    %c0_i32_0 = arith.constant 0 : i32
    %c0_i32_1 = arith.constant 0 : i32
    return %c0_i32, %c0_i32_0 : i32, i32
  }
}

module attributes {stable_mosaic.version = 11 : i64} {
  func.func @kernel(%arg0: i32, %arg1: memref<128x4xf32, #tpu.memory_space<vmem>>, %arg2: memref<2x256xf32, #tpu.memory_space<vmem>>, %arg3: memref<256x32xbf16, #tpu.memory_space<vmem>>, %arg4: memref<32x64xbf16, #tpu.memory_space<vmem>>, %arg5: memref<1x64xf32, #tpu.memory_space<vmem>>, %arg6: memref<15x64xf32, #tpu.memory_space<vmem>>, %arg7: memref<15x1xf32, #tpu.memory_space<vmem>>, %arg8: memref<15x128xf32, #tpu.memory_space<vmem>>, %arg9: memref<128x32xf32, #tpu.memory_space<vmem>>, %arg10: memref<128x1xf32, #tpu.memory_space<vmem>>) attributes {dimension_semantics = [#tpu.dimension_semantics<arbitrary>], iteration_bounds = array<i64: 1>, scalar_prefetch = 0 : i64, scratch_operands = 2 : i64, tpu.core_type = #tpu.core_type<tc>, window_params = [{pipeline_mode = #tpu.pipeline_mode<synchronous>, transform_indices = @transform_0, window_bounds = array<i64: 128, 4>}, {transform_indices = @transform_1, window_bounds = array<i64: 2, 256>}, {transform_indices = @transform_2, window_bounds = array<i64: 256, 32>}, {pipeline_mode = #tpu.pipeline_mode<synchronous>, transform_indices = @transform_3, window_bounds = array<i64: 32, 64>}, {pipeline_mode = #tpu.pipeline_mode<synchronous>, transform_indices = @transform_4, window_bounds = array<i64: 1, 64>}, {pipeline_mode = #tpu.pipeline_mode<synchronous>, transform_indices = @transform_5, window_bounds = array<i64: 15, 64>}, {pipeline_mode = #tpu.pipeline_mode<synchronous>, transform_indices = @transform_6, window_bounds = array<i64: 15, 1>}, {pipeline_mode = #tpu.pipeline_mode<synchronous>, transform_indices = @transform_7, window_bounds = array<i64: 15, 128>}]} {
    %c0_i32 = arith.constant 0 : i32
    %0 = arith.cmpi eq, %arg0, %c0_i32 : i32
    %1 = arith.extui %0 : i1 to i32
    %c0_i32_0 = arith.constant 0 : i32
    %2 = arith.cmpi ne, %1, %c0_i32_0 : i32
    scf.if %2 {
      %cst_22 = arith.constant 0.000000e+00 : f32
      %40 = vector.broadcast %cst_22 : f32 to vector<128x32xf32>
      %c0_23 = arith.constant 0 : index
      %c0_24 = arith.constant 0 : index
      %41 = vector.load %arg9[%c0_23, %c0_24] : memref<128x32xf32, #tpu.memory_space<vmem>>, vector<128x32xf32>
      tpu.vector_store %arg9[%c0_23, %c0_24], %40 {strides = array<i32>} : memref<128x32xf32, #tpu.memory_space<vmem>>, vector<128x32xf32>,
      %cst_25 = arith.constant 0.000000e+00 : f32
      %42 = vector.broadcast %cst_25 : f32 to vector<128x1xf32>
      %c0_26 = arith.constant 0 : index
      %c0_27 = arith.constant 0 : index
      %43 = vector.load %arg10[%c0_26, %c0_27] : memref<128x1xf32, #tpu.memory_space<vmem>>, vector<128x1xf32>
      tpu.vector_store %arg10[%c0_26, %c0_27], %42 {strides = array<i32>} : memref<128x1xf32, #tpu.memory_space<vmem>>, vector<128x1xf32>,
    } else {
    }
    %c0 = arith.constant 0 : index
    %c0_1 = arith.constant 0 : index
    %3 = vector.load %arg2[%c0, %c0_1] : memref<2x256xf32, #tpu.memory_space<vmem>>, vector<1x256xf32>
    %c1 = arith.constant 1 : index
    %c0_2 = arith.constant 0 : index
    %4 = vector.load %arg2[%c1, %c0_2] : memref<2x256xf32, #tpu.memory_space<vmem>>, vector<1x256xf32>
    %c0_3 = arith.constant 0 : index
    %c0_4 = arith.constant 0 : index
    %5 = vector.load %arg1[%c0_3, %c0_4] : memref<128x4xf32, #tpu.memory_space<vmem>>, vector<128x1xf32>
    %c0_5 = arith.constant 0 : index
    %c1_6 = arith.constant 1 : index
    %6 = vector.load %arg1[%c0_5, %c1_6] : memref<128x4xf32, #tpu.memory_space<vmem>>, vector<128x1xf32>
    %c0_7 = arith.constant 0 : index
    %c2 = arith.constant 2 : index
    %7 = vector.load %arg1[%c0_7, %c2] : memref<128x4xf32, #tpu.memory_space<vmem>>, vector<128x1xf32>
    %c0_8 = arith.constant 0 : index
    %c3 = arith.constant 3 : index
    %8 = vector.load %arg1[%c0_8, %c3] : memref<128x4xf32, #tpu.memory_space<vmem>>, vector<128x1xf32>
    %9 = vector.broadcast %3 : vector<1x256xf32> to vector<128x256xf32>
    %10 = vector.broadcast %5 : vector<128x1xf32> to vector<128x256xf32>
    %11 = arith.cmpf oge, %9, %10 : vector<128x256xf32>
    %12 = vector.broadcast %3 : vector<1x256xf32> to vector<128x256xf32>
    %13 = vector.broadcast %7 : vector<128x1xf32> to vector<128x256xf32>
    %14 = arith.cmpf ole, %12, %13 : vector<128x256xf32>
    %15 = arith.andi %11, %14 : vector<128x256xi1>
    %16 = vector.broadcast %4 : vector<1x256xf32> to vector<128x256xf32>
    %17 = vector.broadcast %6 : vector<128x1xf32> to vector<128x256xf32>
    %18 = arith.cmpf oge, %16, %17 : vector<128x256xf32>
    %19 = arith.andi %15, %18 : vector<128x256xi1>
    %20 = vector.broadcast %4 : vector<1x256xf32> to vector<128x256xf32>
    %21 = vector.broadcast %8 : vector<128x1xf32> to vector<128x256xf32>
    %22 = arith.cmpf ole, %20, %21 : vector<128x256xf32>
    %23 = arith.andi %19, %22 : vector<128x256xi1>
    %24 = arith.extui %23 : vector<128x256xi1> to vector<128x256xi32>
    %25 = arith.sitofp %24 : vector<128x256xi32> to vector<128x256xf32>
    %c0_9 = arith.constant 0 : index
    %c0_10 = arith.constant 0 : index
    %26 = vector.load %arg10[%c0_9, %c0_10] : memref<128x1xf32, #tpu.memory_space<vmem>>, vector<128x1xf32>
    %cst = arith.constant dense<0.000000e+00> : vector<128xf32>
    %27 = vector.multi_reduction <add>, %25, %cst [1] : vector<128x256xf32> to vector<128xf32>
    %28 = vector.shape_cast %27 : vector<128xf32> to vector<128x1xf32>
    %29 = arith.addf %26, %28 : vector<128x1xf32>
    %c0_11 = arith.constant 0 : index
    %c0_12 = arith.constant 0 : index
    %30 = vector.load %arg10[%c0_11, %c0_12] : memref<128x1xf32, #tpu.memory_space<vmem>>, vector<128x1xf32>
    tpu.vector_store %arg10[%c0_11, %c0_12], %29 {strides = array<i32>} : memref<128x1xf32, #tpu.memory_space<vmem>>, vector<128x1xf32>,
    %c0_13 = arith.constant 0 : index
    %c0_14 = arith.constant 0 : index
    %31 = vector.load %arg9[%c0_13, %c0_14] : memref<128x32xf32, #tpu.memory_space<vmem>>, vector<128x32xf32>
    %32 = arith.truncf %25 : vector<128x256xf32> to vector<128x256xbf16>
    %c0_15 = arith.constant 0 : index
    %c0_16 = arith.constant 0 : index
    %33 = vector.load %arg3[%c0_15, %c0_16] : memref<256x32xbf16, #tpu.memory_space<vmem>>, vector<256x32xbf16>
    %cst_17 = arith.constant dense<0.000000e+00> : vector<128x32xf32>
    %34 = tpu.matmul %32, %33, %cst_17 {dimension_numbers = #tpu.dot_dimension_numbers<[1], [0], [0], [1], [0, 0, 1, 1], [], []>} : vector<128x256xbf16>, vector<256x32xbf16>, vector<128x32xf32> -> vector<128x32xf32>
    %35 = arith.addf %31, %34 : vector<128x32xf32>
    %c0_18 = arith.constant 0 : index
    %c0_19 = arith.constant 0 : index
    %36 = vector.load %arg9[%c0_18, %c0_19] : memref<128x32xf32, #tpu.memory_space<vmem>>, vector<128x32xf32>
    tpu.vector_store %arg9[%c0_18, %c0_19], %35 {strides = array<i32>} : memref<128x32xf32, #tpu.memory_space<vmem>>, vector<128x32xf32>,
    %c0_i32_20 = arith.constant 0 : i32
    %37 = arith.cmpi eq, %arg0, %c0_i32_20 : i32
    %38 = arith.extui %37 : i1 to i32
    %c0_i32_21 = arith.constant 0 : i32
    %39 = arith.cmpi ne, %38, %c0_i32_21 : i32
    scf.if %39 {
      %c0_22 = arith.constant 0 : index
      %c0_23 = arith.constant 0 : index
      %40 = vector.load %arg9[%c0_22, %c0_23] : memref<128x32xf32, #tpu.memory_space<vmem>>, vector<128x32xf32>
      %c0_24 = arith.constant 0 : index
      %c0_25 = arith.constant 0 : index
      %41 = vector.load %arg10[%c0_24, %c0_25] : memref<128x1xf32, #tpu.memory_space<vmem>>, vector<128x1xf32>
      %cst_26 = arith.constant 1.000000e+00 : f32
      %42 = vector.broadcast %cst_26 : f32 to vector<128x1xf32>
      %43 = arith.maximumf %41, %42 : vector<128x1xf32>
      %44 = vector.broadcast %43 : vector<128x1xf32> to vector<128x32xf32>
      %45 = arith.divf %40, %44 : vector<128x32xf32>
      %46 = arith.truncf %45 : vector<128x32xf32> to vector<128x32xbf16>
      %c0_27 = arith.constant 0 : index
      %c0_28 = arith.constant 0 : index
      %47 = vector.load %arg4[%c0_27, %c0_28] : memref<32x64xbf16, #tpu.memory_space<vmem>>, vector<32x64xbf16>
      %cst_29 = arith.constant dense<0.000000e+00> : vector<128x64xf32>
      %48 = tpu.matmul %46, %47, %cst_29 {dimension_numbers = #tpu.dot_dimension_numbers<[1], [0], [0], [1], [0, 0, 1, 1], [], []>} : vector<128x32xbf16>, vector<32x64xbf16>, vector<128x64xf32> -> vector<128x64xf32>
      %c0_30 = arith.constant 0 : index
      %c0_31 = arith.constant 0 : index
      %49 = vector.load %arg5[%c0_30, %c0_31] : memref<1x64xf32, #tpu.memory_space<vmem>>, vector<1x64xf32>
      %50 = vector.broadcast %49 : vector<1x64xf32> to vector<128x64xf32>
      %51 = arith.addf %48, %50 : vector<128x64xf32>
      %cst_32 = arith.constant 0.000000e+00 : f32
      %52 = vector.broadcast %cst_32 : f32 to vector<128x64xf32>
      %53 = arith.maximumf %51, %52 : vector<128x64xf32>
      %c0_33 = arith.constant 0 : index
      %c0_34 = arith.constant 0 : index
      %54 = vector.load %arg6[%c0_33, %c0_34] : memref<15x64xf32, #tpu.memory_space<vmem>>, vector<15x64xf32>
      %cst_35 = arith.constant dense<0.000000e+00> : vector<15x128xf32>
      %55 = tpu.matmul %54, %53, %cst_35 {dimension_numbers = #tpu.dot_dimension_numbers<[1], [1], [0], [0], [0, 0, 1, 0], [], []>} : vector<15x64xf32>, vector<128x64xf32>, vector<15x128xf32> -> vector<15x128xf32>
      %c0_36 = arith.constant 0 : index
      %c0_37 = arith.constant 0 : index
      %56 = vector.load %arg7[%c0_36, %c0_37] : memref<15x1xf32, #tpu.memory_space<vmem>>, vector<15x1xf32>
      %57 = vector.broadcast %56 : vector<15x1xf32> to vector<15x128xf32>
      %58 = arith.addf %55, %57 : vector<15x128xf32>
      %c0_38 = arith.constant 0 : index
      %c0_39 = arith.constant 0 : index
      %59 = vector.load %arg8[%c0_38, %c0_39] : memref<15x128xf32, #tpu.memory_space<vmem>>, vector<15x128xf32>
      tpu.vector_store %arg8[%c0_38, %c0_39], %58 {strides = array<i32>} : memref<15x128xf32, #tpu.memory_space<vmem>>, vector<15x128xf32>,
    } else {
    }
    return
  }
  func.func @transform_0(%arg0: i32) -> (i32, i32) {
    %c0_i32 = arith.constant 0 : i32
    %c0_i32_0 = arith.constant 0 : i32
    %c0_i32_1 = arith.constant 0 : i32
    return %c0_i32, %c0_i32_0 : i32, i32
  }
  func.func @transform_1(%arg0: i32) -> (i32, i32) {
    %c0_i32 = arith.constant 0 : i32
    %c0_i32_0 = arith.constant 0 : i32
    return %c0_i32, %arg0 : i32, i32
  }
  func.func @transform_2(%arg0: i32) -> (i32, i32) {
    %c0_i32 = arith.constant 0 : i32
    %c0_i32_0 = arith.constant 0 : i32
    return %arg0, %c0_i32 : i32, i32
  }
  func.func @transform_3(%arg0: i32) -> (i32, i32) {
    %c0_i32 = arith.constant 0 : i32
    %c0_i32_0 = arith.constant 0 : i32
    %c0_i32_1 = arith.constant 0 : i32
    return %c0_i32, %c0_i32_0 : i32, i32
  }
  func.func @transform_4(%arg0: i32) -> (i32, i32) {
    %c0_i32 = arith.constant 0 : i32
    %c0_i32_0 = arith.constant 0 : i32
    %c0_i32_1 = arith.constant 0 : i32
    return %c0_i32, %c0_i32_0 : i32, i32
  }
  func.func @transform_5(%arg0: i32) -> (i32, i32) {
    %c0_i32 = arith.constant 0 : i32
    %c0_i32_0 = arith.constant 0 : i32
    %c0_i32_1 = arith.constant 0 : i32
    return %c0_i32, %c0_i32_0 : i32, i32
  }
  func.func @transform_6(%arg0: i32) -> (i32, i32) {
    %c0_i32 = arith.constant 0 : i32
    %c0_i32_0 = arith.constant 0 : i32
    %c0_i32_1 = arith.constant 0 : i32
    return %c0_i32, %c0_i32_0 : i32, i32
  }
  func.func @transform_7(%arg0: i32) -> (i32, i32) {
    %c0_i32 = arith.constant 0 : i32
    %c0_i32_0 = arith.constant 0 : i32
    %c0_i32_1 = arith.constant 0 : i32
    return %c0_i32, %c0_i32_0 : i32, i32
  }
}

module attributes {stable_mosaic.version = 11 : i64} {
  func.func @kernel(%arg0: i32, %arg1: memref<4x256xf32, #tpu.memory_space<vmem>>, %arg2: memref<4x256xf32, #tpu.memory_space<vmem>>, %arg3: memref<1x256xi32, #tpu.memory_space<vmem>>, %arg4: memref<2x256xf32, #tpu.memory_space<vmem>>, %arg5: memref<4x128xf32, #tpu.memory_space<vmem>>, %arg6: memref<4x128xf32, #tpu.memory_space<vmem>>, %arg7: memref<1x128xi32, #tpu.memory_space<vmem>>, %arg8: memref<3x128xf32, #tpu.memory_space<vmem>>, %arg9: memref<1x1xf32, #tpu.memory_space<vmem>>, %arg10: memref<1x1xf32, #tpu.memory_space<vmem>>, %arg11: memref<1x1xf32, #tpu.memory_space<vmem>>, %arg12: memref<1x1xf32, #tpu.memory_space<vmem>>) attributes {dimension_semantics = [#tpu.dimension_semantics<arbitrary>], iteration_bounds = array<i64: 1>, scalar_prefetch = 0 : i64, scratch_operands = 0 : i64, tpu.core_type = #tpu.core_type<tc>, window_params = [{pipeline_mode = #tpu.pipeline_mode<synchronous>, transform_indices = @transform_0, window_bounds = array<i64: 4, 256>}, {pipeline_mode = #tpu.pipeline_mode<synchronous>, transform_indices = @transform_1, window_bounds = array<i64: 4, 256>}, {pipeline_mode = #tpu.pipeline_mode<synchronous>, transform_indices = @transform_2, window_bounds = array<i64: 1, 256>}, {pipeline_mode = #tpu.pipeline_mode<synchronous>, transform_indices = @transform_3, window_bounds = array<i64: 2, 256>}, {pipeline_mode = #tpu.pipeline_mode<synchronous>, transform_indices = @transform_4, window_bounds = array<i64: 4, 128>}, {pipeline_mode = #tpu.pipeline_mode<synchronous>, transform_indices = @transform_5, window_bounds = array<i64: 4, 128>}, {pipeline_mode = #tpu.pipeline_mode<synchronous>, transform_indices = @transform_6, window_bounds = array<i64: 1, 128>}, {pipeline_mode = #tpu.pipeline_mode<synchronous>, transform_indices = @transform_7, window_bounds = array<i64: 3, 128>}, {pipeline_mode = #tpu.pipeline_mode<synchronous>, transform_indices = @transform_8, window_bounds = array<i64: 1, 1>}, {pipeline_mode = #tpu.pipeline_mode<synchronous>, transform_indices = @transform_9, window_bounds = array<i64: 1, 1>}, {pipeline_mode = #tpu.pipeline_mode<synchronous>, transform_indices = @transform_10, window_bounds = array<i64: 1, 1>}, {pipeline_mode = #tpu.pipeline_mode<synchronous>, transform_indices = @transform_11, window_bounds = array<i64: 1, 1>}]} {
    %cst = arith.constant 1.000000e+00 : f32
    %0 = vector.broadcast %cst : f32 to vector<1x1xf32>
    %c0 = arith.constant 0 : index
    %c0_0 = arith.constant 0 : index
    %1 = vector.load %arg3[%c0, %c0_0] : memref<1x256xi32, #tpu.memory_space<vmem>>, vector<1x256xi32>
    %c0_1 = arith.constant 0 : index
    %c0_2 = arith.constant 0 : index
    %2 = vector.load %arg7[%c0_1, %c0_2] : memref<1x128xi32, #tpu.memory_space<vmem>>, vector<1x128xi32>
    %c0_3 = arith.constant 0 : index
    %c0_4 = arith.constant 0 : index
    %3 = vector.load %arg1[%c0_3, %c0_4] : memref<4x256xf32, #tpu.memory_space<vmem>>, vector<4x256xf32>
    %c0_5 = arith.constant 0 : index
    %c0_6 = arith.constant 0 : index
    %4 = vector.load %arg2[%c0_5, %c0_6] : memref<4x256xf32, #tpu.memory_space<vmem>>, vector<4x256xf32>
    %c0_i32 = arith.constant 0 : i32
    %5 = vector.broadcast %c0_i32 : i32 to vector<1x256xi32>
    %6 = arith.cmpi sgt, %1, %5 : vector<1x256xi32>
    %7 = arith.extui %6 : vector<1x256xi1> to vector<1x256xi32>
    %8 = arith.sitofp %7 : vector<1x256xi32> to vector<1x256xf32>
    %9 = arith.subf %3, %4 : vector<4x256xf32>
    %10 = vector.broadcast %8 : vector<1x256xf32> to vector<4x256xf32>
    %11 = arith.mulf %10, %9 : vector<4x256xf32>
    %12 = math.absf %11 : vector<4x256xf32>
    %cst_7 = arith.constant 0.111111112 : f32
    %13 = vector.broadcast %cst_7 : f32 to vector<4x256xf32>
    %14 = arith.cmpf olt, %12, %13 : vector<4x256xf32>
    %15 = arith.extui %14 : vector<4x256xi1> to vector<4x256xi32>
    %16 = arith.sitofp %15 : vector<4x256xi32> to vector<4x256xf32>
    %cst_8 = arith.constant 4.500000e+00 : f32
    %17 = vector.broadcast %cst_8 : f32 to vector<4x256xf32>
    %18 = arith.mulf %16, %17 : vector<4x256xf32>
    %19 = arith.mulf %18, %11 : vector<4x256xf32>
    %20 = arith.mulf %19, %11 : vector<4x256xf32>
    %cst_9 = arith.constant 1.000000e+00 : f32
    %21 = vector.broadcast %cst_9 : f32 to vector<4x256xf32>
    %22 = arith.subf %21, %16 : vector<4x256xf32>
    %cst_10 = arith.constant 0.055555556 : f32
    %23 = vector.broadcast %cst_10 : f32 to vector<4x256xf32>
    %24 = arith.subf %12, %23 : vector<4x256xf32>
    %25 = arith.mulf %22, %24 : vector<4x256xf32>
    %26 = arith.addf %20, %25 : vector<4x256xf32>
    %c0_i32_11 = arith.constant 0 : i32
    %27 = vector.broadcast %c0_i32_11 : i32 to vector<1x256xi32>
    %28 = arith.cmpi sge, %1, %27 : vector<1x256xi32>
    %29 = arith.extui %28 : vector<1x256xi1> to vector<1x256xi32>
    %30 = arith.sitofp %29 : vector<1x256xi32> to vector<1x256xf32>
    %31 = vector.shape_cast %30 : vector<1x256xf32> to vector<1x1x256xf32>
    %cst_12 = arith.constant dense<0.000000e+00> : vector<1xf32>
    %32 = vector.multi_reduction <add>, %31, %cst_12 [1, 2] : vector<1x1x256xf32> to vector<1xf32>
    %33 = vector.shape_cast %32 : vector<1xf32> to vector<1x1x1xf32>
    %34 = vector.extract %33[0, 0, 0] : f32 from vector<1x1x1xf32>
    %cst_13 = arith.constant 1.000000e+00 : f32
    %35 = arith.maximumf %34, %cst_13 : f32
    %36 = vector.shape_cast %26 : vector<4x256xf32> to vector<1x4x256xf32>
    %cst_14 = arith.constant dense<0.000000e+00> : vector<1xf32>
    %37 = vector.multi_reduction <add>, %36, %cst_14 [1, 2] : vector<1x4x256xf32> to vector<1xf32>
    %38 = vector.shape_cast %37 : vector<1xf32> to vector<1x1x1xf32>
    %39 = vector.extract %38[0, 0, 0] : f32 from vector<1x1x1xf32>
    %40 = arith.divf %39, %35 : f32
    %41 = vector.broadcast %40 : f32 to vector<1x1xf32>
    %42 = arith.mulf %41, %0 : vector<1x1xf32>
    %c0_15 = arith.constant 0 : index
    %c0_16 = arith.constant 0 : index
    %43 = vector.load %arg9[%c0_15, %c0_16] : memref<1x1xf32, #tpu.memory_space<vmem>>, vector<1x1xf32>
    tpu.vector_store %arg9[%c0_15, %c0_16], %42 {strides = array<i32>} : memref<1x1xf32, #tpu.memory_space<vmem>>, vector<1x1xf32>,
    %c0_17 = arith.constant 0 : index
    %c0_18 = arith.constant 0 : index
    %44 = vector.load %arg4[%c0_17, %c0_18] : memref<2x256xf32, #tpu.memory_space<vmem>>, vector<2x256xf32>
    %cst_19 = arith.constant dense<0xFF800000> : vector<256xf32>
    %45 = vector.multi_reduction <maximumf>, %44, %cst_19 [0] : vector<2x256xf32> to vector<256xf32>
    %46 = vector.shape_cast %45 : vector<256xf32> to vector<1x256xf32>
    %47 = vector.broadcast %46 : vector<1x256xf32> to vector<2x256xf32>
    %48 = arith.subf %44, %47 : vector<2x256xf32>
    %49 = math.exp %48 : vector<2x256xf32>
    %cst_20 = arith.constant dense<0.000000e+00> : vector<256xf32>
    %50 = vector.multi_reduction <add>, %49, %cst_20 [0] : vector<2x256xf32> to vector<256xf32>
    %51 = vector.shape_cast %50 : vector<256xf32> to vector<1x256xf32>
    %52 = math.log %51 : vector<1x256xf32>
    %53 = arith.addf %52, %46 : vector<1x256xf32>
    %54 = vector.broadcast %53 : vector<1x256xf32> to vector<2x256xf32>
    %55 = arith.subf %44, %54 : vector<2x256xf32>
    %56 = tpu.iota {dimensions = array<i32: 0>} : vector<2x256xi32>
    %57 = vector.broadcast %1 : vector<1x256xi32> to vector<2x256xi32>
    %58 = arith.cmpi eq, %56, %57 : vector<2x256xi32>
    %59 = arith.extui %58 : vector<2x256xi1> to vector<2x256xi32>
    %60 = arith.sitofp %59 : vector<2x256xi32> to vector<2x256xf32>
    %61 = arith.mulf %55, %60 : vector<2x256xf32>
    %cst_21 = arith.constant dense<0.000000e+00> : vector<256xf32>
    %62 = vector.multi_reduction <add>, %61, %cst_21 [0] : vector<2x256xf32> to vector<256xf32>
    %63 = vector.shape_cast %62 : vector<256xf32> to vector<1x256xf32>
    %c0_i32_22 = arith.constant 0 : i32
    %64 = vector.broadcast %c0_i32_22 : i32 to vector<1x256xi32>
    %65 = arith.cmpi sge, %1, %64 : vector<1x256xi32>
    %66 = arith.extui %65 : vector<1x256xi1> to vector<1x256xi32>
    %67 = arith.sitofp %66 : vector<1x256xi32> to vector<1x256xf32>
    %68 = vector.shape_cast %67 : vector<1x256xf32> to vector<1x1x256xf32>
    %cst_23 = arith.constant dense<0.000000e+00> : vector<1xf32>
    %69 = vector.multi_reduction <add>, %68, %cst_23 [1, 2] : vector<1x1x256xf32> to vector<1xf32>
    %70 = vector.shape_cast %69 : vector<1xf32> to vector<1x1x1xf32>
    %71 = vector.extract %70[0, 0, 0] : f32 from vector<1x1x1xf32>
    %cst_24 = arith.constant 1.000000e+00 : f32
    %72 = arith.maximumf %71, %cst_24 : f32
    %73 = arith.mulf %63, %67 : vector<1x256xf32>
    %74 = vector.shape_cast %73 : vector<1x256xf32> to vector<1x1x256xf32>
    %cst_25 = arith.constant dense<0.000000e+00> : vector<1xf32>
    %75 = vector.multi_reduction <add>, %74, %cst_25 [1, 2] : vector<1x1x256xf32> to vector<1xf32>
    %76 = vector.shape_cast %75 : vector<1xf32> to vector<1x1x1xf32>
    %77 = vector.extract %76[0, 0, 0] : f32 from vector<1x1x1xf32>
    %cst_26 = arith.constant 0.000000e+00 : f32
    %78 = arith.subf %cst_26, %77 : f32
    %79 = arith.divf %78, %72 : f32
    %80 = vector.broadcast %79 : f32 to vector<1x1xf32>
    %81 = arith.mulf %80, %0 : vector<1x1xf32>
    %c0_27 = arith.constant 0 : index
    %c0_28 = arith.constant 0 : index
    %82 = vector.load %arg10[%c0_27, %c0_28] : memref<1x1xf32, #tpu.memory_space<vmem>>, vector<1x1xf32>
    tpu.vector_store %arg10[%c0_27, %c0_28], %81 {strides = array<i32>} : memref<1x1xf32, #tpu.memory_space<vmem>>, vector<1x1xf32>,
    %c0_29 = arith.constant 0 : index
    %c0_30 = arith.constant 0 : index
    %83 = vector.load %arg5[%c0_29, %c0_30] : memref<4x128xf32, #tpu.memory_space<vmem>>, vector<4x128xf32>
    %c0_31 = arith.constant 0 : index
    %c0_32 = arith.constant 0 : index
    %84 = vector.load %arg6[%c0_31, %c0_32] : memref<4x128xf32, #tpu.memory_space<vmem>>, vector<4x128xf32>
    %c0_i32_33 = arith.constant 0 : i32
    %85 = vector.broadcast %c0_i32_33 : i32 to vector<1x128xi32>
    %86 = arith.cmpi sgt, %2, %85 : vector<1x128xi32>
    %87 = arith.extui %86 : vector<1x128xi1> to vector<1x128xi32>
    %88 = arith.sitofp %87 : vector<1x128xi32> to vector<1x128xf32>
    %89 = arith.subf %83, %84 : vector<4x128xf32>
    %90 = vector.broadcast %88 : vector<1x128xf32> to vector<4x128xf32>
    %91 = arith.mulf %90, %89 : vector<4x128xf32>
    %92 = math.absf %91 : vector<4x128xf32>
    %cst_34 = arith.constant 1.000000e+00 : f32
    %93 = vector.broadcast %cst_34 : f32 to vector<4x128xf32>
    %94 = arith.cmpf olt, %92, %93 : vector<4x128xf32>
    %95 = arith.extui %94 : vector<4x128xi1> to vector<4x128xi32>
    %96 = arith.sitofp %95 : vector<4x128xi32> to vector<4x128xf32>
    %cst_35 = arith.constant 5.000000e-01 : f32
    %97 = vector.broadcast %cst_35 : f32 to vector<4x128xf32>
    %98 = arith.mulf %96, %97 : vector<4x128xf32>
    %99 = arith.mulf %98, %91 : vector<4x128xf32>
    %100 = arith.mulf %99, %91 : vector<4x128xf32>
    %cst_36 = arith.constant 1.000000e+00 : f32
    %101 = vector.broadcast %cst_36 : f32 to vector<4x128xf32>
    %102 = arith.subf %101, %96 : vector<4x128xf32>
    %cst_37 = arith.constant 5.000000e-01 : f32
    %103 = vector.broadcast %cst_37 : f32 to vector<4x128xf32>
    %104 = arith.subf %92, %103 : vector<4x128xf32>
    %105 = arith.mulf %102, %104 : vector<4x128xf32>
    %106 = arith.addf %100, %105 : vector<4x128xf32>
    %c0_i32_38 = arith.constant 0 : i32
    %107 = vector.broadcast %c0_i32_38 : i32 to vector<1x128xi32>
    %108 = arith.cmpi sge, %2, %107 : vector<1x128xi32>
    %109 = arith.extui %108 : vector<1x128xi1> to vector<1x128xi32>
    %110 = arith.sitofp %109 : vector<1x128xi32> to vector<1x128xf32>
    %111 = vector.shape_cast %110 : vector<1x128xf32> to vector<1x1x128xf32>
    %cst_39 = arith.constant dense<0.000000e+00> : vector<1xf32>
    %112 = vector.multi_reduction <add>, %111, %cst_39 [1, 2] : vector<1x1x128xf32> to vector<1xf32>
    %113 = vector.shape_cast %112 : vector<1xf32> to vector<1x1x1xf32>
    %114 = vector.extract %113[0, 0, 0] : f32 from vector<1x1x1xf32>
    %cst_40 = arith.constant 1.000000e+00 : f32
    %115 = arith.maximumf %114, %cst_40 : f32
    %116 = vector.shape_cast %106 : vector<4x128xf32> to vector<1x4x128xf32>
    %cst_41 = arith.constant dense<0.000000e+00> : vector<1xf32>
    %117 = vector.multi_reduction <add>, %116, %cst_41 [1, 2] : vector<1x4x128xf32> to vector<1xf32>
    %118 = vector.shape_cast %117 : vector<1xf32> to vector<1x1x1xf32>
    %119 = vector.extract %118[0, 0, 0] : f32 from vector<1x1x1xf32>
    %120 = arith.divf %119, %115 : f32
    %121 = vector.broadcast %120 : f32 to vector<1x1xf32>
    %122 = arith.mulf %121, %0 : vector<1x1xf32>
    %c0_42 = arith.constant 0 : index
    %c0_43 = arith.constant 0 : index
    %123 = vector.load %arg11[%c0_42, %c0_43] : memref<1x1xf32, #tpu.memory_space<vmem>>, vector<1x1xf32>
    tpu.vector_store %arg11[%c0_42, %c0_43], %122 {strides = array<i32>} : memref<1x1xf32, #tpu.memory_space<vmem>>, vector<1x1xf32>,
    %c0_44 = arith.constant 0 : index
    %c0_45 = arith.constant 0 : index
    %124 = vector.load %arg8[%c0_44, %c0_45] : memref<3x128xf32, #tpu.memory_space<vmem>>, vector<3x128xf32>
    %cst_46 = arith.constant dense<0xFF800000> : vector<128xf32>
    %125 = vector.multi_reduction <maximumf>, %124, %cst_46 [0] : vector<3x128xf32> to vector<128xf32>
    %126 = vector.shape_cast %125 : vector<128xf32> to vector<1x128xf32>
    %127 = vector.broadcast %126 : vector<1x128xf32> to vector<3x128xf32>
    %128 = arith.subf %124, %127 : vector<3x128xf32>
    %129 = math.exp %128 : vector<3x128xf32>
    %cst_47 = arith.constant dense<0.000000e+00> : vector<128xf32>
    %130 = vector.multi_reduction <add>, %129, %cst_47 [0] : vector<3x128xf32> to vector<128xf32>
    %131 = vector.shape_cast %130 : vector<128xf32> to vector<1x128xf32>
    %132 = math.log %131 : vector<1x128xf32>
    %133 = arith.addf %132, %126 : vector<1x128xf32>
    %134 = vector.broadcast %133 : vector<1x128xf32> to vector<3x128xf32>
    %135 = arith.subf %124, %134 : vector<3x128xf32>
    %136 = tpu.iota {dimensions = array<i32: 0>} : vector<3x128xi32>
    %137 = vector.broadcast %2 : vector<1x128xi32> to vector<3x128xi32>
    %138 = arith.cmpi eq, %136, %137 : vector<3x128xi32>
    %139 = arith.extui %138 : vector<3x128xi1> to vector<3x128xi32>
    %140 = arith.sitofp %139 : vector<3x128xi32> to vector<3x128xf32>
    %141 = arith.mulf %135, %140 : vector<3x128xf32>
    %cst_48 = arith.constant dense<0.000000e+00> : vector<128xf32>
    %142 = vector.multi_reduction <add>, %141, %cst_48 [0] : vector<3x128xf32> to vector<128xf32>
    %143 = vector.shape_cast %142 : vector<128xf32> to vector<1x128xf32>
    %cst_49 = arith.constant 1.000000e+00 : f32
    %144 = vector.broadcast %cst_49 : f32 to vector<1x128xf32>
    %145 = vector.shape_cast %144 : vector<1x128xf32> to vector<1x1x128xf32>
    %cst_50 = arith.constant dense<0.000000e+00> : vector<1xf32>
    %146 = vector.multi_reduction <add>, %145, %cst_50 [1, 2] : vector<1x1x128xf32> to vector<1xf32>
    %147 = vector.shape_cast %146 : vector<1xf32> to vector<1x1x1xf32>
    %148 = vector.extract %147[0, 0, 0] : f32 from vector<1x1x1xf32>
    %cst_51 = arith.constant 1.000000e+00 : f32
    %149 = arith.maximumf %148, %cst_51 : f32
    %150 = arith.mulf %143, %144 : vector<1x128xf32>
    %151 = vector.shape_cast %150 : vector<1x128xf32> to vector<1x1x128xf32>
    %cst_52 = arith.constant dense<0.000000e+00> : vector<1xf32>
    %152 = vector.multi_reduction <add>, %151, %cst_52 [1, 2] : vector<1x1x128xf32> to vector<1xf32>
    %153 = vector.shape_cast %152 : vector<1xf32> to vector<1x1x1xf32>
    %154 = vector.extract %153[0, 0, 0] : f32 from vector<1x1x1xf32>
    %cst_53 = arith.constant 0.000000e+00 : f32
    %155 = arith.subf %cst_53, %154 : f32
    %156 = arith.divf %155, %149 : f32
    %157 = vector.broadcast %156 : f32 to vector<1x1xf32>
    %158 = arith.mulf %157, %0 : vector<1x1xf32>
    %c0_54 = arith.constant 0 : index
    %c0_55 = arith.constant 0 : index
    %159 = vector.load %arg12[%c0_54, %c0_55] : memref<1x1xf32, #tpu.memory_space<vmem>>, vector<1x1xf32>
    tpu.vector_store %arg12[%c0_54, %c0_55], %158 {strides = array<i32>} : memref<1x1xf32, #tpu.memory_space<vmem>>, vector<1x1xf32>,
    return
  }
  func.func @transform_0(%arg0: i32) -> (i32, i32) {
    %c0_i32 = arith.constant 0 : i32
    %c0_i32_0 = arith.constant 0 : i32
    %c0_i32_1 = arith.constant 0 : i32
    return %c0_i32, %c0_i32_0 : i32, i32
  }
  func.func @transform_1(%arg0: i32) -> (i32, i32) {
    %c0_i32 = arith.constant 0 : i32
    %c0_i32_0 = arith.constant 0 : i32
    %c0_i32_1 = arith.constant 0 : i32
    return %c0_i32, %c0_i32_0 : i32, i32
  }
  func.func @transform_2(%arg0: i32) -> (i32, i32) {
    %c0_i32 = arith.constant 0 : i32
    %c0_i32_0 = arith.constant 0 : i32
    %c0_i32_1 = arith.constant 0 : i32
    return %c0_i32, %c0_i32_0 : i32, i32
  }
  func.func @transform_3(%arg0: i32) -> (i32, i32) {
    %c0_i32 = arith.constant 0 : i32
    %c0_i32_0 = arith.constant 0 : i32
    %c0_i32_1 = arith.constant 0 : i32
    return %c0_i32, %c0_i32_0 : i32, i32
  }
  func.func @transform_4(%arg0: i32) -> (i32, i32) {
    %c0_i32 = arith.constant 0 : i32
    %c0_i32_0 = arith.constant 0 : i32
    %c0_i32_1 = arith.constant 0 : i32
    return %c0_i32, %c0_i32_0 : i32, i32
  }
  func.func @transform_5(%arg0: i32) -> (i32, i32) {
    %c0_i32 = arith.constant 0 : i32
    %c0_i32_0 = arith.constant 0 : i32
    %c0_i32_1 = arith.constant 0 : i32
    return %c0_i32, %c0_i32_0 : i32, i32
  }
  func.func @transform_6(%arg0: i32) -> (i32, i32) {
    %c0_i32 = arith.constant 0 : i32
    %c0_i32_0 = arith.constant 0 : i32
    %c0_i32_1 = arith.constant 0 : i32
    return %c0_i32, %c0_i32_0 : i32, i32
  }
  func.func @transform_7(%arg0: i32) -> (i32, i32) {
    %c0_i32 = arith.constant 0 : i32
    %c0_i32_0 = arith.constant 0 : i32
    %c0_i32_1 = arith.constant 0 : i32
    return %c0_i32, %c0_i32_0 : i32, i32
  }
  func.func @transform_8(%arg0: i32) -> (i32, i32) {
    %c0_i32 = arith.constant 0 : i32
    %c0_i32_0 = arith.constant 0 : i32
    %c0_i32_1 = arith.constant 0 : i32
    return %c0_i32, %c0_i32_0 : i32, i32
  }
  func.func @transform_9(%arg0: i32) -> (i32, i32) {
    %c0_i32 = arith.constant 0 : i32
    %c0_i32_0 = arith.constant 0 : i32
    %c0_i32_1 = arith.constant 0 : i32
    return %c0_i32, %c0_i32_0 : i32, i32
  }
  func.func @transform_10(%arg0: i32) -> (i32, i32) {
    %c0_i32 = arith.constant 0 : i32
    %c0_i32_0 = arith.constant 0 : i32
    %c0_i32_1 = arith.constant 0 : i32
    return %c0_i32, %c0_i32_0 : i32, i32
  }
  func.func @transform_11(%arg0: i32) -> (i32, i32) {
    %c0_i32 = arith.constant 0 : i32
    %c0_i32_0 = arith.constant 0 : i32
    %c0_i32_1 = arith.constant 0 : i32
    return %c0_i32, %c0_i32_0 : i32, i32
  }
}

</mosaic_0001>

<llo_original>
// kernel: _lambda_.6
$region0: #{_lambda_.6}
  #allocation0 [shape = 'u32[]', space=smem, size = 0x4, offset = 0x4, fixed_abs, tag = 'smem constant byte address 0x4 - core index']
  #allocation1 [shape = 'u32[144,128]{1,0:T(1,128)}', space=vmem, size = 0x12000, scoped, tag = 'internal scratch']
  #allocation2 [shape = 'f32[256,128]{1,0:T(8,128)}', space=vmem, size = 0x20000, scoped, tag = 'scratch operand']
  %s0 = inlined_call_operand.vmem [shape: bf16[256,128], index: 0, kind: input, shape index: {}]
  %s1 = inlined_call_operand.vmem [shape: bf16[128,128], index: 1, kind: input, shape index: {}]
  %s2 = inlined_call_operand.vmem [shape: f32[1,128], index: 2, kind: input, shape index: {}]
  %s3 = inlined_call_operand.vmem [shape: f32[256,128], index: 3, kind: output, shape index: {}]
  %s4 = sld [smem:[#allocation0]]
  $region30: #{_lambda_.6} parent=0
    _
  %s6 = ssub.s32 1, %s4
  %s7 = scalar_select 0, %s6, %s4
  // Predicated region
  $region2: #{_lambda_.6} parent=0 // pred_check
    _
  $region3: #{_lambda_.6} parent=0 // pred_check_branch
    %9 = sbr.rel (0) target = $region5
  $region4: #{_lambda_.6} parent=0 // pred_region
    _
  $region5: #{_lambda_.6} parent=0 // pred_fallthru
    _
  // Predicated region
  $region6: #{_lambda_.6} parent=0 // pred_check
    _
  $region7: #{_lambda_.6} parent=0 // pred_check_branch
    %11 = sbr.rel (0) target = $region9
  $region8: #{_lambda_.6} parent=0 // pred_region
    _
  $region9: #{_lambda_.6} parent=0 // pred_fallthru
    _
  // Predicated region
  $region10: #{_lambda_.6} parent=0 // pred_check
    _
  $region11: #{_lambda_.6} parent=0 // pred_check_branch
    %13 = sbr.rel (0) target = $region13
  $region12: #{_lambda_.6} parent=0 // pred_region
    _
  $region13: #{_lambda_.6} parent=0 // pred_fallthru
    _
  %p15 = scmp.eq.s32.totalorder 0, 0
  // Predicated region
  $region14: #{_lambda_.6} parent=0 // pred_check
    %p16 = pneg %p15
  $region15: #{_lambda_.6} parent=0 // pred_check_branch
    %18 = sbr.rel (%p16) target = $region17
  $region16: #{_lambda_.6} parent=0 // pred_region
    %19 = vst [vmem:[#allocation2] sm:$0xff] 0.0
    %20 = vst [vmem:[#allocation2 + $0x8] sm:$0xff] 0.0
    %21 = vst [vmem:[#allocation2 + $0x10] sm:$0xff] 0.0
    %22 = vst [vmem:[#allocation2 + $0x18] sm:$0xff] 0.0
    %23 = vst [vmem:[#allocation2 + $0x20] sm:$0xff] 0.0
    %24 = vst [vmem:[#allocation2 + $0x28] sm:$0xff] 0.0
    %25 = vst [vmem:[#allocation2 + $0x30] sm:$0xff] 0.0
    %26 = vst [vmem:[#allocation2 + $0x38] sm:$0xff] 0.0
    %27 = vst [vmem:[#allocation2 + $0x40] sm:$0xff] 0.0
    %28 = vst [vmem:[#allocation2 + $0x48] sm:$0xff] 0.0
    %29 = vst [vmem:[#allocation2 + $0x50] sm:$0xff] 0.0
    %30 = vst [vmem:[#allocation2 + $0x58] sm:$0xff] 0.0
    %31 = vst [vmem:[#allocation2 + $0x60] sm:$0xff] 0.0
    %32 = vst [vmem:[#allocation2 + $0x68] sm:$0xff] 0.0
    %33 = vst [vmem:[#allocation2 + $0x70] sm:$0xff] 0.0
    %34 = vst [vmem:[#allocation2 + $0x78] sm:$0xff] 0.0
    %35 = vst [vmem:[#allocation2 + $0x80] sm:$0xff] 0.0
    %36 = vst [vmem:[#allocation2 + $0x88] sm:$0xff] 0.0
    %37 = vst [vmem:[#allocation2 + $0x90] sm:$0xff] 0.0
    %38 = vst [vmem:[#allocation2 + $0x98] sm:$0xff] 0.0
    %39 = vst [vmem:[#allocation2 + $0xa0] sm:$0xff] 0.0
    %40 = vst [vmem:[#allocation2 + $0xa8] sm:$0xff] 0.0
    %41 = vst [vmem:[#allocation2 + $0xb0] sm:$0xff] 0.0
    %42 = vst [vmem:[#allocation2 + $0xb8] sm:$0xff] 0.0
    %43 = vst [vmem:[#allocation2 + $0xc0] sm:$0xff] 0.0
    %44 = vst [vmem:[#allocation2 + $0xc8] sm:$0xff] 0.0
    %45 = vst [vmem:[#allocation2 + $0xd0] sm:$0xff] 0.0
    %46 = vst [vmem:[#allocation2 + $0xd8] sm:$0xff] 0.0
    %47 = vst [vmem:[#allocation2 + $0xe0] sm:$0xff] 0.0
    %48 = vst [vmem:[#allocation2 + $0xe8] sm:$0xff] 0.0
    %49 = vst [vmem:[#allocation2 + $0xf0] sm:$0xff] 0.0
    %50 = vst [vmem:[#allocation2 + $0xf8] sm:$0xff] 0.0
  $region17: #{_lambda_.6} parent=0 // pred_fallthru
    _
  %v51 = vld [vmem:[#allocation2] sm:$0xff]
  %v52 = vld [vmem:[#allocation2 + $0x8] sm:$0xff]
  %v53 = vld [vmem:[#allocation2 + $0x10] sm:$0xff]
  %v54 = vld [vmem:[#allocation2 + $0x18] sm:$0xff]
  %v55 = vld [vmem:[#allocation2 + $0x20] sm:$0xff]
  %v56 = vld [vmem:[#allocation2 + $0x28] sm:$0xff]
  %v57 = vld [vmem:[#allocation2 + $0x30] sm:$0xff]
  %v58 = vld [vmem:[#allocation2 + $0x38] sm:$0xff]
  %v59 = vld [vmem:[#allocation2 + $0x40] sm:$0xff]
  %v60 = vld [vmem:[#allocation2 + $0x48] sm:$0xff]
  %v61 = vld [vmem:[#allocation2 + $0x50] sm:$0xff]
  %v62 = vld [vmem:[#allocation2 + $0x58] sm:$0xff]
  %v63 = vld [vmem:[#allocation2 + $0x60] sm:$0xff]
  %v64 = vld [vmem:[#allocation2 + $0x68] sm:$0xff]
  %v65 = vld [vmem:[#allocation2 + $0x70] sm:$0xff]
  %v66 = vld [vmem:[#allocation2 + $0x78] sm:$0xff]
  %v67 = vld [vmem:[#allocation2 + $0x80] sm:$0xff]
  %v68 = vld [vmem:[#allocation2 + $0x88] sm:$0xff]
  %v69 = vld [vmem:[#allocation2 + $0x90] sm:$0xff]
  %v70 = vld [vmem:[#allocation2 + $0x98] sm:$0xff]
  %v71 = vld [vmem:[#allocation2 + $0xa0] sm:$0xff]
  %v72 = vld [vmem:[#allocation2 + $0xa8] sm:$0xff]
  %v73 = vld [vmem:[#allocation2 + $0xb0] sm:$0xff]
  %v74 = vld [vmem:[#allocation2 + $0xb8] sm:$0xff]
  %v75 = vld [vmem:[#allocation2 + $0xc0] sm:$0xff]
  %v76 = vld [vmem:[#allocation2 + $0xc8] sm:$0xff]
  %v77 = vld [vmem:[#allocation2 + $0xd0] sm:$0xff]
  %v78 = vld [vmem:[#allocation2 + $0xd8] sm:$0xff]
  %v79 = vld [vmem:[#allocation2 + $0xe0] sm:$0xff]
  %v80 = vld [vmem:[#allocation2 + $0xe8] sm:$0xff]
  %v81 = vld [vmem:[#allocation2 + $0xf0] sm:$0xff]
  %v82 = vld [vmem:[#allocation2 + $0xf8] sm:$0xff]
  %v83 = vld [vmem:[%s0] sm:$0xf]
  %v84 = vld [vmem:[%s0 + $0x4] sm:$0xf]
  %v85 = vld [vmem:[%s0 + $0x8] sm:$0xf]
  %v86 = vld [vmem:[%s0 + $0xc] sm:$0xf]
  %v87 = vld [vmem:[%s0 + $0x10] sm:$0xf]
  %v88 = vld [vmem:[%s0 + $0x14] sm:$0xf]
  %v89 = vld [vmem:[%s0 + $0x18] sm:$0xf]
  %v90 = vld [vmem:[%s0 + $0x1c] sm:$0xf]
  %v91 = vld [vmem:[%s0 + $0x20] sm:$0xf]
  %v92 = vld [vmem:[%s0 + $0x24] sm:$0xf]
  %v93 = vld [vmem:[%s0 + $0x28] sm:$0xf]
  %v94 = vld [vmem:[%s0 + $0x2c] sm:$0xf]
  %v95 = vld [vmem:[%s0 + $0x30] sm:$0xf]
  %v96 = vld [vmem:[%s0 + $0x34] sm:$0xf]
  %v97 = vld [vmem:[%s0 + $0x38] sm:$0xf]
  %v98 = vld [vmem:[%s0 + $0x3c] sm:$0xf]
  %v99 = vld [vmem:[%s0 + $0x40] sm:$0xf]
  %v100 = vld [vmem:[%s0 + $0x44] sm:$0xf]
  %v101 = vld [vmem:[%s0 + $0x48] sm:$0xf]
  %v102 = vld [vmem:[%s0 + $0x4c] sm:$0xf]
  %v103 = vld [vmem:[%s0 + $0x50] sm:$0xf]
  %v104 = vld [vmem:[%s0 + $0x54] sm:$0xf]
  %v105 = vld [vmem:[%s0 + $0x58] sm:$0xf]
  %v106 = vld [vmem:[%s0 + $0x5c] sm:$0xf]
  %v107 = vld [vmem:[%s0 + $0x60] sm:$0xf]
  %v108 = vld [vmem:[%s0 + $0x64] sm:$0xf]
  %v109 = vld [vmem:[%s0 + $0x68] sm:$0xf]
  %v110 = vld [vmem:[%s0 + $0x6c] sm:$0xf]
  %v111 = vld [vmem:[%s0 + $0x70] sm:$0xf]
  %v112 = vld [vmem:[%s0 + $0x74] sm:$0xf]
  %v113 = vld [vmem:[%s0 + $0x78] sm:$0xf]
  %v114 = vld [vmem:[%s0 + $0x7c] sm:$0xf]
  %v115 = vld [vmem:[%s1] sm:$0xf]
  %v116 = vld [vmem:[%s1 + $0x4] sm:$0xf]
  %v117 = vld [vmem:[%s1 + $0x8] sm:$0xf]
  %v118 = vld [vmem:[%s1 + $0xc] sm:$0xf]
  %v119 = vld [vmem:[%s1 + $0x10] sm:$0xf]
  %v120 = vld [vmem:[%s1 + $0x14] sm:$0xf]
  %v121 = vld [vmem:[%s1 + $0x18] sm:$0xf]
  %v122 = vld [vmem:[%s1 + $0x1c] sm:$0xf]
  %v123 = vld [vmem:[%s1 + $0x20] sm:$0xf]
  %v124 = vld [vmem:[%s1 + $0x24] sm:$0xf]
  %v125 = vld [vmem:[%s1 + $0x28] sm:$0xf]
  %v126 = vld [vmem:[%s1 + $0x2c] sm:$0xf]
  %v127 = vld [vmem:[%s1 + $0x30] sm:$0xf]
  %v128 = vld [vmem:[%s1 + $0x34] sm:$0xf]
  %v129 = vld [vmem:[%s1 + $0x38] sm:$0xf]
  %v130 = vld [vmem:[%s1 + $0x3c] sm:$0xf]
  %v163 = vunpack.c.l.b16 %v83
  %v164 = vunpack.c.l.b16 %v84
  %v165 = vunpack.c.l.b16 %v85
  %v166 = vunpack.c.l.b16 %v86
  %v167 = vunpack.c.l.b16 %v87
  %v168 = vunpack.c.l.b16 %v88
  %v169 = vunpack.c.l.b16 %v89
  %v170 = vunpack.c.l.b16 %v90
  %v171 = vunpack.c.l.b16 %v91
  %v172 = vunpack.c.l.b16 %v92
  %v173 = vunpack.c.l.b16 %v93
  %v174 = vunpack.c.l.b16 %v94
  %v175 = vunpack.c.l.b16 %v95
  %v176 = vunpack.c.l.b16 %v96
  %v177 = vunpack.c.l.b16 %v97
  %v178 = vunpack.c.l.b16 %v98
  %v179 = vunpack.c.l.b16 %v99
  %v180 = vunpack.c.l.b16 %v100
  %v181 = vunpack.c.l.b16 %v101
  %v182 = vunpack.c.l.b16 %v102
  %v183 = vunpack.c.l.b16 %v103
  %v184 = vunpack.c.l.b16 %v104
  %v185 = vunpack.c.l.b16 %v105
  %v186 = vunpack.c.l.b16 %v106
  %v187 = vunpack.c.l.b16 %v107
  %v188 = vunpack.c.l.b16 %v108
  %v189 = vunpack.c.l.b16 %v109
  %v190 = vunpack.c.l.b16 %v110
  %v191 = vunpack.c.l.b16 %v111
  %v192 = vunpack.c.l.b16 %v112
  %v193 = vunpack.c.l.b16 %v113
  %v194 = vunpack.c.l.b16 %v114
  %v195 = vpack.c.b16 %v164, %v163
  %v196 = vpack.c.b16 %v166, %v165
  %v197 = vpack.c.b16 %v168, %v167
  %v198 = vpack.c.b16 %v170, %v169
  %v199 = vpack.c.b16 %v172, %v171
  %v200 = vpack.c.b16 %v174, %v173
  %v201 = vpack.c.b16 %v176, %v175
  %v202 = vpack.c.b16 %v178, %v177
  %v203 = vpack.c.b16 %v180, %v179
  %v204 = vpack.c.b16 %v182, %v181
  %v205 = vpack.c.b16 %v184, %v183
  %v206 = vpack.c.b16 %v186, %v185
  %v207 = vpack.c.b16 %v188, %v187
  %v208 = vpack.c.b16 %v190, %v189
  %v209 = vpack.c.b16 %v192, %v191
  %v210 = vpack.c.b16 %v194, %v193
  %v243 = vunpack.c.l.b16 %v115
  %v244 = vunpack.c.l.b16 %v116
  %v245 = vunpack.c.l.b16 %v117
  %v246 = vunpack.c.l.b16 %v118
  %v247 = vunpack.c.l.b16 %v119
  %v248 = vunpack.c.l.b16 %v120
  %v249 = vunpack.c.l.b16 %v121
  %v250 = vunpack.c.l.b16 %v122
  %v251 = vunpack.c.l.b16 %v123
  %v252 = vunpack.c.l.b16 %v124
  %v253 = vunpack.c.l.b16 %v125
  %v254 = vunpack.c.l.b16 %v126
  %v255 = vunpack.c.l.b16 %v127
  %v256 = vunpack.c.l.b16 %v128
  %v257 = vunpack.c.l.b16 %v129
  %v258 = vunpack.c.l.b16 %v130
  %v259 = vpack.c.b16 %v244, %v243
  %v260 = vpack.c.b16 %v246, %v245
  %v261 = vpack.c.b16 %v248, %v247
  %v262 = vpack.c.b16 %v250, %v249
  %v263 = vpack.c.b16 %v252, %v251
  %v264 = vpack.c.b16 %v254, %v253
  %v265 = vpack.c.b16 %v256, %v255
  %v266 = vpack.c.b16 %v258, %v257
  %275 = vmatprep.subr.bf16.mxu0 0
  %276 = vmatpush1.bf16.msra.mxu0 %v266
  %277 = vmatprep.subr.bf16.mxu0 0
  %278 = vmatpush1.bf16.msra.mxu0 %v265
  %279 = vmatprep.subr.bf16.mxu0 0
  %280 = vmatpush1.bf16.msra.mxu0 %v264
  %281 = vmatprep.subr.bf16.mxu0 0
  %282 = vmatpush1.bf16.msra.mxu0 %v263
  %283 = vmatprep.subr.bf16.mxu0 0
  %284 = vmatpush1.bf16.msra.mxu0 %v262
  %285 = vmatprep.subr.bf16.mxu0 0
  %286 = vmatpush1.bf16.msra.mxu0 %v261
  %287 = vmatprep.subr.bf16.mxu0 0
  %288 = vmatpush1.bf16.msra.mxu0 %v260
  %289 = vmatprep.subr.bf16.mxu0 0
  %290 = vmatpush1.bf16.msra.mxu0 %v259
  %291 = vmatprep.subr.bf16.mxu0 0
  %292 = vmatpush2.bf16.msra.mxu0 0
  %293 = vmatprep.subr.bf16.mxu0 0
  %294 = vmatpush2.bf16.msra.mxu0 0
  %295 = vmatprep.subr.bf16.mxu0 0
  %296 = vmatpush2.bf16.msra.mxu0 0
  %297 = vmatprep.subr.bf16.mxu0 0
  %298 = vmatpush2.bf16.msra.mxu0 0
  %299 = vmatprep.subr.bf16.mxu0 0
  %300 = vmatpush2.bf16.msra.mxu0 0
  %301 = vmatprep.subr.bf16.mxu0 0
  %302 = vmatpush2.bf16.msra.mxu0 0
  %303 = vmatprep.subr.bf16.mxu0 0
  %304 = vmatpush2.bf16.msra.mxu0 0
  %305 = vmatprep.subr.bf16.mxu0 0
  %306 = vmatpush2.bf16.msra.mxu0 0
  %307 = vmatprep.mubr.bf16.mxu0 0
  %308 = vmatmul.mubr.bf16.gmra.mxu0 %v195
  %v309 = vpop.f32.mrf.mxu0
  %v310 = vadd.f32 0.0, %v309
  %v311 = vpop.f32.mrf.mxu0
  %v312 = vpop.f32.mrf.mxu0
  %v313 = vadd.f32 0.0, %v312
  %v314 = vpop.f32.mrf.mxu0
  %315 = vmatprep.mubr.bf16.mxu0 0
  %316 = vmatmul.mubr.bf16.gmra.mxu0 %v196
  %v317 = vpop.f32.mrf.mxu0
  %v318 = vadd.f32 0.0, %v317
  %v319 = vpop.f32.mrf.mxu0
  %v320 = vpop.f32.mrf.mxu0
  %v321 = vadd.f32 0.0, %v320
  %v322 = vpop.f32.mrf.mxu0
  %323 = vmatprep.mubr.bf16.mxu0 0
  %324 = vmatmul.mubr.bf16.gmra.mxu0 %v197
  %v325 = vpop.f32.mrf.mxu0
  %v326 = vadd.f32 0.0, %v325
  %v327 = vpop.f32.mrf.mxu0
  %v328 = vpop.f32.mrf.mxu0
  %v329 = vadd.f32 0.0, %v328
  %v330 = vpop.f32.mrf.mxu0
  %331 = vmatprep.mubr.bf16.mxu0 0
  %332 = vmatmul.mubr.bf16.gmra.mxu0 %v198
  %v333 = vpop.f32.mrf.mxu0
  %v334 = vadd.f32 0.0, %v333
  %v335 = vpop.f32.mrf.mxu0
  %v336 = vpop.f32.mrf.mxu0
  %v337 = vadd.f32 0.0, %v336
  %v338 = vpop.f32.mrf.mxu0
  %339 = vmatprep.mubr.bf16.mxu0 0
  %340 = vmatmul.mubr.bf16.gmra.mxu0 %v199
  %v341 = vpop.f32.mrf.mxu0
  %v342 = vadd.f32 0.0, %v341
  %v343 = vpop.f32.mrf.mxu0
  %v344 = vpop.f32.mrf.mxu0
  %v345 = vadd.f32 0.0, %v344
  %v346 = vpop.f32.mrf.mxu0
  %347 = vmatprep.mubr.bf16.mxu0 0
  %348 = vmatmul.mubr.bf16.gmra.mxu0 %v200
  %v349 = vpop.f32.mrf.mxu0
  %v350 = vadd.f32 0.0, %v349
  %v351 = vpop.f32.mrf.mxu0
  %v352 = vpop.f32.mrf.mxu0
  %v353 = vadd.f32 0.0, %v352
  %v354 = vpop.f32.mrf.mxu0
  %355 = vmatprep.mubr.bf16.mxu0 0
  %356 = vmatmul.mubr.bf16.gmra.mxu0 %v201
  %v357 = vpop.f32.mrf.mxu0
  %v358 = vadd.f32 0.0, %v357
  %v359 = vpop.f32.mrf.mxu0
  %v360 = vpop.f32.mrf.mxu0
  %v361 = vadd.f32 0.0, %v360
  %v362 = vpop.f32.mrf.mxu0
  %363 = vmatprep.mubr.bf16.mxu0 0
  %364 = vmatmul.mubr.bf16.gmra.mxu0 %v202
  %v365 = vpop.f32.mrf.mxu0
  %v366 = vadd.f32 0.0, %v365
  %v367 = vpop.f32.mrf.mxu0
  %v368 = vpop.f32.mrf.mxu0
  %v369 = vadd.f32 0.0, %v368
  %v370 = vpop.f32.mrf.mxu0
  %371 = vmatprep.mubr.bf16.mxu0 0
  %372 = vmatmul.mubr.bf16.gmra.mxu0 %v203
  %v373 = vpop.f32.mrf.mxu0
  %v374 = vadd.f32 0.0, %v373
  %v375 = vpop.f32.mrf.mxu0
  %v376 = vpop.f32.mrf.mxu0
  %v377 = vadd.f32 0.0, %v376
  %v378 = vpop.f32.mrf.mxu0
  %379 = vmatprep.mubr.bf16.mxu0 0
  %380 = vmatmul.mubr.bf16.gmra.mxu0 %v204
  %v381 = vpop.f32.mrf.mxu0
  %v382 = vadd.f32 0.0, %v381
  %v383 = vpop.f32.mrf.mxu0
  %v384 = vpop.f32.mrf.mxu0
  %v385 = vadd.f32 0.0, %v384
  %v386 = vpop.f32.mrf.mxu0
  %387 = vmatprep.mubr.bf16.mxu0 0
  %388 = vmatmul.mubr.bf16.gmra.mxu0 %v205
  %v389 = vpop.f32.mrf.mxu0
  %v390 = vadd.f32 0.0, %v389
  %v391 = vpop.f32.mrf.mxu0
  %v392 = vpop.f32.mrf.mxu0
  %v393 = vadd.f32 0.0, %v392
  %v394 = vpop.f32.mrf.mxu0
  %395 = vmatprep.mubr.bf16.mxu0 0
  %396 = vmatmul.mubr.bf16.gmra.mxu0 %v206
  %v397 = vpop.f32.mrf.mxu0
  %v398 = vadd.f32 0.0, %v397
  %v399 = vpop.f32.mrf.mxu0
  %v400 = vpop.f32.mrf.mxu0
  %v401 = vadd.f32 0.0, %v400
  %v402 = vpop.f32.mrf.mxu0
  %403 = vmatprep.mubr.bf16.mxu0 0
  %404 = vmatmul.mubr.bf16.gmra.mxu0 %v207
  %v405 = vpop.f32.mrf.mxu0
  %v406 = vadd.f32 0.0, %v405
  %v407 = vpop.f32.mrf.mxu0
  %v408 = vpop.f32.mrf.mxu0
  %v409 = vadd.f32 0.0, %v408
  %v410 = vpop.f32.mrf.mxu0
  %411 = vmatprep.mubr.bf16.mxu0 0
  %412 = vmatmul.mubr.bf16.gmra.mxu0 %v208
  %v413 = vpop.f32.mrf.mxu0
  %v414 = vadd.f32 0.0, %v413
  %v415 = vpop.f32.mrf.mxu0
  %v416 = vpop.f32.mrf.mxu0
  %v417 = vadd.f32 0.0, %v416
  %v418 = vpop.f32.mrf.mxu0
  %419 = vmatprep.mubr.bf16.mxu0 0
  %420 = vmatmul.mubr.bf16.gmra.mxu0 %v209
  %v421 = vpop.f32.mrf.mxu0
  %v422 = vadd.f32 0.0, %v421
  %v423 = vpop.f32.mrf.mxu0
  %v424 = vpop.f32.mrf.mxu0
  %v425 = vadd.f32 0.0, %v424
  %v426 = vpop.f32.mrf.mxu0
  %427 = vmatprep.mubr.bf16.mxu0 0
  %428 = vmatmul.mubr.bf16.gmra.mxu0 %v210
  %v429 = vpop.f32.mrf.mxu0
  %v430 = vadd.f32 0.0, %v429
  %v431 = vpop.f32.mrf.mxu0
  %v432 = vpop.f32.mrf.mxu0
  %v433 = vadd.f32 0.0, %v432
  %v434 = vpop.f32.mrf.mxu0
  %435 = vdwg.mxu0
  %v436 = vadd.f32 %v51, %v310
  %v437 = vadd.f32 %v52, %v313
  %v438 = vadd.f32 %v53, %v318
  %v439 = vadd.f32 %v54, %v321
  %v440 = vadd.f32 %v55, %v326
  %v441 = vadd.f32 %v56, %v329
  %v442 = vadd.f32 %v57, %v334
  %v443 = vadd.f32 %v58, %v337
  %v444 = vadd.f32 %v59, %v342
  %v445 = vadd.f32 %v60, %v345
  %v446 = vadd.f32 %v61, %v350
  %v447 = vadd.f32 %v62, %v353
  %v448 = vadd.f32 %v63, %v358
  %v449 = vadd.f32 %v64, %v361
  %v450 = vadd.f32 %v65, %v366
  %v451 = vadd.f32 %v66, %v369
  %v452 = vadd.f32 %v67, %v374
  %v453 = vadd.f32 %v68, %v377
  %v454 = vadd.f32 %v69, %v382
  %v455 = vadd.f32 %v70, %v385
  %v456 = vadd.f32 %v71, %v390
  %v457 = vadd.f32 %v72, %v393
  %v458 = vadd.f32 %v73, %v398
  %v459 = vadd.f32 %v74, %v401
  %v460 = vadd.f32 %v75, %v406
  %v461 = vadd.f32 %v76, %v409
  %v462 = vadd.f32 %v77, %v414
  %v463 = vadd.f32 %v78, %v417
  %v464 = vadd.f32 %v79, %v422
  %v465 = vadd.f32 %v80, %v425
  %v466 = vadd.f32 %v81, %v430
  %v467 = vadd.f32 %v82, %v433
  %468 = vst [vmem:[#allocation2] sm:$0xff] %v436
  %469 = vst [vmem:[#allocation2 + $0x8] sm:$0xff] %v437
  %470 = vst [vmem:[#allocation2 + $0x10] sm:$0xff] %v438
  %471 = vst [vmem:[#allocation2 + $0x18] sm:$0xff] %v439
  %472 = vst [vmem:[#allocation2 + $0x20] sm:$0xff] %v440
  %473 = vst [vmem:[#allocation2 + $0x28] sm:$0xff] %v441
  %474 = vst [vmem:[#allocation2 + $0x30] sm:$0xff] %v442
  %475 = vst [vmem:[#allocation2 + $0x38] sm:$0xff] %v443
  %476 = vst [vmem:[#allocation2 + $0x40] sm:$0xff] %v444
  %477 = vst [vmem:[#allocation2 + $0x48] sm:$0xff] %v445
  %478 = vst [vmem:[#allocation2 + $0x50] sm:$0xff] %v446
  %479 = vst [vmem:[#allocation2 + $0x58] sm:$0xff] %v447
  %480 = vst [vmem:[#allocation2 + $0x60] sm:$0xff] %v448
  %481 = vst [vmem:[#allocation2 + $0x68] sm:$0xff] %v449
  %482 = vst [vmem:[#allocation2 + $0x70] sm:$0xff] %v450
  %483 = vst [vmem:[#allocation2 + $0x78] sm:$0xff] %v451
  %484 = vst [vmem:[#allocation2 + $0x80] sm:$0xff] %v452
  %485 = vst [vmem:[#allocation2 + $0x88] sm:$0xff] %v453
  %486 = vst [vmem:[#allocation2 + $0x90] sm:$0xff] %v454
  %487 = vst [vmem:[#allocation2 + $0x98] sm:$0xff] %v455
  %488 = vst [vmem:[#allocation2 + $0xa0] sm:$0xff] %v456
  %489 = vst [vmem:[#allocation2 + $0xa8] sm:$0xff] %v457
  %490 = vst [vmem:[#allocation2 + $0xb0] sm:$0xff] %v458
  %491 = vst [vmem:[#allocation2 + $0xb8] sm:$0xff] %v459
  %492 = vst [vmem:[#allocation2 + $0xc0] sm:$0xff] %v460
  %493 = vst [vmem:[#allocation2 + $0xc8] sm:$0xff] %v461
  %494 = vst [vmem:[#allocation2 + $0xd0] sm:$0xff] %v462
  %495 = vst [vmem:[#allocation2 + $0xd8] sm:$0xff] %v463
  %496 = vst [vmem:[#allocation2 + $0xe0] sm:$0xff] %v464
  %497 = vst [vmem:[#allocation2 + $0xe8] sm:$0xff] %v465
  %498 = vst [vmem:[#allocation2 + $0xf0] sm:$0xff] %v466
  %499 = vst [vmem:[#allocation2 + $0xf8] sm:$0xff] %v467
  // Predicated region
  $region18: #{_lambda_.6} parent=0 // pred_check
    %p500 = pneg %p15
  $region19: #{_lambda_.6} parent=0 // pred_check_branch
    %502 = sbr.rel (%p500) target = $region21
  $region20: #{_lambda_.6} parent=0 // pred_region
    %v503 = vld [vmem:[#allocation2] sm:$0xff]
    %v504 = vld [vmem:[#allocation2 + $0x8] sm:$0xff]
    %v505 = vld [vmem:[#allocation2 + $0x10] sm:$0xff]
    %v506 = vld [vmem:[#allocation2 + $0x18] sm:$0xff]
    %v507 = vld [vmem:[#allocation2 + $0x20] sm:$0xff]
    %v508 = vld [vmem:[#allocation2 + $0x28] sm:$0xff]
    %v509 = vld [vmem:[#allocation2 + $0x30] sm:$0xff]
    %v510 = vld [vmem:[#allocation2 + $0x38] sm:$0xff]
    %v511 = vld [vmem:[#allocation2 + $0x40] sm:$0xff]
    %v512 = vld [vmem:[#allocation2 + $0x48] sm:$0xff]
    %v513 = vld [vmem:[#allocation2 + $0x50] sm:$0xff]
    %v514 = vld [vmem:[#allocation2 + $0x58] sm:$0xff]
    %v515 = vld [vmem:[#allocation2 + $0x60] sm:$0xff]
    %v516 = vld [vmem:[#allocation2 + $0x68] sm:$0xff]
    %v517 = vld [vmem:[#allocation2 + $0x70] sm:$0xff]
    %v518 = vld [vmem:[#allocation2 + $0x78] sm:$0xff]
    %v519 = vld [vmem:[#allocation2 + $0x80] sm:$0xff]
    %v520 = vld [vmem:[#allocation2 + $0x88] sm:$0xff]
    %v521 = vld [vmem:[#allocation2 + $0x90] sm:$0xff]
    %v522 = vld [vmem:[#allocation2 + $0x98] sm:$0xff]
    %v523 = vld [vmem:[#allocation2 + $0xa0] sm:$0xff]
    %v524 = vld [vmem:[#allocation2 + $0xa8] sm:$0xff]
    %v525 = vld [vmem:[#allocation2 + $0xb0] sm:$0xff]
    %v526 = vld [vmem:[#allocation2 + $0xb8] sm:$0xff]
    %v527 = vld [vmem:[#allocation2 + $0xc0] sm:$0xff]
    %v528 = vld [vmem:[#allocation2 + $0xc8] sm:$0xff]
    %v529 = vld [vmem:[#allocation2 + $0xd0] sm:$0xff]
    %v530 = vld [vmem:[#allocation2 + $0xd8] sm:$0xff]
    %v531 = vld [vmem:[#allocation2 + $0xe0] sm:$0xff]
    %v532 = vld [vmem:[#allocation2 + $0xe8] sm:$0xff]
    %v533 = vld [vmem:[#allocation2 + $0xf0] sm:$0xff]
    %v534 = vld [vmem:[#allocation2 + $0xf8] sm:$0xff]
    %v535 = vld [vmem:[%s2] sm:$0x1]
    %v537 = vlaneseq
    %v538 = vshrl.u32 %v537, 7
    %v539 = vsub.s32 0, %v538
    %v540 = vrot.slane %v535, %v539
    %v542 = vadd.f32 %v503, %v540
    %v543 = vadd.f32 %v504, %v540
    %v544 = vadd.f32 %v505, %v540
    %v545 = vadd.f32 %v506, %v540
    %v546 = vadd.f32 %v507, %v540
    %v547 = vadd.f32 %v508, %v540
    %v548 = vadd.f32 %v509, %v540
    %v549 = vadd.f32 %v510, %v540
    %v550 = vadd.f32 %v511, %v540
    %v551 = vadd.f32 %v512, %v540
    %v552 = vadd.f32 %v513, %v540
    %v553 = vadd.f32 %v514, %v540
    %v554 = vadd.f32 %v515, %v540
    %v555 = vadd.f32 %v516, %v540
    %v556 = vadd.f32 %v517, %v540
    %v557 = vadd.f32 %v518, %v540
    %v558 = vadd.f32 %v519, %v540
    %v559 = vadd.f32 %v520, %v540
    %v560 = vadd.f32 %v521, %v540
    %v561 = vadd.f32 %v522, %v540
    %v562 = vadd.f32 %v523, %v540
    %v563 = vadd.f32 %v524, %v540
    %v564 = vadd.f32 %v525, %v540
    %v565 = vadd.f32 %v526, %v540
    %v566 = vadd.f32 %v527, %v540
    %v567 = vadd.f32 %v528, %v540
    %v568 = vadd.f32 %v529, %v540
    %v569 = vadd.f32 %v530, %v540
    %v570 = vadd.f32 %v531, %v540
    %v571 = vadd.f32 %v532, %v540
    %v572 = vadd.f32 %v533, %v540
    %v573 = vadd.f32 %v534, %v540
    %v574 = vmax.f32 %v542, 0.0
    %v575 = vmax.f32 %v543, 0.0
    %v576 = vmax.f32 %v544, 0.0
    %v577 = vmax.f32 %v545, 0.0
    %v578 = vmax.f32 %v546, 0.0
    %v579 = vmax.f32 %v547, 0.0
    %v580 = vmax.f32 %v548, 0.0
    %v581 = vmax.f32 %v549, 0.0
    %v582 = vmax.f32 %v550, 0.0
    %v583 = vmax.f32 %v551, 0.0
    %v584 = vmax.f32 %v552, 0.0
    %v585 = vmax.f32 %v553, 0.0
    %v586 = vmax.f32 %v554, 0.0
    %v587 = vmax.f32 %v555, 0.0
    %v588 = vmax.f32 %v556, 0.0
    %v589 = vmax.f32 %v557, 0.0
    %v590 = vmax.f32 %v558, 0.0
    %v591 = vmax.f32 %v559, 0.0
    %v592 = vmax.f32 %v560, 0.0
    %v593 = vmax.f32 %v561, 0.0
    %v594 = vmax.f32 %v562, 0.0
    %v595 = vmax.f32 %v563, 0.0
    %v596 = vmax.f32 %v564, 0.0
    %v597 = vmax.f32 %v565, 0.0
    %v598 = vmax.f32 %v566, 0.0
    %v599 = vmax.f32 %v567, 0.0
    %v600 = vmax.f32 %v568, 0.0
    %v601 = vmax.f32 %v569, 0.0
    %v602 = vmax.f32 %v570, 0.0
    %v603 = vmax.f32 %v571, 0.0
    %v604 = vmax.f32 %v572, 0.0
    %v605 = vmax.f32 %v573, 0.0
    %606 = vst [vmem:[%s3] sm:$0xff] %v574
    %607 = vst [vmem:[%s3 + $0x8] sm:$0xff] %v575
    %608 = vst [vmem:[%s3 + $0x10] sm:$0xff] %v576
    %609 = vst [vmem:[%s3 + $0x18] sm:$0xff] %v577
    %610 = vst [vmem:[%s3 + $0x20] sm:$0xff] %v578
    %611 = vst [vmem:[%s3 + $0x28] sm:$0xff] %v579
    %612 = vst [vmem:[%s3 + $0x30] sm:$0xff] %v580
    %613 = vst [vmem:[%s3 + $0x38] sm:$0xff] %v581
    %614 = vst [vmem:[%s3 + $0x40] sm:$0xff] %v582
    %615 = vst [vmem:[%s3 + $0x48] sm:$0xff] %v583
    %616 = vst [vmem:[%s3 + $0x50] sm:$0xff] %v584
    %617 = vst [vmem:[%s3 + $0x58] sm:$0xff] %v585
    %618 = vst [vmem:[%s3 + $0x60] sm:$0xff] %v586
    %619 = vst [vmem:[%s3 + $0x68] sm:$0xff] %v587
    %620 = vst [vmem:[%s3 + $0x70] sm:$0xff] %v588
    %621 = vst [vmem:[%s3 + $0x78] sm:$0xff] %v589
    %622 = vst [vmem:[%s3 + $0x80] sm:$0xff] %v590
    %623 = vst [vmem:[%s3 + $0x88] sm:$0xff] %v591
    %624 = vst [vmem:[%s3 + $0x90] sm:$0xff] %v592
    %625 = vst [vmem:[%s3 + $0x98] sm:$0xff] %v593
    %626 = vst [vmem:[%s3 + $0xa0] sm:$0xff] %v594
    %627 = vst [vmem:[%s3 + $0xa8] sm:$0xff] %v595
    %628 = vst [vmem:[%s3 + $0xb0] sm:$0xff] %v596
    %629 = vst [vmem:[%s3 + $0xb8] sm:$0xff] %v597
    %630 = vst [vmem:[%s3 + $0xc0] sm:$0xff] %v598
    %631 = vst [vmem:[%s3 + $0xc8] sm:$0xff] %v599
    %632 = vst [vmem:[%s3 + $0xd0] sm:$0xff] %v600
    %633 = vst [vmem:[%s3 + $0xd8] sm:$0xff] %v601
    %634 = vst [vmem:[%s3 + $0xe0] sm:$0xff] %v602
    %635 = vst [vmem:[%s3 + $0xe8] sm:$0xff] %v603
    %636 = vst [vmem:[%s3 + $0xf0] sm:$0xff] %v604
    %637 = vst [vmem:[%s3 + $0xf8] sm:$0xff] %v605
  $region21: #{_lambda_.6} parent=0 // pred_fallthru
    _
  // Predicated region
  $region22: #{_lambda_.6} parent=0 // pred_check
    _
  $region23: #{_lambda_.6} parent=0 // pred_check_branch
    %639 = sbr.rel (0) target = $region25
  $region24: #{_lambda_.6} parent=0 // pred_region
    _
  $region25: #{_lambda_.6} parent=0 // pred_fallthru
    _
  // Predicated region
  $region26: #{_lambda_.6} parent=0 // pred_check
    _
  $region27: #{_lambda_.6} parent=0 // pred_check_branch
    %641 = sbr.rel (0) target = $region29
  $region28: #{_lambda_.6} parent=0 // pred_region
    _
  $region29: #{_lambda_.6} parent=0 // pred_fallthru
    _

// kernel: _lambda_.8
$region0: #{_lambda_.8}
  #allocation0 [shape = 'u32[]', space=smem, size = 0x4, offset = 0x4, fixed_abs, tag = 'smem constant byte address 0x4 - core index']
  #allocation1 [shape = 'u32[144,128]{1,0:T(1,128)}', space=vmem, size = 0x12000, scoped, tag = 'internal scratch']
  %s0 = inlined_call_operand.vmem [shape: f32[4,259], index: 0, kind: input, shape index: {}]
  %s1 = inlined_call_operand.vmem [shape: f32[1,259], index: 1, kind: input, shape index: {}]
  %s2 = inlined_call_operand.vmem [shape: f32[3,4], index: 2, kind: input, shape index: {}]
  %s3 = inlined_call_operand.vmem [shape: f32[1,259], index: 3, kind: output, shape index: {0}]
  %s4 = inlined_call_operand.vmem [shape: s32[1,259], index: 4, kind: output, shape index: {1}]
  %s5 = inlined_call_operand.hbm [shape: f32[1,259], index: 5, kind: output, shape index: {2}]
  %6 = xla_tuple %s3, %s4, %s5
  %s7 = sld [smem:[#allocation0]]
  $region42: #{_lambda_.8} parent=0
    _
  %s9 = ssub.s32 1, %s7
  %s10 = scalar_select 0, %s9, %s7
  $region1: #{_lambda_.8} parent=0
    #allocation2 [shape = 'u8[2048]{0}', space=smem, size = 0x800, scoped, tag = 'input window, operand 2, single buffered']
    #allocation3 [shape = 's32[1]{0}', space=sflag, size = 0x4, scoped, tag = 'scoped memory for _lambda_.8']
    #allocation4 [shape = 's32[1]{0}', space=sflag, size = 0x4, scoped, tag = 'scoped memory for _lambda_.8']
    #allocation5 [shape = 'u8[1536]{0}', space=vmem, size = 0x800, scoped, tag = 'output window, operand 2, single buffered']
    %11 = vsyncpa [#allocation4], 0
    %12 = vsyncpa [#allocation3], 0
    // Predicated region
    $region2: #{_lambda_.8} parent=1 // pred_check
      _
    $region3: #{_lambda_.8} parent=1 // pred_check_branch
      %14 = sbr.rel (0) target = $region5
    $region4: #{_lambda_.8} parent=1 // pred_region
      _
    $region5: #{_lambda_.8} parent=1 // pred_fallthru
      _
    // Predicated region
    $region6: #{_lambda_.8} parent=1 // pred_check
      _
    $region7: #{_lambda_.8} parent=1 // pred_check_branch
      %16 = sbr.rel (0) target = $region9
    $region8: #{_lambda_.8} parent=1 // pred_region
      _
    $region9: #{_lambda_.8} parent=1 // pred_fallthru
      _
    // Predicated region
    $region10: #{_lambda_.8} parent=1 // pred_check
      _
    $region11: #{_lambda_.8} parent=1 // pred_check_branch
      %18 = sbr.rel (0) target = $region13
    $region12: #{_lambda_.8} parent=1 // pred_region
      %s20 = ssub.s32 64, 64
      %21 = vsyncadd [#allocation4], %s20
      %s23 = sshll.u32 %s2, 4
      %s24 = int_to_ptr.vmem [resolvable:$true] %s23
      %26 = dma.vmem_to_smem %s24, 64, [#allocation2], [#allocation4]
    $region13: #{_lambda_.8} parent=1 // pred_fallthru
      _
    // Predicated region
    $region14: #{_lambda_.8} parent=1 // pred_check
      _
    $region15: #{_lambda_.8} parent=1 // pred_check_branch
      %28 = sbr.rel (0) target = $region17
    $region16: #{_lambda_.8} parent=1 // pred_region
      %29 = dma.done [#allocation4], 64
    $region17: #{_lambda_.8} parent=1 // pred_fallthru
      _
    %30 = sfence
    %v31 = vld [vmem:[%s0] ss:$4 sm:$0x7]
    %s32 = scalar_lea.vmem %s0, 1
    %v33 = vld [vmem:[%s32] ss:$4 sm:$0x7]
    %s34 = scalar_lea.vmem %s0, 2
    %v35 = vld [vmem:[%s34] ss:$4 sm:$0x7]
    %s36 = scalar_lea.vmem %s0, 3
    %v37 = vld [vmem:[%s36] ss:$4 sm:$0x7]
    %v38 = vsub.f32 %v35, %v31
    %v39 = vsub.f32 %v37, %v33
    %v40 = vmul.f32 %v38, %v39
    %v41 = vld [vmem:[%s1] sm:$0x7]
    %s42 = sld [smem:[#allocation2]]
    %s43 = sld [smem:[#allocation2 + $0x1]]
    %s44 = sld [smem:[#allocation2 + $0x2]]
    %s45 = sld [smem:[#allocation2 + $0x3]]
    %v46 = vstv %s42
    %v47 = vmax.f32 %v31, %v46
    %v48 = vstv %s43
    %v49 = vmax.f32 %v33, %v48
    %v50 = vstv %s44
    %v51 = vmin.f32 %v35, %v50
    %v52 = vstv %s45
    %v53 = vmin.f32 %v37, %v52
    %v54 = vsub.f32 %v51, %v47
    %v55 = vsub.f32 %v53, %v49
    %vm56 = vcmp.gt.f32.partialorder %v54, 0.0
    %vm57 = vcmp.gt.f32.partialorder %v55, 0.0
    %vm58 = vmand %vm56, %vm57
    %v59 = vmul.f32 %v54, %v55
    %v60 = vsel %vm58, %v59, 0.0
    %s61 = ssub.f32 %s44, %s42
    %s62 = ssub.f32 %s45, %s43
    %s63 = smul.f32 %s61, %s62
    %v64 = vstv %s63
    %v65 = vadd.f32 %v40, %v64
    %v66 = vsub.f32 %v65, %v60
    %v67 = vadd.f32 %v66, 1e-10
    %v68 = vrcp.pop %v67
    %v69 = vmul.f32 %v60, %v68
    %vm70 = vcmp.gt.f32.partialorder %v69, -1.0
    %v71 = vsel %vm70, %v69, -1.0
    %vm72 = vcmp.gt.f32.partialorder %v41, 0.0
    %v73 = vsel %vm72, %v69, -1.0
    %v75 = vlaneseq
    %v76 = vshrl.u32 %v75, 7
    %v77 = vsub.s32 0, %v76
    %v78 = vrot.slane %v73, %v77
    %v79 = vlaneseq
    %v80 = vshrl.u32 %v79, 7
    %v81 = vsub.s32 1, %v80
    %v82 = vrot.slane %v73, %v81
    %v83 = vlaneseq
    %v84 = vshrl.u32 %v83, 7
    %v85 = vsub.s32 2, %v84
    %v86 = vrot.slane %v73, %v85
    %vm90 = vcmask 1040384
    %v91 = vsel %vm90, %v78, -inf
    %v92 = vsel %vm90, %v82, -inf
    %vm93 = vcmask 16384
    %v94 = vsel %vm93, %v86, -inf
    %v95 = vmax.f32 %v91, %v92
    %v96 = vmax.f32 %v95, %v94
    %97 = vmax.xlane.f32.xlu0 %v96
    %v98 = vpop.xlane.xlu0 %97
    %v100 = vlaneseq
    %v101 = vshrl.u32 %v100, 7
    %v102 = vsub.s32 0, %v101
    %v103 = vrot.slane %v98, %v102
    %vm105 = vcmp.ge.f32.partialorder %v73, %v103
    %v106 = vsel %vm105, 1, 0
    %v107 = vcvt.s32.f32 %v106
    %v108 = vmax.f32 %v107, 0.0
    %s109 = sld [smem:[#allocation2 + $0x80]]
    %s110 = sld [smem:[#allocation2 + $0x81]]
    %s111 = sld [smem:[#allocation2 + $0x82]]
    %s112 = sld [smem:[#allocation2 + $0x83]]
    %v113 = vstv %s109
    %v114 = vmax.f32 %v31, %v113
    %v115 = vstv %s110
    %v116 = vmax.f32 %v33, %v115
    %v117 = vstv %s111
    %v118 = vmin.f32 %v35, %v117
    %v119 = vstv %s112
    %v120 = vmin.f32 %v37, %v119
    %v121 = vsub.f32 %v118, %v114
    %v122 = vsub.f32 %v120, %v116
    %vm123 = vcmp.gt.f32.partialorder %v121, 0.0
    %vm124 = vcmp.gt.f32.partialorder %v122, 0.0
    %vm125 = vmand %vm123, %vm124
    %v126 = vmul.f32 %v121, %v122
    %v127 = vsel %vm125, %v126, 0.0
    %s128 = ssub.f32 %s111, %s109
    %s129 = ssub.f32 %s112, %s110
    %s130 = smul.f32 %s128, %s129
    %v131 = vstv %s130
    %v132 = vadd.f32 %v40, %v131
    %v133 = vsub.f32 %v132, %v127
    %v134 = vadd.f32 %v133, 1e-10
    %v135 = vrcp.pop %v134
    %v136 = vmul.f32 %v127, %v135
    %vm137 = vcmp.gt.f32.partialorder %v136, %v71
    %v138 = vsel %vm137, %v136, %v71
    %v139 = vsel %vm137, 1, 0
    %v140 = vsel %vm72, %v136, -1.0
    %v142 = vlaneseq
    %v143 = vshrl.u32 %v142, 7
    %v144 = vsub.s32 0, %v143
    %v145 = vrot.slane %v140, %v144
    %v146 = vlaneseq
    %v147 = vshrl.u32 %v146, 7
    %v148 = vsub.s32 1, %v147
    %v149 = vrot.slane %v140, %v148
    %v150 = vlaneseq
    %v151 = vshrl.u32 %v150, 7
    %v152 = vsub.s32 2, %v151
    %v153 = vrot.slane %v140, %v152
    %v157 = vsel %vm90, %v145, -inf
    %v158 = vsel %vm90, %v149, -inf
    %v159 = vsel %vm93, %v153, -inf
    %v160 = vmax.f32 %v157, %v158
    %v161 = vmax.f32 %v160, %v159
    %162 = vmax.xlane.f32.xlu0 %v161
    %v163 = vpop.xlane.xlu0 %162
    %v165 = vlaneseq
    %v166 = vshrl.u32 %v165, 7
    %v167 = vsub.s32 0, %v166
    %v168 = vrot.slane %v163, %v167
    %vm170 = vcmp.ge.f32.partialorder %v140, %v168
    %v171 = vsel %vm170, 1, 0
    %v172 = vcvt.s32.f32 %v171
    %v173 = vmax.f32 %v108, %v172
    %s174 = sld [smem:[#allocation2 + $0x100]]
    %s175 = sld [smem:[#allocation2 + $0x101]]
    %s176 = sld [smem:[#allocation2 + $0x102]]
    %s177 = sld [smem:[#allocation2 + $0x103]]
    %v178 = vstv %s174
    %v179 = vmax.f32 %v31, %v178
    %v180 = vstv %s175
    %v181 = vmax.f32 %v33, %v180
    %v182 = vstv %s176
    %v183 = vmin.f32 %v35, %v182
    %v184 = vstv %s177
    %v185 = vmin.f32 %v37, %v184
    %v186 = vsub.f32 %v183, %v179
    %v187 = vsub.f32 %v185, %v181
    %vm188 = vcmp.gt.f32.partialorder %v186, 0.0
    %vm189 = vcmp.gt.f32.partialorder %v187, 0.0
    %vm190 = vmand %vm188, %vm189
    %v191 = vmul.f32 %v186, %v187
    %v192 = vsel %vm190, %v191, 0.0
    %s193 = ssub.f32 %s176, %s174
    %s194 = ssub.f32 %s177, %s175
    %s195 = smul.f32 %s193, %s194
    %v196 = vstv %s195
    %v197 = vadd.f32 %v40, %v196
    %v198 = vsub.f32 %v197, %v192
    %v199 = vadd.f32 %v198, 1e-10
    %v200 = vrcp.pop %v199
    %v201 = vmul.f32 %v192, %v200
    %vm202 = vcmp.gt.f32.partialorder %v201, %v138
    %v203 = vsel %vm202, %v201, %v138
    %v204 = vsel %vm202, 2, %v139
    %v205 = vsel %vm72, %v201, -1.0
    %v207 = vlaneseq
    %v208 = vshrl.u32 %v207, 7
    %v209 = vsub.s32 0, %v208
    %v210 = vrot.slane %v205, %v209
    %v211 = vlaneseq
    %v212 = vshrl.u32 %v211, 7
    %v213 = vsub.s32 1, %v212
    %v214 = vrot.slane %v205, %v213
    %v215 = vlaneseq
    %v216 = vshrl.u32 %v215, 7
    %v217 = vsub.s32 2, %v216
    %v218 = vrot.slane %v205, %v217
    %v222 = vsel %vm90, %v210, -inf
    %v223 = vsel %vm90, %v214, -inf
    %v224 = vsel %vm93, %v218, -inf
    %v225 = vmax.f32 %v222, %v223
    %v226 = vmax.f32 %v225, %v224
    %227 = vmax.xlane.f32.xlu0 %v226
    %v228 = vpop.xlane.xlu0 %227
    %v230 = vlaneseq
    %v231 = vshrl.u32 %v230, 7
    %v232 = vsub.s32 0, %v231
    %v233 = vrot.slane %v228, %v232
    %vm235 = vcmp.ge.f32.partialorder %v205, %v233
    %v236 = vsel %vm235, 1, 0
    %v237 = vcvt.s32.f32 %v236
    %v238 = vmax.f32 %v173, %v237
    %v239 = vlaneseq
    %vm240 = vcmp.ge.s32.totalorder %v239, 0
    %vm241 = vcmp.lt.s32.totalorder %v239, 259
    %vm242 = vmand %vm240, %vm241
    %243 = vst.msk [vmem:[%s3] sm:$0x7] %vm242, %v203
    %244 = vst.msk [vmem:[%s4] sm:$0x7] %vm242, %v204
    %245 = vst.msk [vmem:[#allocation5] sm:$0x7] %vm242, %v238
    // Predicated region
    $region18: #{_lambda_.8} parent=1 // pred_check
      _
    $region19: #{_lambda_.8} parent=1 // pred_check_branch
      %247 = sbr.rel (0) target = $region21
    $region20: #{_lambda_.8} parent=1 // pred_region
      _
    $region21: #{_lambda_.8} parent=1 // pred_fallthru
      _
    // Predicated region
    $region22: #{_lambda_.8} parent=1 // pred_check
      _
    $region23: #{_lambda_.8} parent=1 // pred_check_branch
      %249 = sbr.rel (0) target = $region25
    $region24: #{_lambda_.8} parent=1 // pred_region
      _
    $region25: #{_lambda_.8} parent=1 // pred_fallthru
      _
    // Predicated region
    $region26: #{_lambda_.8} parent=1 // pred_check
      _
    $region27: #{_lambda_.8} parent=1 // pred_check_branch
      %251 = sbr.rel (0) target = $region29
    $region28: #{_lambda_.8} parent=1 // pred_region
      %s253 = ssub.s32 48, 48
      %254 = vsyncadd [#allocation3], %s253
      %s256 = sshll.u32 [#allocation5], 4
      %s257 = int_to_ptr.vmem [resolvable:$true] %s256
      %259 = dma.vmem_to_hbm [thread:$0]  %s257, 48, %s5, [#allocation3]
    $region29: #{_lambda_.8} parent=1 // pred_fallthru
      _
    // Predicated region
    $region30: #{_lambda_.8} parent=1 // pred_check
      _
    $region31: #{_lambda_.8} parent=1 // pred_check_branch
      %261 = sbr.rel (0) target = $region33
    $region32: #{_lambda_.8} parent=1 // pred_region
      _
    $region33: #{_lambda_.8} parent=1 // pred_fallthru
      _
    // Predicated region
    $region34: #{_lambda_.8} parent=1 // pred_check
      _
    $region35: #{_lambda_.8} parent=1 // pred_check_branch
      %263 = sbr.rel (0) target = $region37
    $region36: #{_lambda_.8} parent=1 // pred_region
      _
    $region37: #{_lambda_.8} parent=1 // pred_fallthru
      _
    // Predicated region
    $region38: #{_lambda_.8} parent=1 // pred_check
      _
    $region39: #{_lambda_.8} parent=1 // pred_check_branch
      %265 = sbr.rel (0) target = $region41
    $region40: #{_lambda_.8} parent=1 // pred_region
      %266 = dma.done [#allocation3], 48
    $region41: #{_lambda_.8} parent=1 // pred_fallthru
      _
    %267 = vsyncpa [#allocation3], 1
    %268 = vsyncpa [#allocation4], 1

// kernel: _lambda_.7
$region0: #{_lambda_.7}
  #allocation0 [shape = 'u32[]', space=smem, size = 0x4, offset = 0x4, fixed_abs, tag = 'smem constant byte address 0x4 - core index']
  #allocation1 [shape = 'u32[144,128]{1,0:T(1,128)}', space=vmem, size = 0x12000, scoped, tag = 'internal scratch']
  %s0 = inlined_call_operand.vmem [shape: bf16[256,384], index: 0, kind: input, shape index: {}]
  %s1 = inlined_call_operand.vmem [shape: bf16[384,32], index: 1, kind: input, shape index: {}]
  %s2 = inlined_call_operand.vmem [shape: f32[1,32], index: 2, kind: input, shape index: {}]
  %s3 = inlined_call_operand.vmem [shape: f32[6,32], index: 3, kind: input, shape index: {}]
  %s4 = inlined_call_operand.vmem [shape: f32[6,1], index: 4, kind: input, shape index: {}]
  %s5 = inlined_call_operand.vmem [shape: f32[6,256], index: 5, kind: output, shape index: {}]
  %s6 = sld [smem:[#allocation0]]
  $region30: #{_lambda_.7} parent=0
    _
  %s8 = ssub.s32 1, %s6
  %s9 = scalar_select 0, %s8, %s6
  // Predicated region
  $region2: #{_lambda_.7} parent=0 // pred_check
    _
  $region3: #{_lambda_.7} parent=0 // pred_check_branch
    %11 = sbr.rel (0) target = $region5
  $region4: #{_lambda_.7} parent=0 // pred_region
    _
  $region5: #{_lambda_.7} parent=0 // pred_fallthru
    _
  // Predicated region
  $region6: #{_lambda_.7} parent=0 // pred_check
    _
  $region7: #{_lambda_.7} parent=0 // pred_check_branch
    %13 = sbr.rel (0) target = $region9
  $region8: #{_lambda_.7} parent=0 // pred_region
    _
  $region9: #{_lambda_.7} parent=0 // pred_fallthru
    _
  // Predicated region
  $region10: #{_lambda_.7} parent=0 // pred_check
    _
  $region11: #{_lambda_.7} parent=0 // pred_check_branch
    %15 = sbr.rel (0) target = $region13
  $region12: #{_lambda_.7} parent=0 // pred_region
    _
  $region13: #{_lambda_.7} parent=0 // pred_fallthru
    _
  // Predicated region
  $region14: #{_lambda_.7} parent=0 // pred_check
    _
  $region15: #{_lambda_.7} parent=0 // pred_check_branch
    %17 = sbr.rel (0) target = $region17
  $region16: #{_lambda_.7} parent=0 // pred_region
    _
  $region17: #{_lambda_.7} parent=0 // pred_fallthru
    _
  // Predicated region
  $region18: #{_lambda_.7} parent=0 // pred_check
    _
  $region19: #{_lambda_.7} parent=0 // pred_check_branch
    %19 = sbr.rel (0) target = $region21
  $region20: #{_lambda_.7} parent=0 // pred_region
    _
  $region21: #{_lambda_.7} parent=0 // pred_fallthru
    _
  %v21 = vld [vmem:[%s0] sm:$0xff]
  %v22 = vld [vmem:[%s0 + $0x8] sm:$0xf]
  %v23 = vld [vmem:[%s0 + $0xc] sm:$0xff]
  %v24 = vld [vmem:[%s0 + $0x14] sm:$0xf]
  %v25 = vld [vmem:[%s0 + $0x18] sm:$0xff]
  %v26 = vld [vmem:[%s0 + $0x20] sm:$0xf]
  %v27 = vld [vmem:[%s0 + $0x24] sm:$0xff]
  %v28 = vld [vmem:[%s0 + $0x2c] sm:$0xf]
  %v29 = vld [vmem:[%s0 + $0x30] sm:$0xff]
  %v30 = vld [vmem:[%s0 + $0x38] sm:$0xf]
  %v31 = vld [vmem:[%s0 + $0x3c] sm:$0xff]
  %v32 = vld [vmem:[%s0 + $0x44] sm:$0xf]
  %v33 = vld [vmem:[%s0 + $0x48] sm:$0xff]
  %v34 = vld [vmem:[%s0 + $0x50] sm:$0xf]
  %v35 = vld [vmem:[%s0 + $0x54] sm:$0xff]
  %v36 = vld [vmem:[%s0 + $0x5c] sm:$0xf]
  %v37 = vld [vmem:[%s0 + $0x60] sm:$0xff]
  %v38 = vld [vmem:[%s0 + $0x68] sm:$0xf]
  %v39 = vld [vmem:[%s0 + $0x6c] sm:$0xff]
  %v40 = vld [vmem:[%s0 + $0x74] sm:$0xf]
  %v41 = vld [vmem:[%s0 + $0x78] sm:$0xff]
  %v42 = vld [vmem:[%s0 + $0x80] sm:$0xf]
  %v43 = vld [vmem:[%s0 + $0x84] sm:$0xff]
  %v44 = vld [vmem:[%s0 + $0x8c] sm:$0xf]
  %v45 = vld [vmem:[%s0 + $0x90] sm:$0xff]
  %v46 = vld [vmem:[%s0 + $0x98] sm:$0xf]
  %v47 = vld [vmem:[%s0 + $0x9c] sm:$0xff]
  %v48 = vld [vmem:[%s0 + $0xa4] sm:$0xf]
  %v49 = vld [vmem:[%s0 + $0xa8] sm:$0xff]
  %v50 = vld [vmem:[%s0 + $0xb0] sm:$0xf]
  %v51 = vld [vmem:[%s0 + $0xb4] sm:$0xff]
  %v52 = vld [vmem:[%s0 + $0xbc] sm:$0xf]
  %v53 = vld [vmem:[%s0 + $0xc0] sm:$0xff]
  %v54 = vld [vmem:[%s0 + $0xc8] sm:$0xf]
  %v55 = vld [vmem:[%s0 + $0xcc] sm:$0xff]
  %v56 = vld [vmem:[%s0 + $0xd4] sm:$0xf]
  %v57 = vld [vmem:[%s0 + $0xd8] sm:$0xff]
  %v58 = vld [vmem:[%s0 + $0xe0] sm:$0xf]
  %v59 = vld [vmem:[%s0 + $0xe4] sm:$0xff]
  %v60 = vld [vmem:[%s0 + $0xec] sm:$0xf]
  %v61 = vld [vmem:[%s0 + $0xf0] sm:$0xff]
  %v62 = vld [vmem:[%s0 + $0xf8] sm:$0xf]
  %v63 = vld [vmem:[%s0 + $0xfc] sm:$0xff]
  %v64 = vld [vmem:[%s0 + $0x104] sm:$0xf]
  %v65 = vld [vmem:[%s0 + $0x108] sm:$0xff]
  %v66 = vld [vmem:[%s0 + $0x110] sm:$0xf]
  %v67 = vld [vmem:[%s0 + $0x114] sm:$0xff]
  %v68 = vld [vmem:[%s0 + $0x11c] sm:$0xf]
  %v69 = vld [vmem:[%s0 + $0x120] sm:$0xff]
  %v70 = vld [vmem:[%s0 + $0x128] sm:$0xf]
  %v71 = vld [vmem:[%s0 + $0x12c] sm:$0xff]
  %v72 = vld [vmem:[%s0 + $0x134] sm:$0xf]
  %v73 = vld [vmem:[%s0 + $0x138] sm:$0xff]
  %v74 = vld [vmem:[%s0 + $0x140] sm:$0xf]
  %v75 = vld [vmem:[%s0 + $0x144] sm:$0xff]
  %v76 = vld [vmem:[%s0 + $0x14c] sm:$0xf]
  %v77 = vld [vmem:[%s0 + $0x150] sm:$0xff]
  %v78 = vld [vmem:[%s0 + $0x158] sm:$0xf]
  %v79 = vld [vmem:[%s0 + $0x15c] sm:$0xff]
  %v80 = vld [vmem:[%s0 + $0x164] sm:$0xf]
  %v81 = vld [vmem:[%s0 + $0x168] sm:$0xff]
  %v82 = vld [vmem:[%s0 + $0x170] sm:$0xf]
  %v83 = vld [vmem:[%s0 + $0x174] sm:$0xff]
  %v84 = vld [vmem:[%s0 + $0x17c] sm:$0xf]
  %v85 = vld [vmem:[%s1] sm:$0xf]
  %v86 = vld [vmem:[%s1 + $0x4] sm:$0xf]
  %v87 = vld [vmem:[%s1 + $0x8] sm:$0xf]
  %v88 = vld [vmem:[%s1 + $0xc] sm:$0xf]
  %v89 = vld [vmem:[%s1 + $0x10] sm:$0xf]
  %v90 = vld [vmem:[%s1 + $0x14] sm:$0xf]
  %v91 = vld [vmem:[%s1 + $0x18] sm:$0xf]
  %v92 = vld [vmem:[%s1 + $0x1c] sm:$0xf]
  %v93 = vld [vmem:[%s1 + $0x20] sm:$0xf]
  %v94 = vld [vmem:[%s1 + $0x24] sm:$0xf]
  %v95 = vld [vmem:[%s1 + $0x28] sm:$0xf]
  %v96 = vld [vmem:[%s1 + $0x2c] sm:$0xf]
  %v97 = vld [vmem:[%s1 + $0x30] sm:$0xf]
  %v98 = vld [vmem:[%s1 + $0x34] sm:$0xf]
  %v99 = vld [vmem:[%s1 + $0x38] sm:$0xf]
  %v100 = vld [vmem:[%s1 + $0x3c] sm:$0xf]
  %v101 = vld [vmem:[%s1 + $0x40] sm:$0xf]
  %v102 = vld [vmem:[%s1 + $0x44] sm:$0xf]
  %v103 = vld [vmem:[%s1 + $0x48] sm:$0xf]
  %v104 = vld [vmem:[%s1 + $0x4c] sm:$0xf]
  %v105 = vld [vmem:[%s1 + $0x50] sm:$0xf]
  %v106 = vld [vmem:[%s1 + $0x54] sm:$0xf]
  %v107 = vld [vmem:[%s1 + $0x58] sm:$0xf]
  %v108 = vld [vmem:[%s1 + $0x5c] sm:$0xf]
  %v109 = vld [vmem:[%s1 + $0x60] sm:$0xf]
  %v110 = vld [vmem:[%s1 + $0x64] sm:$0xf]
  %v111 = vld [vmem:[%s1 + $0x68] sm:$0xf]
  %v112 = vld [vmem:[%s1 + $0x6c] sm:$0xf]
  %v113 = vld [vmem:[%s1 + $0x70] sm:$0xf]
  %v114 = vld [vmem:[%s1 + $0x74] sm:$0xf]
  %v115 = vld [vmem:[%s1 + $0x78] sm:$0xf]
  %v116 = vld [vmem:[%s1 + $0x7c] sm:$0xf]
  %v117 = vld [vmem:[%s1 + $0x80] sm:$0xf]
  %v118 = vld [vmem:[%s1 + $0x84] sm:$0xf]
  %v119 = vld [vmem:[%s1 + $0x88] sm:$0xf]
  %v120 = vld [vmem:[%s1 + $0x8c] sm:$0xf]
  %v121 = vld [vmem:[%s1 + $0x90] sm:$0xf]
  %v122 = vld [vmem:[%s1 + $0x94] sm:$0xf]
  %v123 = vld [vmem:[%s1 + $0x98] sm:$0xf]
  %v124 = vld [vmem:[%s1 + $0x9c] sm:$0xf]
  %v125 = vld [vmem:[%s1 + $0xa0] sm:$0xf]
  %v126 = vld [vmem:[%s1 + $0xa4] sm:$0xf]
  %v127 = vld [vmem:[%s1 + $0xa8] sm:$0xf]
  %v128 = vld [vmem:[%s1 + $0xac] sm:$0xf]
  %v129 = vld [vmem:[%s1 + $0xb0] sm:$0xf]
  %v130 = vld [vmem:[%s1 + $0xb4] sm:$0xf]
  %v131 = vld [vmem:[%s1 + $0xb8] sm:$0xf]
  %v132 = vld [vmem:[%s1 + $0xbc] sm:$0xf]
  %v133 = vld [vmem:[%s2] sm:$0x1]
  %v135 = vlaneseq
  %v136 = vshrl.u32 %v135, 7
  %v137 = vsub.s32 0, %v136
  %v138 = vrot.slane %v133, %v137
  %v204 = vunpack.c.l.b16 %v21
  %v205 = vunpack.c.h.b16 %v21
  %v206 = vunpack.c.l.b16 %v22
  %v207 = vunpack.c.l.b16 %v23
  %v208 = vunpack.c.h.b16 %v23
  %v209 = vunpack.c.l.b16 %v24
  %v210 = vunpack.c.l.b16 %v25
  %v211 = vunpack.c.h.b16 %v25
  %v212 = vunpack.c.l.b16 %v26
  %v213 = vunpack.c.l.b16 %v27
  %v214 = vunpack.c.h.b16 %v27
  %v215 = vunpack.c.l.b16 %v28
  %v216 = vunpack.c.l.b16 %v29
  %v217 = vunpack.c.h.b16 %v29
  %v218 = vunpack.c.l.b16 %v30
  %v219 = vunpack.c.l.b16 %v31
  %v220 = vunpack.c.h.b16 %v31
  %v221 = vunpack.c.l.b16 %v32
  %v222 = vunpack.c.l.b16 %v33
  %v223 = vunpack.c.h.b16 %v33
  %v224 = vunpack.c.l.b16 %v34
  %v225 = vunpack.c.l.b16 %v35
  %v226 = vunpack.c.h.b16 %v35
  %v227 = vunpack.c.l.b16 %v36
  %v228 = vunpack.c.l.b16 %v37
  %v229 = vunpack.c.h.b16 %v37
  %v230 = vunpack.c.l.b16 %v38
  %v231 = vunpack.c.l.b16 %v39
  %v232 = vunpack.c.h.b16 %v39
  %v233 = vunpack.c.l.b16 %v40
  %v234 = vunpack.c.l.b16 %v41
  %v235 = vunpack.c.h.b16 %v41
  %v236 = vunpack.c.l.b16 %v42
  %v237 = vunpack.c.l.b16 %v43
  %v238 = vunpack.c.h.b16 %v43
  %v239 = vunpack.c.l.b16 %v44
  %v240 = vunpack.c.l.b16 %v45
  %v241 = vunpack.c.h.b16 %v45
  %v242 = vunpack.c.l.b16 %v46
  %v243 = vunpack.c.l.b16 %v47
  %v244 = vunpack.c.h.b16 %v47
  %v245 = vunpack.c.l.b16 %v48
  %v246 = vunpack.c.l.b16 %v49
  %v247 = vunpack.c.h.b16 %v49
  %v248 = vunpack.c.l.b16 %v50
  %v249 = vunpack.c.l.b16 %v51
  %v250 = vunpack.c.h.b16 %v51
  %v251 = vunpack.c.l.b16 %v52
  %v252 = vunpack.c.l.b16 %v53
  %v253 = vunpack.c.h.b16 %v53
  %v254 = vunpack.c.l.b16 %v54
  %v255 = vunpack.c.l.b16 %v55
  %v256 = vunpack.c.h.b16 %v55
  %v257 = vunpack.c.l.b16 %v56
  %v258 = vunpack.c.l.b16 %v57
  %v259 = vunpack.c.h.b16 %v57
  %v260 = vunpack.c.l.b16 %v58
  %v261 = vunpack.c.l.b16 %v59
  %v262 = vunpack.c.h.b16 %v59
  %v263 = vunpack.c.l.b16 %v60
  %v264 = vunpack.c.l.b16 %v61
  %v265 = vunpack.c.h.b16 %v61
  %v266 = vunpack.c.l.b16 %v62
  %v267 = vunpack.c.l.b16 %v63
  %v268 = vunpack.c.h.b16 %v63
  %v269 = vunpack.c.l.b16 %v64
  %v270 = vunpack.c.l.b16 %v65
  %v271 = vunpack.c.h.b16 %v65
  %v272 = vunpack.c.l.b16 %v66
  %v273 = vunpack.c.l.b16 %v67
  %v274 = vunpack.c.h.b16 %v67
  %v275 = vunpack.c.l.b16 %v68
  %v276 = vunpack.c.l.b16 %v69
  %v277 = vunpack.c.h.b16 %v69
  %v278 = vunpack.c.l.b16 %v70
  %v279 = vunpack.c.l.b16 %v71
  %v280 = vunpack.c.h.b16 %v71
  %v281 = vunpack.c.l.b16 %v72
  %v282 = vunpack.c.l.b16 %v73
  %v283 = vunpack.c.h.b16 %v73
  %v284 = vunpack.c.l.b16 %v74
  %v285 = vunpack.c.l.b16 %v75
  %v286 = vunpack.c.h.b16 %v75
  %v287 = vunpack.c.l.b16 %v76
  %v288 = vunpack.c.l.b16 %v77
  %v289 = vunpack.c.h.b16 %v77
  %v290 = vunpack.c.l.b16 %v78
  %v291 = vunpack.c.l.b16 %v79
  %v292 = vunpack.c.h.b16 %v79
  %v293 = vunpack.c.l.b16 %v80
  %v294 = vunpack.c.l.b16 %v81
  %v295 = vunpack.c.h.b16 %v81
  %v296 = vunpack.c.l.b16 %v82
  %v297 = vunpack.c.l.b16 %v83
  %v298 = vunpack.c.h.b16 %v83
  %v299 = vunpack.c.l.b16 %v84
  %v300 = vpack.c.b16 %v207, %v204
  %v301 = vpack.c.b16 %v208, %v205
  %v302 = vpack.c.b16 %v209, %v206
  %v303 = vpack.c.b16 %v213, %v210
  %v304 = vpack.c.b16 %v214, %v211
  %v305 = vpack.c.b16 %v215, %v212
  %v306 = vpack.c.b16 %v219, %v216
  %v307 = vpack.c.b16 %v220, %v217
  %v308 = vpack.c.b16 %v221, %v218
  %v309 = vpack.c.b16 %v225, %v222
  %v310 = vpack.c.b16 %v226, %v223
  %v311 = vpack.c.b16 %v227, %v224
  %v312 = vpack.c.b16 %v231, %v228
  %v313 = vpack.c.b16 %v232, %v229
  %v314 = vpack.c.b16 %v233, %v230
  %v315 = vpack.c.b16 %v237, %v234
  %v316 = vpack.c.b16 %v238, %v235
  %v317 = vpack.c.b16 %v239, %v236
  %v318 = vpack.c.b16 %v243, %v240
  %v319 = vpack.c.b16 %v244, %v241
  %v320 = vpack.c.b16 %v245, %v242
  %v321 = vpack.c.b16 %v249, %v246
  %v322 = vpack.c.b16 %v250, %v247
  %v323 = vpack.c.b16 %v251, %v248
  %v324 = vpack.c.b16 %v255, %v252
  %v325 = vpack.c.b16 %v256, %v253
  %v326 = vpack.c.b16 %v257, %v254
  %v327 = vpack.c.b16 %v261, %v258
  %v328 = vpack.c.b16 %v262, %v259
  %v329 = vpack.c.b16 %v263, %v260
  %v330 = vpack.c.b16 %v267, %v264
  %v331 = vpack.c.b16 %v268, %v265
  %v332 = vpack.c.b16 %v269, %v266
  %v333 = vpack.c.b16 %v273, %v270
  %v334 = vpack.c.b16 %v274, %v271
  %v335 = vpack.c.b16 %v275, %v272
  %v336 = vpack.c.b16 %v279, %v276
  %v337 = vpack.c.b16 %v280, %v277
  %v338 = vpack.c.b16 %v281, %v278
  %v339 = vpack.c.b16 %v285, %v282
  %v340 = vpack.c.b16 %v286, %v283
  %v341 = vpack.c.b16 %v287, %v284
  %v342 = vpack.c.b16 %v291, %v288
  %v343 = vpack.c.b16 %v292, %v289
  %v344 = vpack.c.b16 %v293, %v290
  %v345 = vpack.c.b16 %v297, %v294
  %v346 = vpack.c.b16 %v298, %v295
  %v347 = vpack.c.b16 %v299, %v296
  %v444 = vunpack.c.l.b16 %v85
  %v445 = vunpack.c.l.b16 %v86
  %v446 = vunpack.c.l.b16 %v87
  %v447 = vunpack.c.l.b16 %v88
  %v448 = vunpack.c.l.b16 %v89
  %v449 = vunpack.c.l.b16 %v90
  %v450 = vunpack.c.l.b16 %v91
  %v451 = vunpack.c.l.b16 %v92
  %v452 = vunpack.c.l.b16 %v93
  %v453 = vunpack.c.l.b16 %v94
  %v454 = vunpack.c.l.b16 %v95
  %v455 = vunpack.c.l.b16 %v96
  %v456 = vunpack.c.l.b16 %v97
  %v457 = vunpack.c.l.b16 %v98
  %v458 = vunpack.c.l.b16 %v99
  %v459 = vunpack.c.l.b16 %v100
  %v460 = vunpack.c.l.b16 %v101
  %v461 = vunpack.c.l.b16 %v102
  %v462 = vunpack.c.l.b16 %v103
  %v463 = vunpack.c.l.b16 %v104
  %v464 = vunpack.c.l.b16 %v105
  %v465 = vunpack.c.l.b16 %v106
  %v466 = vunpack.c.l.b16 %v107
  %v467 = vunpack.c.l.b16 %v108
  %v468 = vunpack.c.l.b16 %v109
  %v469 = vunpack.c.l.b16 %v110
  %v470 = vunpack.c.l.b16 %v111
  %v471 = vunpack.c.l.b16 %v112
  %v472 = vunpack.c.l.b16 %v113
  %v473 = vunpack.c.l.b16 %v114
  %v474 = vunpack.c.l.b16 %v115
  %v475 = vunpack.c.l.b16 %v116
  %v476 = vunpack.c.l.b16 %v117
  %v477 = vunpack.c.l.b16 %v118
  %v478 = vunpack.c.l.b16 %v119
  %v479 = vunpack.c.l.b16 %v120
  %v480 = vunpack.c.l.b16 %v121
  %v481 = vunpack.c.l.b16 %v122
  %v482 = vunpack.c.l.b16 %v123
  %v483 = vunpack.c.l.b16 %v124
  %v484 = vunpack.c.l.b16 %v125
  %v485 = vunpack.c.l.b16 %v126
  %v486 = vunpack.c.l.b16 %v127
  %v487 = vunpack.c.l.b16 %v128
  %v488 = vunpack.c.l.b16 %v129
  %v489 = vunpack.c.l.b16 %v130
  %v490 = vunpack.c.l.b16 %v131
  %v491 = vunpack.c.l.b16 %v132
  %v492 = vpack.c.b16 %v445, %v444
  %v493 = vpack.c.b16 %v447, %v446
  %v494 = vpack.c.b16 %v449, %v448
  %v495 = vpack.c.b16 %v451, %v450
  %v496 = vpack.c.b16 %v453, %v452
  %v497 = vpack.c.b16 %v455, %v454
  %v498 = vpack.c.b16 %v457, %v456
  %v499 = vpack.c.b16 %v459, %v458
  %v500 = vpack.c.b16 %v461, %v460
  %v501 = vpack.c.b16 %v463, %v462
  %v502 = vpack.c.b16 %v465, %v464
  %v503 = vpack.c.b16 %v467, %v466
  %v504 = vpack.c.b16 %v469, %v468
  %v505 = vpack.c.b16 %v471, %v470
  %v506 = vpack.c.b16 %v473, %v472
  %v507 = vpack.c.b16 %v475, %v474
  %v508 = vpack.c.b16 %v477, %v476
  %v509 = vpack.c.b16 %v479, %v478
  %v510 = vpack.c.b16 %v481, %v480
  %v511 = vpack.c.b16 %v483, %v482
  %v512 = vpack.c.b16 %v485, %v484
  %v513 = vpack.c.b16 %v487, %v486
  %v514 = vpack.c.b16 %v489, %v488
  %v515 = vpack.c.b16 %v491, %v490
  %540 = vmatprep.subr.bf16.mxu0 0
  %541 = vmatpush1.bf16.msra.mxu0 %v499
  %542 = vmatprep.subr.bf16.mxu0 0
  %543 = vmatpush1.bf16.msra.mxu0 %v498
  %544 = vmatprep.subr.bf16.mxu0 0
  %545 = vmatpush1.bf16.msra.mxu0 %v497
  %546 = vmatprep.subr.bf16.mxu0 0
  %547 = vmatpush1.bf16.msra.mxu0 %v496
  %548 = vmatprep.subr.bf16.mxu0 0
  %549 = vmatpush1.bf16.msra.mxu0 %v495
  %550 = vmatprep.subr.bf16.mxu0 0
  %551 = vmatpush1.bf16.msra.mxu0 %v494
  %552 = vmatprep.subr.bf16.mxu0 0
  %553 = vmatpush1.bf16.msra.mxu0 %v493
  %554 = vmatprep.subr.bf16.mxu0 0
  %555 = vmatpush1.bf16.msra.mxu0 %v492
  %556 = vmatprep.subr.bf16.mxu0 0
  %557 = vmatpush2.bf16.msra.mxu0 %v507
  %558 = vmatprep.subr.bf16.mxu0 0
  %559 = vmatpush2.bf16.msra.mxu0 %v506
  %560 = vmatprep.subr.bf16.mxu0 0
  %561 = vmatpush2.bf16.msra.mxu0 %v505
  %562 = vmatprep.subr.bf16.mxu0 0
  %563 = vmatpush2.bf16.msra.mxu0 %v504
  %564 = vmatprep.subr.bf16.mxu0 0
  %565 = vmatpush2.bf16.msra.mxu0 %v503
  %566 = vmatprep.subr.bf16.mxu0 0
  %567 = vmatpush2.bf16.msra.mxu0 %v502
  %568 = vmatprep.subr.bf16.mxu0 0
  %569 = vmatpush2.bf16.msra.mxu0 %v501
  %570 = vmatprep.subr.bf16.mxu0 0
  %571 = vmatpush2.bf16.msra.mxu0 %v500
  %572 = vmatprep.mubr.bf16.mxu0 %v301
  %573 = vmatmul.mubr.bf16.gmra.mxu0 %v300
  %v574 = vpop.f32.mrf.mxu0
  %v575 = vadd.f32 %v138, %v574
  %v576 = vpop.f32.mrf.mxu0
  %v577 = vpop.f32.mrf.mxu0
  %v578 = vadd.f32 %v138, %v577
  %v579 = vpop.f32.mrf.mxu0
  %580 = vmatprep.mubr.bf16.mxu0 %v304
  %581 = vmatmul.mubr.bf16.gmra.mxu0 %v303
  %v582 = vpop.f32.mrf.mxu0
  %v583 = vadd.f32 %v138, %v582
  %v584 = vpop.f32.mrf.mxu0
  %v585 = vpop.f32.mrf.mxu0
  %v586 = vadd.f32 %v138, %v585
  %v587 = vpop.f32.mrf.mxu0
  %588 = vmatprep.mubr.bf16.mxu0 %v307
  %589 = vmatmul.mubr.bf16.gmra.mxu0 %v306
  %v590 = vpop.f32.mrf.mxu0
  %v591 = vadd.f32 %v138, %v590
  %v592 = vpop.f32.mrf.mxu0
  %v593 = vpop.f32.mrf.mxu0
  %v594 = vadd.f32 %v138, %v593
  %v595 = vpop.f32.mrf.mxu0
  %596 = vmatprep.mubr.bf16.mxu0 %v310
  %597 = vmatmul.mubr.bf16.gmra.mxu0 %v309
  %v598 = vpop.f32.mrf.mxu0
  %v599 = vadd.f32 %v138, %v598
  %v600 = vpop.f32.mrf.mxu0
  %v601 = vpop.f32.mrf.mxu0
  %v602 = vadd.f32 %v138, %v601
  %v603 = vpop.f32.mrf.mxu0
  %604 = vmatprep.mubr.bf16.mxu0 %v313
  %605 = vmatmul.mubr.bf16.gmra.mxu0 %v312
  %v606 = vpop.f32.mrf.mxu0
  %v607 = vadd.f32 %v138, %v606
  %v608 = vpop.f32.mrf.mxu0
  %v609 = vpop.f32.mrf.mxu0
  %v610 = vadd.f32 %v138, %v609
  %v611 = vpop.f32.mrf.mxu0
  %612 = vmatprep.mubr.bf16.mxu0 %v316
  %613 = vmatmul.mubr.bf16.gmra.mxu0 %v315
  %v614 = vpop.f32.mrf.mxu0
  %v615 = vadd.f32 %v138, %v614
  %v616 = vpop.f32.mrf.mxu0
  %v617 = vpop.f32.mrf.mxu0
  %v618 = vadd.f32 %v138, %v617
  %v619 = vpop.f32.mrf.mxu0
  %620 = vmatprep.mubr.bf16.mxu0 %v319
  %621 = vmatmul.mubr.bf16.gmra.mxu0 %v318
  %v622 = vpop.f32.mrf.mxu0
  %v623 = vadd.f32 %v138, %v622
  %v624 = vpop.f32.mrf.mxu0
  %v625 = vpop.f32.mrf.mxu0
  %v626 = vadd.f32 %v138, %v625
  %v627 = vpop.f32.mrf.mxu0
  %628 = vmatprep.mubr.bf16.mxu0 %v322
  %629 = vmatmul.mubr.bf16.gmra.mxu0 %v321
  %v630 = vpop.f32.mrf.mxu0
  %v631 = vadd.f32 %v138, %v630
  %v632 = vpop.f32.mrf.mxu0
  %v633 = vpop.f32.mrf.mxu0
  %v634 = vadd.f32 %v138, %v633
  %v635 = vpop.f32.mrf.mxu0
  %636 = vmatprep.mubr.bf16.mxu0 %v325
  %637 = vmatmul.mubr.bf16.gmra.mxu0 %v324
  %v638 = vpop.f32.mrf.mxu0
  %v639 = vadd.f32 %v138, %v638
  %v640 = vpop.f32.mrf.mxu0
  %v641 = vpop.f32.mrf.mxu0
  %v642 = vadd.f32 %v138, %v641
  %v643 = vpop.f32.mrf.mxu0
  %644 = vmatprep.mubr.bf16.mxu0 %v328
  %645 = vmatmul.mubr.bf16.gmra.mxu0 %v327
  %v646 = vpop.f32.mrf.mxu0
  %v647 = vadd.f32 %v138, %v646
  %v648 = vpop.f32.mrf.mxu0
  %v649 = vpop.f32.mrf.mxu0
  %v650 = vadd.f32 %v138, %v649
  %v651 = vpop.f32.mrf.mxu0
  %652 = vmatprep.mubr.bf16.mxu0 %v331
  %653 = vmatmul.mubr.bf16.gmra.mxu0 %v330
  %v654 = vpop.f32.mrf.mxu0
  %v655 = vadd.f32 %v138, %v654
  %v656 = vpop.f32.mrf.mxu0
  %v657 = vpop.f32.mrf.mxu0
  %v658 = vadd.f32 %v138, %v657
  %v659 = vpop.f32.mrf.mxu0
  %660 = vmatprep.mubr.bf16.mxu0 %v334
  %661 = vmatmul.mubr.bf16.gmra.mxu0 %v333
  %v662 = vpop.f32.mrf.mxu0
  %v663 = vadd.f32 %v138, %v662
  %v664 = vpop.f32.mrf.mxu0
  %v665 = vpop.f32.mrf.mxu0
  %v666 = vadd.f32 %v138, %v665
  %v667 = vpop.f32.mrf.mxu0
  %668 = vmatprep.mubr.bf16.mxu0 %v337
  %669 = vmatmul.mubr.bf16.gmra.mxu0 %v336
  %v670 = vpop.f32.mrf.mxu0
  %v671 = vadd.f32 %v138, %v670
  %v672 = vpop.f32.mrf.mxu0
  %v673 = vpop.f32.mrf.mxu0
  %v674 = vadd.f32 %v138, %v673
  %v675 = vpop.f32.mrf.mxu0
  %676 = vmatprep.mubr.bf16.mxu0 %v340
  %677 = vmatmul.mubr.bf16.gmra.mxu0 %v339
  %v678 = vpop.f32.mrf.mxu0
  %v679 = vadd.f32 %v138, %v678
  %v680 = vpop.f32.mrf.mxu0
  %v681 = vpop.f32.mrf.mxu0
  %v682 = vadd.f32 %v138, %v681
  %v683 = vpop.f32.mrf.mxu0
  %684 = vmatprep.mubr.bf16.mxu0 %v343
  %685 = vmatmul.mubr.bf16.gmra.mxu0 %v342
  %v686 = vpop.f32.mrf.mxu0
  %v687 = vadd.f32 %v138, %v686
  %v688 = vpop.f32.mrf.mxu0
  %v689 = vpop.f32.mrf.mxu0
  %v690 = vadd.f32 %v138, %v689
  %v691 = vpop.f32.mrf.mxu0
  %692 = vmatprep.mubr.bf16.mxu0 %v346
  %693 = vmatmul.mubr.bf16.gmra.mxu0 %v345
  %v694 = vpop.f32.mrf.mxu0
  %v695 = vadd.f32 %v138, %v694
  %v696 = vpop.f32.mrf.mxu0
  %v697 = vpop.f32.mrf.mxu0
  %v698 = vadd.f32 %v138, %v697
  %v699 = vpop.f32.mrf.mxu0
  %700 = vdwg.mxu0
  %701 = vmatprep.subr.bf16.mxu0 0
  %702 = vmatpush1.bf16.msra.mxu0 %v515
  %703 = vmatprep.subr.bf16.mxu0 0
  %704 = vmatpush1.bf16.msra.mxu0 %v514
  %705 = vmatprep.subr.bf16.mxu0 0
  %706 = vmatpush1.bf16.msra.mxu0 %v513
  %707 = vmatprep.subr.bf16.mxu0 0
  %708 = vmatpush1.bf16.msra.mxu0 %v512
  %709 = vmatprep.subr.bf16.mxu0 0
  %710 = vmatpush1.bf16.msra.mxu0 %v511
  %711 = vmatprep.subr.bf16.mxu0 0
  %712 = vmatpush1.bf16.msra.mxu0 %v510
  %713 = vmatprep.subr.bf16.mxu0 0
  %714 = vmatpush1.bf16.msra.mxu0 %v509
  %715 = vmatprep.subr.bf16.mxu0 0
  %716 = vmatpush1.bf16.msra.mxu0 %v508
  %717 = vmatprep.subr.bf16.mxu0 0
  %718 = vmatpush2.bf16.msra.mxu0 0
  %719 = vmatprep.subr.bf16.mxu0 0
  %720 = vmatpush2.bf16.msra.mxu0 0
  %721 = vmatprep.subr.bf16.mxu0 0
  %722 = vmatpush2.bf16.msra.mxu0 0
  %723 = vmatprep.subr.bf16.mxu0 0
  %724 = vmatpush2.bf16.msra.mxu0 0
  %725 = vmatprep.subr.bf16.mxu0 0
  %726 = vmatpush2.bf16.msra.mxu0 0
  %727 = vmatprep.subr.bf16.mxu0 0
  %728 = vmatpush2.bf16.msra.mxu0 0
  %729 = vmatprep.subr.bf16.mxu0 0
  %730 = vmatpush2.bf16.msra.mxu0 0
  %731 = vmatprep.subr.bf16.mxu0 0
  %732 = vmatpush2.bf16.msra.mxu0 0
  %733 = vmatprep.mubr.bf16.mxu0 0
  %734 = vmatmul.mubr.bf16.gmra.mxu0 %v302
  %v735 = vpop.f32.mrf.mxu0
  %v736 = vadd.f32 %v575, %v735
  %v737 = vpop.f32.mrf.mxu0
  %v738 = vpop.f32.mrf.mxu0
  %v739 = vadd.f32 %v578, %v738
  %v740 = vpop.f32.mrf.mxu0
  %741 = vmatprep.mubr.bf16.mxu0 0
  %742 = vmatmul.mubr.bf16.gmra.mxu0 %v305
  %v743 = vpop.f32.mrf.mxu0
  %v744 = vadd.f32 %v583, %v743
  %v745 = vpop.f32.mrf.mxu0
  %v746 = vpop.f32.mrf.mxu0
  %v747 = vadd.f32 %v586, %v746
  %v748 = vpop.f32.mrf.mxu0
  %749 = vmatprep.mubr.bf16.mxu0 0
  %750 = vmatmul.mubr.bf16.gmra.mxu0 %v308
  %v751 = vpop.f32.mrf.mxu0
  %v752 = vadd.f32 %v591, %v751
  %v753 = vpop.f32.mrf.mxu0
  %v754 = vpop.f32.mrf.mxu0
  %v755 = vadd.f32 %v594, %v754
  %v756 = vpop.f32.mrf.mxu0
  %757 = vmatprep.mubr.bf16.mxu0 0
  %758 = vmatmul.mubr.bf16.gmra.mxu0 %v311
  %v759 = vpop.f32.mrf.mxu0
  %v760 = vadd.f32 %v599, %v759
  %v761 = vpop.f32.mrf.mxu0
  %v762 = vpop.f32.mrf.mxu0
  %v763 = vadd.f32 %v602, %v762
  %v764 = vpop.f32.mrf.mxu0
  %765 = vmatprep.mubr.bf16.mxu0 0
  %766 = vmatmul.mubr.bf16.gmra.mxu0 %v314
  %v767 = vpop.f32.mrf.mxu0
  %v768 = vadd.f32 %v607, %v767
  %v769 = vpop.f32.mrf.mxu0
  %v770 = vpop.f32.mrf.mxu0
  %v771 = vadd.f32 %v610, %v770
  %v772 = vpop.f32.mrf.mxu0
  %773 = vmatprep.mubr.bf16.mxu0 0
  %774 = vmatmul.mubr.bf16.gmra.mxu0 %v317
  %v775 = vpop.f32.mrf.mxu0
  %v776 = vadd.f32 %v615, %v775
  %v777 = vpop.f32.mrf.mxu0
  %v778 = vpop.f32.mrf.mxu0
  %v779 = vadd.f32 %v618, %v778
  %v780 = vpop.f32.mrf.mxu0
  %781 = vmatprep.mubr.bf16.mxu0 0
  %782 = vmatmul.mubr.bf16.gmra.mxu0 %v320
  %v783 = vpop.f32.mrf.mxu0
  %v784 = vadd.f32 %v623, %v783
  %v785 = vpop.f32.mrf.mxu0
  %v786 = vpop.f32.mrf.mxu0
  %v787 = vadd.f32 %v626, %v786
  %v788 = vpop.f32.mrf.mxu0
  %789 = vmatprep.mubr.bf16.mxu0 0
  %790 = vmatmul.mubr.bf16.gmra.mxu0 %v323
  %v791 = vpop.f32.mrf.mxu0
  %v792 = vadd.f32 %v631, %v791
  %v793 = vpop.f32.mrf.mxu0
  %v794 = vpop.f32.mrf.mxu0
  %v795 = vadd.f32 %v634, %v794
  %v796 = vpop.f32.mrf.mxu0
  %797 = vmatprep.mubr.bf16.mxu0 0
  %798 = vmatmul.mubr.bf16.gmra.mxu0 %v326
  %v799 = vpop.f32.mrf.mxu0
  %v800 = vadd.f32 %v639, %v799
  %v801 = vpop.f32.mrf.mxu0
  %v802 = vpop.f32.mrf.mxu0
  %v803 = vadd.f32 %v642, %v802
  %v804 = vpop.f32.mrf.mxu0
  %805 = vmatprep.mubr.bf16.mxu0 0
  %806 = vmatmul.mubr.bf16.gmra.mxu0 %v329
  %v807 = vpop.f32.mrf.mxu0
  %v808 = vadd.f32 %v647, %v807
  %v809 = vpop.f32.mrf.mxu0
  %v810 = vpop.f32.mrf.mxu0
  %v811 = vadd.f32 %v650, %v810
  %v812 = vpop.f32.mrf.mxu0
  %813 = vmatprep.mubr.bf16.mxu0 0
  %814 = vmatmul.mubr.bf16.gmra.mxu0 %v332
  %v815 = vpop.f32.mrf.mxu0
  %v816 = vadd.f32 %v655, %v815
  %v817 = vpop.f32.mrf.mxu0
  %v818 = vpop.f32.mrf.mxu0
  %v819 = vadd.f32 %v658, %v818
  %v820 = vpop.f32.mrf.mxu0
  %821 = vmatprep.mubr.bf16.mxu0 0
  %822 = vmatmul.mubr.bf16.gmra.mxu0 %v335
  %v823 = vpop.f32.mrf.mxu0
  %v824 = vadd.f32 %v663, %v823
  %v825 = vpop.f32.mrf.mxu0
  %v826 = vpop.f32.mrf.mxu0
  %v827 = vadd.f32 %v666, %v826
  %v828 = vpop.f32.mrf.mxu0
  %829 = vmatprep.mubr.bf16.mxu0 0
  %830 = vmatmul.mubr.bf16.gmra.mxu0 %v338
  %v831 = vpop.f32.mrf.mxu0
  %v832 = vadd.f32 %v671, %v831
  %v833 = vpop.f32.mrf.mxu0
  %v834 = vpop.f32.mrf.mxu0
  %v835 = vadd.f32 %v674, %v834
  %v836 = vpop.f32.mrf.mxu0
  %837 = vmatprep.mubr.bf16.mxu0 0
  %838 = vmatmul.mubr.bf16.gmra.mxu0 %v341
  %v839 = vpop.f32.mrf.mxu0
  %v840 = vadd.f32 %v679, %v839
  %v841 = vpop.f32.mrf.mxu0
  %v842 = vpop.f32.mrf.mxu0
  %v843 = vadd.f32 %v682, %v842
  %v844 = vpop.f32.mrf.mxu0
  %845 = vmatprep.mubr.bf16.mxu0 0
  %846 = vmatmul.mubr.bf16.gmra.mxu0 %v344
  %v847 = vpop.f32.mrf.mxu0
  %v848 = vadd.f32 %v687, %v847
  %v849 = vpop.f32.mrf.mxu0
  %v850 = vpop.f32.mrf.mxu0
  %v851 = vadd.f32 %v690, %v850
  %v852 = vpop.f32.mrf.mxu0
  %853 = vmatprep.mubr.bf16.mxu0 0
  %854 = vmatmul.mubr.bf16.gmra.mxu0 %v347
  %v855 = vpop.f32.mrf.mxu0
  %v856 = vadd.f32 %v695, %v855
  %v857 = vpop.f32.mrf.mxu0
  %v858 = vpop.f32.mrf.mxu0
  %v859 = vadd.f32 %v698, %v858
  %v860 = vpop.f32.mrf.mxu0
  %861 = vdwg.mxu0
  %v862 = vmax.f32 %v736, 0.0
  %v863 = vmax.f32 %v739, 0.0
  %v864 = vmax.f32 %v744, 0.0
  %v865 = vmax.f32 %v747, 0.0
  %v866 = vmax.f32 %v752, 0.0
  %v867 = vmax.f32 %v755, 0.0
  %v868 = vmax.f32 %v760, 0.0
  %v869 = vmax.f32 %v763, 0.0
  %v870 = vmax.f32 %v768, 0.0
  %v871 = vmax.f32 %v771, 0.0
  %v872 = vmax.f32 %v776, 0.0
  %v873 = vmax.f32 %v779, 0.0
  %v874 = vmax.f32 %v784, 0.0
  %v875 = vmax.f32 %v787, 0.0
  %v876 = vmax.f32 %v792, 0.0
  %v877 = vmax.f32 %v795, 0.0
  %v878 = vmax.f32 %v800, 0.0
  %v879 = vmax.f32 %v803, 0.0
  %v880 = vmax.f32 %v808, 0.0
  %v881 = vmax.f32 %v811, 0.0
  %v882 = vmax.f32 %v816, 0.0
  %v883 = vmax.f32 %v819, 0.0
  %v884 = vmax.f32 %v824, 0.0
  %v885 = vmax.f32 %v827, 0.0
  %v886 = vmax.f32 %v832, 0.0
  %v887 = vmax.f32 %v835, 0.0
  %v888 = vmax.f32 %v840, 0.0
  %v889 = vmax.f32 %v843, 0.0
  %v890 = vmax.f32 %v848, 0.0
  %v891 = vmax.f32 %v851, 0.0
  %v892 = vmax.f32 %v856, 0.0
  %v893 = vmax.f32 %v859, 0.0
  %v894 = vld [vmem:[%s3] sm:$0x3f]
  %v895 = vld [vmem:[%s4] sm:$0x3f]
  %897 = vset.pattern.permute.xlu0 0
  %898 = vperm.xlu0 %897, %v895
  %v899 = vpop.permute.xlu0 %898
  %vm901 = vcmask 261120
  %v903 = vsel %vm901, %v894, 0
  %v906 = vsel %vm901, %v862, 0
  %v909 = vsel %vm901, %v863, 0
  %v912 = vsel %vm901, %v864, 0
  %v915 = vsel %vm901, %v865, 0
  %v918 = vsel %vm901, %v866, 0
  %v921 = vsel %vm901, %v867, 0
  %v924 = vsel %vm901, %v868, 0
  %v927 = vsel %vm901, %v869, 0
  %v930 = vsel %vm901, %v870, 0
  %v933 = vsel %vm901, %v871, 0
  %v936 = vsel %vm901, %v872, 0
  %v939 = vsel %vm901, %v873, 0
  %v942 = vsel %vm901, %v874, 0
  %v945 = vsel %vm901, %v875, 0
  %v948 = vsel %vm901, %v876, 0
  %v951 = vsel %vm901, %v877, 0
  %v954 = vsel %vm901, %v878, 0
  %v957 = vsel %vm901, %v879, 0
  %v960 = vsel %vm901, %v880, 0
  %v963 = vsel %vm901, %v881, 0
  %v966 = vsel %vm901, %v882, 0
  %v969 = vsel %vm901, %v883, 0
  %v972 = vsel %vm901, %v884, 0
  %v975 = vsel %vm901, %v885, 0
  %v978 = vsel %vm901, %v886, 0
  %v981 = vsel %vm901, %v887, 0
  %v984 = vsel %vm901, %v888, 0
  %v987 = vsel %vm901, %v889, 0
  %v990 = vsel %vm901, %v890, 0
  %v993 = vsel %vm901, %v891, 0
  %v996 = vsel %vm901, %v892, 0
  %v999 = vsel %vm901, %v893, 0
  %1001 = vmatprep.subr.mxu0 0.0
  %1002 = vmatpush1.xpose.msra.mxu0 %v951
  %1003 = vmatprep.subr.mxu0 0.0
  %1004 = vmatpush1.xpose.msra.mxu0 %v948
  %1005 = vmatprep.subr.mxu0 0.0
  %1006 = vmatpush1.xpose.msra.mxu0 %v945
  %1007 = vmatprep.subr.mxu0 0.0
  %1008 = vmatpush1.xpose.msra.mxu0 %v942
  %1009 = vmatprep.subr.mxu0 0.0
  %1010 = vmatpush1.xpose.msra.mxu0 %v939
  %1011 = vmatprep.subr.mxu0 0.0
  %1012 = vmatpush1.xpose.msra.mxu0 %v936
  %1013 = vmatprep.subr.mxu0 0.0
  %1014 = vmatpush1.xpose.msra.mxu0 %v933
  %1015 = vmatprep.subr.mxu0 0.0
  %1016 = vmatpush1.xpose.msra.mxu0 %v930
  %1017 = vmatprep.subr.mxu0 0.0
  %1018 = vmatpush1.xpose.msra.mxu0 %v927
  %1019 = vmatprep.subr.mxu0 0.0
  %1020 = vmatpush1.xpose.msra.mxu0 %v924
  %1021 = vmatprep.subr.mxu0 0.0
  %1022 = vmatpush1.xpose.msra.mxu0 %v921
  %1023 = vmatprep.subr.mxu0 0.0
  %1024 = vmatpush1.xpose.msra.mxu0 %v918
  %1025 = vmatprep.subr.mxu0 0.0
  %1026 = vmatpush1.xpose.msra.mxu0 %v915
  %1027 = vmatprep.subr.mxu0 0.0
  %1028 = vmatpush1.xpose.msra.mxu0 %v912
  %1029 = vmatprep.subr.mxu0 0.0
  %1030 = vmatpush1.xpose.msra.mxu0 %v909
  %1031 = vmatprep.subr.mxu0 0.0
  %1032 = vmatpush1.xpose.msra.mxu0 %v906
  %1033 = vmatprep.subr.mxu0 0.0
  %1034 = vmatpush2.xpose.msra.mxu0 %v999
  %1035 = vmatprep.subr.mxu0 0.0
  %1036 = vmatpush2.xpose.msra.mxu0 %v996
  %1037 = vmatprep.subr.mxu0 0.0
  %1038 = vmatpush2.xpose.msra.mxu0 %v993
  %1039 = vmatprep.subr.mxu0 0.0
  %1040 = vmatpush2.xpose.msra.mxu0 %v990
  %1041 = vmatprep.subr.mxu0 0.0
  %1042 = vmatpush2.xpose.msra.mxu0 %v987
  %1043 = vmatprep.subr.mxu0 0.0
  %1044 = vmatpush2.xpose.msra.mxu0 %v984
  %1045 = vmatprep.subr.mxu0 0.0
  %1046 = vmatpush2.xpose.msra.mxu0 %v981
  %1047 = vmatprep.subr.mxu0 0.0
  %1048 = vmatpush2.xpose.msra.mxu0 %v978
  %1049 = vmatprep.subr.mxu0 0.0
  %1050 = vmatpush2.xpose.msra.mxu0 %v975
  %1051 = vmatprep.subr.mxu0 0.0
  %1052 = vmatpush2.xpose.msra.mxu0 %v972
  %1053 = vmatprep.subr.mxu0 0.0
  %1054 = vmatpush2.xpose.msra.mxu0 %v969
  %1055 = vmatprep.subr.mxu0 0.0
  %1056 = vmatpush2.xpose.msra.mxu0 %v966
  %1057 = vmatprep.subr.mxu0 0.0
  %1058 = vmatpush2.xpose.msra.mxu0 %v963
  %1059 = vmatprep.subr.mxu0 0.0
  %1060 = vmatpush2.xpose.msra.mxu0 %v960
  %1061 = vmatprep.subr.mxu0 0.0
  %1062 = vmatpush2.xpose.msra.mxu0 %v957
  %1063 = vmatprep.subr.mxu0 0.0
  %1064 = vmatpush2.xpose.msra.mxu0 %v954
  %1065 = vmatprep.mubr.f32.mxu0 0.0
  %1066 = vmatmul.mubr.f32.gmra.mxu0 %v903
  %v1067 = vpop.f32.mrf.mxu0
  %v1068 = vadd.f32 %v899, %v1067
  %v1069 = vpop.f32.mrf.mxu0
  %v1070 = vadd.f32 %v899, %v1069
  %1071 = vdwg.mxu0
  %1072 = vst [vmem:[%s5] sm:$0x3f] %v1068
  %1073 = vst [vmem:[%s5 + $0x8] sm:$0x3f] %v1070
  // Predicated region
  $region22: #{_lambda_.7} parent=0 // pred_check
    _
  $region23: #{_lambda_.7} parent=0 // pred_check_branch
    %1075 = sbr.rel (0) target = $region25
  $region24: #{_lambda_.7} parent=0 // pred_region
    _
  $region25: #{_lambda_.7} parent=0 // pred_fallthru
    _
  // Predicated region
  $region26: #{_lambda_.7} parent=0 // pred_check
    _
  $region27: #{_lambda_.7} parent=0 // pred_check_branch
    %1077 = sbr.rel (0) target = $region29
  $region28: #{_lambda_.7} parent=0 // pred_region
    _
  $region29: #{_lambda_.7} parent=0 // pred_fallthru
    _

// kernel: _lambda_.10
$region0: #{_lambda_.10}
  #allocation0 [shape = 'u32[]', space=smem, size = 0x4, offset = 0x4, fixed_abs, tag = 'smem constant byte address 0x4 - core index']
  #allocation1 [shape = 'u32[144,128]{1,0:T(1,128)}', space=vmem, size = 0x12000, scoped, tag = 'internal scratch']
  %s0 = inlined_call_operand.vmem [shape: f32[4,256], index: 0, kind: input, shape index: {}]
  %s1 = inlined_call_operand.vmem [shape: f32[1,256], index: 1, kind: input, shape index: {}]
  %s2 = inlined_call_operand.vmem [shape: f32[3,4], index: 2, kind: input, shape index: {}]
  %s3 = inlined_call_operand.vmem [shape: f32[1,256], index: 3, kind: output, shape index: {0}]
  %s4 = inlined_call_operand.vmem [shape: s32[1,256], index: 4, kind: output, shape index: {1}]
  %s5 = inlined_call_operand.vmem [shape: f32[1,256], index: 5, kind: output, shape index: {2}]
  %6 = xla_tuple %s3, %s4, %s5
  %s7 = sld [smem:[#allocation0]]
  $region42: #{_lambda_.10} parent=0
    _
  %s9 = ssub.s32 1, %s7
  %s10 = scalar_select 0, %s9, %s7
  $region1: #{_lambda_.10} parent=0
    #allocation2 [shape = 'u8[2048]{0}', space=smem, size = 0x800, scoped, tag = 'input window, operand 2, single buffered']
    #allocation3 [shape = 's32[1]{0}', space=sflag, size = 0x4, scoped, tag = 'scoped memory for _lambda_.10']
    %11 = vsyncpa [#allocation3], 0
    // Predicated region
    $region2: #{_lambda_.10} parent=1 // pred_check
      _
    $region3: #{_lambda_.10} parent=1 // pred_check_branch
      %13 = sbr.rel (0) target = $region5
    $region4: #{_lambda_.10} parent=1 // pred_region
      _
    $region5: #{_lambda_.10} parent=1 // pred_fallthru
      _
    // Predicated region
    $region6: #{_lambda_.10} parent=1 // pred_check
      _
    $region7: #{_lambda_.10} parent=1 // pred_check_branch
      %15 = sbr.rel (0) target = $region9
    $region8: #{_lambda_.10} parent=1 // pred_region
      _
    $region9: #{_lambda_.10} parent=1 // pred_fallthru
      _
    // Predicated region
    $region10: #{_lambda_.10} parent=1 // pred_check
      _
    $region11: #{_lambda_.10} parent=1 // pred_check_branch
      %17 = sbr.rel (0) target = $region13
    $region12: #{_lambda_.10} parent=1 // pred_region
      %s19 = ssub.s32 64, 64
      %20 = vsyncadd [#allocation3], %s19
      %s22 = sshll.u32 %s2, 4
      %s23 = int_to_ptr.vmem [resolvable:$true] %s22
      %25 = dma.vmem_to_smem %s23, 64, [#allocation2], [#allocation3]
    $region13: #{_lambda_.10} parent=1 // pred_fallthru
      _
    // Predicated region
    $region14: #{_lambda_.10} parent=1 // pred_check
      _
    $region15: #{_lambda_.10} parent=1 // pred_check_branch
      %27 = sbr.rel (0) target = $region17
    $region16: #{_lambda_.10} parent=1 // pred_region
      %28 = dma.done [#allocation3], 64
    $region17: #{_lambda_.10} parent=1 // pred_fallthru
      _
    %29 = sfence
    %v30 = vld [vmem:[%s0] ss:$4 sm:$0x3]
    %s31 = scalar_lea.vmem %s0, 1
    %v32 = vld [vmem:[%s31] ss:$4 sm:$0x3]
    %s33 = scalar_lea.vmem %s0, 2
    %v34 = vld [vmem:[%s33] ss:$4 sm:$0x3]
    %s35 = scalar_lea.vmem %s0, 3
    %v36 = vld [vmem:[%s35] ss:$4 sm:$0x3]
    %v37 = vsub.f32 %v34, %v30
    %v38 = vsub.f32 %v36, %v32
    %v39 = vmul.f32 %v37, %v38
    %v40 = vld [vmem:[%s1] sm:$0x3]
    %s41 = sld [smem:[#allocation2]]
    %s42 = sld [smem:[#allocation2 + $0x1]]
    %s43 = sld [smem:[#allocation2 + $0x2]]
    %s44 = sld [smem:[#allocation2 + $0x3]]
    %v45 = vstv %s41
    %v46 = vmax.f32 %v30, %v45
    %v47 = vstv %s42
    %v48 = vmax.f32 %v32, %v47
    %v49 = vstv %s43
    %v50 = vmin.f32 %v34, %v49
    %v51 = vstv %s44
    %v52 = vmin.f32 %v36, %v51
    %v53 = vsub.f32 %v50, %v46
    %v54 = vsub.f32 %v52, %v48
    %vm55 = vcmp.gt.f32.partialorder %v53, 0.0
    %vm56 = vcmp.gt.f32.partialorder %v54, 0.0
    %vm57 = vmand %vm55, %vm56
    %v58 = vmul.f32 %v53, %v54
    %v59 = vsel %vm57, %v58, 0.0
    %s60 = ssub.f32 %s43, %s41
    %s61 = ssub.f32 %s44, %s42
    %s62 = smul.f32 %s60, %s61
    %v63 = vstv %s62
    %v64 = vadd.f32 %v39, %v63
    %v65 = vsub.f32 %v64, %v59
    %v66 = vadd.f32 %v65, 1e-10
    %v67 = vrcp.pop %v66
    %v68 = vmul.f32 %v59, %v67
    %vm69 = vcmp.gt.f32.partialorder %v68, -1.0
    %v70 = vsel %vm69, %v68, -1.0
    %vm71 = vcmp.gt.f32.partialorder %v40, 0.0
    %v72 = vsel %vm71, %v68, -1.0
    %v74 = vlaneseq
    %v75 = vshrl.u32 %v74, 7
    %v76 = vsub.s32 0, %v75
    %v77 = vrot.slane %v72, %v76
    %v78 = vlaneseq
    %v79 = vshrl.u32 %v78, 7
    %v80 = vsub.s32 1, %v79
    %v81 = vrot.slane %v72, %v80
    %vm84 = vcmask 1040384
    %v85 = vsel %vm84, %v77, -inf
    %v86 = vsel %vm84, %v81, -inf
    %v87 = vmax.f32 %v85, %v86
    %88 = vmax.xlane.f32.xlu0 %v87
    %v89 = vpop.xlane.xlu0 %88
    %v91 = vlaneseq
    %v92 = vshrl.u32 %v91, 7
    %v93 = vsub.s32 0, %v92
    %v94 = vrot.slane %v89, %v93
    %vm96 = vcmp.ge.f32.partialorder %v72, %v94
    %v97 = vsel %vm96, 1, 0
    %v98 = vcvt.s32.f32 %v97
    %v99 = vmax.f32 %v98, 0.0
    %s100 = sld [smem:[#allocation2 + $0x80]]
    %s101 = sld [smem:[#allocation2 + $0x81]]
    %s102 = sld [smem:[#allocation2 + $0x82]]
    %s103 = sld [smem:[#allocation2 + $0x83]]
    %v104 = vstv %s100
    %v105 = vmax.f32 %v30, %v104
    %v106 = vstv %s101
    %v107 = vmax.f32 %v32, %v106
    %v108 = vstv %s102
    %v109 = vmin.f32 %v34, %v108
    %v110 = vstv %s103
    %v111 = vmin.f32 %v36, %v110
    %v112 = vsub.f32 %v109, %v105
    %v113 = vsub.f32 %v111, %v107
    %vm114 = vcmp.gt.f32.partialorder %v112, 0.0
    %vm115 = vcmp.gt.f32.partialorder %v113, 0.0
    %vm116 = vmand %vm114, %vm115
    %v117 = vmul.f32 %v112, %v113
    %v118 = vsel %vm116, %v117, 0.0
    %s119 = ssub.f32 %s102, %s100
    %s120 = ssub.f32 %s103, %s101
    %s121 = smul.f32 %s119, %s120
    %v122 = vstv %s121
    %v123 = vadd.f32 %v39, %v122
    %v124 = vsub.f32 %v123, %v118
    %v125 = vadd.f32 %v124, 1e-10
    %v126 = vrcp.pop %v125
    %v127 = vmul.f32 %v118, %v126
    %vm128 = vcmp.gt.f32.partialorder %v127, %v70
    %v129 = vsel %vm128, %v127, %v70
    %v130 = vsel %vm128, 1, 0
    %v131 = vsel %vm71, %v127, -1.0
    %v133 = vlaneseq
    %v134 = vshrl.u32 %v133, 7
    %v135 = vsub.s32 0, %v134
    %v136 = vrot.slane %v131, %v135
    %v137 = vlaneseq
    %v138 = vshrl.u32 %v137, 7
    %v139 = vsub.s32 1, %v138
    %v140 = vrot.slane %v131, %v139
    %v143 = vsel %vm84, %v136, -inf
    %v144 = vsel %vm84, %v140, -inf
    %v145 = vmax.f32 %v143, %v144
    %146 = vmax.xlane.f32.xlu0 %v145
    %v147 = vpop.xlane.xlu0 %146
    %v149 = vlaneseq
    %v150 = vshrl.u32 %v149, 7
    %v151 = vsub.s32 0, %v150
    %v152 = vrot.slane %v147, %v151
    %vm154 = vcmp.ge.f32.partialorder %v131, %v152
    %v155 = vsel %vm154, 1, 0
    %v156 = vcvt.s32.f32 %v155
    %v157 = vmax.f32 %v99, %v156
    %s158 = sld [smem:[#allocation2 + $0x100]]
    %s159 = sld [smem:[#allocation2 + $0x101]]
    %s160 = sld [smem:[#allocation2 + $0x102]]
    %s161 = sld [smem:[#allocation2 + $0x103]]
    %v162 = vstv %s158
    %v163 = vmax.f32 %v30, %v162
    %v164 = vstv %s159
    %v165 = vmax.f32 %v32, %v164
    %v166 = vstv %s160
    %v167 = vmin.f32 %v34, %v166
    %v168 = vstv %s161
    %v169 = vmin.f32 %v36, %v168
    %v170 = vsub.f32 %v167, %v163
    %v171 = vsub.f32 %v169, %v165
    %vm172 = vcmp.gt.f32.partialorder %v170, 0.0
    %vm173 = vcmp.gt.f32.partialorder %v171, 0.0
    %vm174 = vmand %vm172, %vm173
    %v175 = vmul.f32 %v170, %v171
    %v176 = vsel %vm174, %v175, 0.0
    %s177 = ssub.f32 %s160, %s158
    %s178 = ssub.f32 %s161, %s159
    %s179 = smul.f32 %s177, %s178
    %v180 = vstv %s179
    %v181 = vadd.f32 %v39, %v180
    %v182 = vsub.f32 %v181, %v176
    %v183 = vadd.f32 %v182, 1e-10
    %v184 = vrcp.pop %v183
    %v185 = vmul.f32 %v176, %v184
    %vm186 = vcmp.gt.f32.partialorder %v185, %v129
    %v187 = vsel %vm186, %v185, %v129
    %v188 = vsel %vm186, 2, %v130
    %v189 = vsel %vm71, %v185, -1.0
    %v191 = vlaneseq
    %v192 = vshrl.u32 %v191, 7
    %v193 = vsub.s32 0, %v192
    %v194 = vrot.slane %v189, %v193
    %v195 = vlaneseq
    %v196 = vshrl.u32 %v195, 7
    %v197 = vsub.s32 1, %v196
    %v198 = vrot.slane %v189, %v197
    %v201 = vsel %vm84, %v194, -inf
    %v202 = vsel %vm84, %v198, -inf
    %v203 = vmax.f32 %v201, %v202
    %204 = vmax.xlane.f32.xlu0 %v203
    %v205 = vpop.xlane.xlu0 %204
    %v207 = vlaneseq
    %v208 = vshrl.u32 %v207, 7
    %v209 = vsub.s32 0, %v208
    %v210 = vrot.slane %v205, %v209
    %vm212 = vcmp.ge.f32.partialorder %v189, %v210
    %v213 = vsel %vm212, 1, 0
    %v214 = vcvt.s32.f32 %v213
    %v215 = vmax.f32 %v157, %v214
    %v216 = vlaneseq
    %vm217 = vcmp.ge.s32.totalorder %v216, 0
    %vm218 = vcmp.lt.s32.totalorder %v216, 256
    %vm219 = vmand %vm217, %vm218
    %220 = vst.msk [vmem:[%s3] sm:$0x3] %vm219, %v187
    %221 = vst.msk [vmem:[%s4] sm:$0x3] %vm219, %v188
    %222 = vst.msk [vmem:[%s5] sm:$0x3] %vm219, %v215
    // Predicated region
    $region18: #{_lambda_.10} parent=1 // pred_check
      _
    $region19: #{_lambda_.10} parent=1 // pred_check_branch
      %224 = sbr.rel (0) target = $region21
    $region20: #{_lambda_.10} parent=1 // pred_region
      _
    $region21: #{_lambda_.10} parent=1 // pred_fallthru
      _
    // Predicated region
    $region22: #{_lambda_.10} parent=1 // pred_check
      _
    $region23: #{_lambda_.10} parent=1 // pred_check_branch
      %226 = sbr.rel (0) target = $region25
    $region24: #{_lambda_.10} parent=1 // pred_region
      _
    $region25: #{_lambda_.10} parent=1 // pred_fallthru
      _
    // Predicated region
    $region26: #{_lambda_.10} parent=1 // pred_check
      _
    $region27: #{_lambda_.10} parent=1 // pred_check_branch
      %228 = sbr.rel (0) target = $region29
    $region28: #{_lambda_.10} parent=1 // pred_region
      _
    $region29: #{_lambda_.10} parent=1 // pred_fallthru
      _
    // Predicated region
    $region30: #{_lambda_.10} parent=1 // pred_check
      _
    $region31: #{_lambda_.10} parent=1 // pred_check_branch
      %230 = sbr.rel (0) target = $region33
    $region32: #{_lambda_.10} parent=1 // pred_region
      _
    $region33: #{_lambda_.10} parent=1 // pred_fallthru
      _
    // Predicated region
    $region34: #{_lambda_.10} parent=1 // pred_check
      _
    $region35: #{_lambda_.10} parent=1 // pred_check_branch
      %232 = sbr.rel (0) target = $region37
    $region36: #{_lambda_.10} parent=1 // pred_region
      _
    $region37: #{_lambda_.10} parent=1 // pred_fallthru
      _
    // Predicated region
    $region38: #{_lambda_.10} parent=1 // pred_check
      _
    $region39: #{_lambda_.10} parent=1 // pred_check_branch
      %234 = sbr.rel (0) target = $region41
    $region40: #{_lambda_.10} parent=1 // pred_region
      _
    $region41: #{_lambda_.10} parent=1 // pred_fallthru
      _
    %235 = vsyncpa [#allocation3], 1

// kernel: _lambda_.9
$region0: #{_lambda_.9}
  #allocation0 [shape = 'u32[]', space=smem, size = 0x4, offset = 0x4, fixed_abs, tag = 'smem constant byte address 0x4 - core index']
  #allocation1 [shape = 'u32[144,128]{1,0:T(1,128)}', space=vmem, size = 0x12000, scoped, tag = 'internal scratch']
  #allocation2 [shape = 'f32[128,32]{1,0:T(8,128)}', space=vmem, size = 0x10000, scoped, tag = 'scratch operand']
  #allocation3 [shape = 'f32[128,1]{1,0:T(8,128)}', space=vmem, size = 0x10000, scoped, tag = 'scratch operand']
  %s0 = inlined_call_operand.vmem [shape: f32[128,4], index: 0, kind: input, shape index: {}]
  %s1 = inlined_call_operand.vmem [shape: f32[2,256], index: 1, kind: input, shape index: {}]
  %s2 = inlined_call_operand.vmem [shape: bf16[256,32], index: 2, kind: input, shape index: {}]
  %s3 = inlined_call_operand.vmem [shape: bf16[32,64], index: 3, kind: input, shape index: {}]
  %s4 = inlined_call_operand.vmem [shape: f32[1,64], index: 4, kind: input, shape index: {}]
  %s5 = inlined_call_operand.vmem [shape: f32[15,64], index: 5, kind: input, shape index: {}]
  %s6 = inlined_call_operand.vmem [shape: f32[15,1], index: 6, kind: input, shape index: {}]
  %s7 = inlined_call_operand.vmem [shape: f32[15,128], index: 7, kind: output, shape index: {}]
  %s8 = sld [smem:[#allocation0]]
  $region46: #{_lambda_.9} parent=0
    _
  %s10 = ssub.s32 1, %s8
  %s11 = scalar_select 0, %s10, %s8
  // Predicated region
  $region2: #{_lambda_.9} parent=0 // pred_check
    _
  $region3: #{_lambda_.9} parent=0 // pred_check_branch
    %13 = sbr.rel (0) target = $region5
  $region4: #{_lambda_.9} parent=0 // pred_region
    _
  $region5: #{_lambda_.9} parent=0 // pred_fallthru
    _
  // Predicated region
  $region6: #{_lambda_.9} parent=0 // pred_check
    _
  $region7: #{_lambda_.9} parent=0 // pred_check_branch
    %15 = sbr.rel (0) target = $region9
  $region8: #{_lambda_.9} parent=0 // pred_region
    _
  $region9: #{_lambda_.9} parent=0 // pred_fallthru
    _
  // Predicated region
  $region10: #{_lambda_.9} parent=0 // pred_check
    _
  $region11: #{_lambda_.9} parent=0 // pred_check_branch
    %17 = sbr.rel (0) target = $region13
  $region12: #{_lambda_.9} parent=0 // pred_region
    _
  $region13: #{_lambda_.9} parent=0 // pred_fallthru
    _
  // Predicated region
  $region14: #{_lambda_.9} parent=0 // pred_check
    _
  $region15: #{_lambda_.9} parent=0 // pred_check_branch
    %19 = sbr.rel (0) target = $region17
  $region16: #{_lambda_.9} parent=0 // pred_region
    _
  $region17: #{_lambda_.9} parent=0 // pred_fallthru
    _
  // Predicated region
  $region18: #{_lambda_.9} parent=0 // pred_check
    _
  $region19: #{_lambda_.9} parent=0 // pred_check_branch
    %21 = sbr.rel (0) target = $region21
  $region20: #{_lambda_.9} parent=0 // pred_region
    _
  $region21: #{_lambda_.9} parent=0 // pred_fallthru
    _
  // Predicated region
  $region22: #{_lambda_.9} parent=0 // pred_check
    _
  $region23: #{_lambda_.9} parent=0 // pred_check_branch
    %23 = sbr.rel (0) target = $region25
  $region24: #{_lambda_.9} parent=0 // pred_region
    _
  $region25: #{_lambda_.9} parent=0 // pred_fallthru
    _
  // Predicated region
  $region26: #{_lambda_.9} parent=0 // pred_check
    _
  $region27: #{_lambda_.9} parent=0 // pred_check_branch
    %25 = sbr.rel (0) target = $region29
  $region28: #{_lambda_.9} parent=0 // pred_region
    _
  $region29: #{_lambda_.9} parent=0 // pred_fallthru
    _
  %p27 = scmp.eq.s32.totalorder 0, 0
  // Predicated region
  $region30: #{_lambda_.9} parent=0 // pred_check
    %p28 = pneg %p27
  $region31: #{_lambda_.9} parent=0 // pred_check_branch
    %30 = sbr.rel (%p28) target = $region33
  $region32: #{_lambda_.9} parent=0 // pred_region
    %vm31 = vcmask 261120
    %32 = vst.msk [vmem:[#allocation2] sm:$0xff] %vm31, 0.0
    %33 = vst.msk [vmem:[#allocation2 + $0x8] sm:$0xff] %vm31, 0.0
    %34 = vst.msk [vmem:[#allocation2 + $0x10] sm:$0xff] %vm31, 0.0
    %35 = vst.msk [vmem:[#allocation2 + $0x18] sm:$0xff] %vm31, 0.0
    %36 = vst.msk [vmem:[#allocation2 + $0x20] sm:$0xff] %vm31, 0.0
    %37 = vst.msk [vmem:[#allocation2 + $0x28] sm:$0xff] %vm31, 0.0
    %38 = vst.msk [vmem:[#allocation2 + $0x30] sm:$0xff] %vm31, 0.0
    %39 = vst.msk [vmem:[#allocation2 + $0x38] sm:$0xff] %vm31, 0.0
    %40 = vst.msk [vmem:[#allocation2 + $0x40] sm:$0xff] %vm31, 0.0
    %41 = vst.msk [vmem:[#allocation2 + $0x48] sm:$0xff] %vm31, 0.0
    %42 = vst.msk [vmem:[#allocation2 + $0x50] sm:$0xff] %vm31, 0.0
    %43 = vst.msk [vmem:[#allocation2 + $0x58] sm:$0xff] %vm31, 0.0
    %44 = vst.msk [vmem:[#allocation2 + $0x60] sm:$0xff] %vm31, 0.0
    %45 = vst.msk [vmem:[#allocation2 + $0x68] sm:$0xff] %vm31, 0.0
    %46 = vst.msk [vmem:[#allocation2 + $0x70] sm:$0xff] %vm31, 0.0
    %47 = vst.msk [vmem:[#allocation2 + $0x78] sm:$0xff] %vm31, 0.0
    %vm48 = vcmask 7168
    %49 = vst.msk [vmem:[#allocation3] sm:$0xff] %vm48, 0.0
    %50 = vst.msk [vmem:[#allocation3 + $0x8] sm:$0xff] %vm48, 0.0
    %51 = vst.msk [vmem:[#allocation3 + $0x10] sm:$0xff] %vm48, 0.0
    %52 = vst.msk [vmem:[#allocation3 + $0x18] sm:$0xff] %vm48, 0.0
    %53 = vst.msk [vmem:[#allocation3 + $0x20] sm:$0xff] %vm48, 0.0
    %54 = vst.msk [vmem:[#allocation3 + $0x28] sm:$0xff] %vm48, 0.0
    %55 = vst.msk [vmem:[#allocation3 + $0x30] sm:$0xff] %vm48, 0.0
    %56 = vst.msk [vmem:[#allocation3 + $0x38] sm:$0xff] %vm48, 0.0
    %57 = vst.msk [vmem:[#allocation3 + $0x40] sm:$0xff] %vm48, 0.0
    %58 = vst.msk [vmem:[#allocation3 + $0x48] sm:$0xff] %vm48, 0.0
    %59 = vst.msk [vmem:[#allocation3 + $0x50] sm:$0xff] %vm48, 0.0
    %60 = vst.msk [vmem:[#allocation3 + $0x58] sm:$0xff] %vm48, 0.0
    %61 = vst.msk [vmem:[#allocation3 + $0x60] sm:$0xff] %vm48, 0.0
    %62 = vst.msk [vmem:[#allocation3 + $0x68] sm:$0xff] %vm48, 0.0
    %63 = vst.msk [vmem:[#allocation3 + $0x70] sm:$0xff] %vm48, 0.0
    %64 = vst.msk [vmem:[#allocation3 + $0x78] sm:$0xff] %vm48, 0.0
  $region33: #{_lambda_.9} parent=0 // pred_fallthru
    _
  %v65 = vld [vmem:[%s1] ss:$2 sm:$0x3]
  %s66 = scalar_lea.vmem %s1, 1
  %v67 = vld [vmem:[%s66] ss:$2 sm:$0x3]
  %v68 = vld [vmem:[%s0] sm:$0xff]
  %v69 = vld [vmem:[%s0 + $0x8] sm:$0xff]
  %v70 = vld [vmem:[%s0 + $0x10] sm:$0xff]
  %v71 = vld [vmem:[%s0 + $0x18] sm:$0xff]
  %v72 = vld [vmem:[%s0 + $0x20] sm:$0xff]
  %v73 = vld [vmem:[%s0 + $0x28] sm:$0xff]
  %v74 = vld [vmem:[%s0 + $0x30] sm:$0xff]
  %v75 = vld [vmem:[%s0 + $0x38] sm:$0xff]
  %v76 = vld [vmem:[%s0 + $0x40] sm:$0xff]
  %v77 = vld [vmem:[%s0 + $0x48] sm:$0xff]
  %v78 = vld [vmem:[%s0 + $0x50] sm:$0xff]
  %v79 = vld [vmem:[%s0 + $0x58] sm:$0xff]
  %v80 = vld [vmem:[%s0 + $0x60] sm:$0xff]
  %v81 = vld [vmem:[%s0 + $0x68] sm:$0xff]
  %v82 = vld [vmem:[%s0 + $0x70] sm:$0xff]
  %v83 = vld [vmem:[%s0 + $0x78] sm:$0xff]
  %v85 = vlaneseq
  %v86 = vshrl.u32 %v85, 7
  %v87 = vsub.s32 0, %v86
  %v88 = vrot.slane %v65, %v87
  %v89 = vlaneseq
  %v90 = vshrl.u32 %v89, 7
  %v91 = vsub.s32 1, %v90
  %v92 = vrot.slane %v65, %v91
  %96 = vset.pattern.permute.xlu0 0
  %97 = vperm.xlu0 %96, %v68
  %v98 = vpop.permute.xlu0 %97
  %101 = vset.pattern.permute.xlu0 0
  %102 = vperm.xlu0 %101, %v69
  %v103 = vpop.permute.xlu0 %102
  %106 = vset.pattern.permute.xlu0 0
  %107 = vperm.xlu0 %106, %v70
  %v108 = vpop.permute.xlu0 %107
  %111 = vset.pattern.permute.xlu0 0
  %112 = vperm.xlu0 %111, %v71
  %v113 = vpop.permute.xlu0 %112
  %116 = vset.pattern.permute.xlu0 0
  %117 = vperm.xlu0 %116, %v72
  %v118 = vpop.permute.xlu0 %117
  %121 = vset.pattern.permute.xlu0 0
  %122 = vperm.xlu0 %121, %v73
  %v123 = vpop.permute.xlu0 %122
  %126 = vset.pattern.permute.xlu0 0
  %127 = vperm.xlu0 %126, %v74
  %v128 = vpop.permute.xlu0 %127
  %131 = vset.pattern.permute.xlu0 0
  %132 = vperm.xlu0 %131, %v75
  %v133 = vpop.permute.xlu0 %132
  %136 = vset.pattern.permute.xlu0 0
  %137 = vperm.xlu0 %136, %v76
  %v138 = vpop.permute.xlu0 %137
  %141 = vset.pattern.permute.xlu0 0
  %142 = vperm.xlu0 %141, %v77
  %v143 = vpop.permute.xlu0 %142
  %146 = vset.pattern.permute.xlu0 0
  %147 = vperm.xlu0 %146, %v78
  %v148 = vpop.permute.xlu0 %147
  %151 = vset.pattern.permute.xlu0 0
  %152 = vperm.xlu0 %151, %v79
  %v153 = vpop.permute.xlu0 %152
  %156 = vset.pattern.permute.xlu0 0
  %157 = vperm.xlu0 %156, %v80
  %v158 = vpop.permute.xlu0 %157
  %161 = vset.pattern.permute.xlu0 0
  %162 = vperm.xlu0 %161, %v81
  %v163 = vpop.permute.xlu0 %162
  %166 = vset.pattern.permute.xlu0 0
  %167 = vperm.xlu0 %166, %v82
  %v168 = vpop.permute.xlu0 %167
  %171 = vset.pattern.permute.xlu0 0
  %172 = vperm.xlu0 %171, %v83
  %v173 = vpop.permute.xlu0 %172
  %vm175 = vcmp.ge.f32.partialorder %v88, %v98
  %vm176 = vcmp.ge.f32.partialorder %v92, %v98
  %vm177 = vcmp.ge.f32.partialorder %v88, %v103
  %vm178 = vcmp.ge.f32.partialorder %v92, %v103
  %vm179 = vcmp.ge.f32.partialorder %v88, %v108
  %vm180 = vcmp.ge.f32.partialorder %v92, %v108
  %vm181 = vcmp.ge.f32.partialorder %v88, %v113
  %vm182 = vcmp.ge.f32.partialorder %v92, %v113
  %vm183 = vcmp.ge.f32.partialorder %v88, %v118
  %vm184 = vcmp.ge.f32.partialorder %v92, %v118
  %vm185 = vcmp.ge.f32.partialorder %v88, %v123
  %vm186 = vcmp.ge.f32.partialorder %v92, %v123
  %vm187 = vcmp.ge.f32.partialorder %v88, %v128
  %vm188 = vcmp.ge.f32.partialorder %v92, %v128
  %vm189 = vcmp.ge.f32.partialorder %v88, %v133
  %vm190 = vcmp.ge.f32.partialorder %v92, %v133
  %vm191 = vcmp.ge.f32.partialorder %v88, %v138
  %vm192 = vcmp.ge.f32.partialorder %v92, %v138
  %vm193 = vcmp.ge.f32.partialorder %v88, %v143
  %vm194 = vcmp.ge.f32.partialorder %v92, %v143
  %vm195 = vcmp.ge.f32.partialorder %v88, %v148
  %vm196 = vcmp.ge.f32.partialorder %v92, %v148
  %vm197 = vcmp.ge.f32.partialorder %v88, %v153
  %vm198 = vcmp.ge.f32.partialorder %v92, %v153
  %vm199 = vcmp.ge.f32.partialorder %v88, %v158
  %vm200 = vcmp.ge.f32.partialorder %v92, %v158
  %vm201 = vcmp.ge.f32.partialorder %v88, %v163
  %vm202 = vcmp.ge.f32.partialorder %v92, %v163
  %vm203 = vcmp.ge.f32.partialorder %v88, %v168
  %vm204 = vcmp.ge.f32.partialorder %v92, %v168
  %vm205 = vcmp.ge.f32.partialorder %v88, %v173
  %vm206 = vcmp.ge.f32.partialorder %v92, %v173
  %207 = vset.pattern.permute.xlu0 2
  %208 = vperm.xlu0 %207, %v68
  %v209 = vpop.permute.xlu0 %208
  %211 = vset.pattern.permute.xlu0 2
  %212 = vperm.xlu0 %211, %v69
  %v213 = vpop.permute.xlu0 %212
  %215 = vset.pattern.permute.xlu0 2
  %216 = vperm.xlu0 %215, %v70
  %v217 = vpop.permute.xlu0 %216
  %219 = vset.pattern.permute.xlu0 2
  %220 = vperm.xlu0 %219, %v71
  %v221 = vpop.permute.xlu0 %220
  %223 = vset.pattern.permute.xlu0 2
  %224 = vperm.xlu0 %223, %v72
  %v225 = vpop.permute.xlu0 %224
  %227 = vset.pattern.permute.xlu0 2
  %228 = vperm.xlu0 %227, %v73
  %v229 = vpop.permute.xlu0 %228
  %231 = vset.pattern.permute.xlu0 2
  %232 = vperm.xlu0 %231, %v74
  %v233 = vpop.permute.xlu0 %232
  %235 = vset.pattern.permute.xlu0 2
  %236 = vperm.xlu0 %235, %v75
  %v237 = vpop.permute.xlu0 %236
  %239 = vset.pattern.permute.xlu0 2
  %240 = vperm.xlu0 %239, %v76
  %v241 = vpop.permute.xlu0 %240
  %243 = vset.pattern.permute.xlu0 2
  %244 = vperm.xlu0 %243, %v77
  %v245 = vpop.permute.xlu0 %244
  %247 = vset.pattern.permute.xlu0 2
  %248 = vperm.xlu0 %247, %v78
  %v249 = vpop.permute.xlu0 %248
  %251 = vset.pattern.permute.xlu0 2
  %252 = vperm.xlu0 %251, %v79
  %v253 = vpop.permute.xlu0 %252
  %255 = vset.pattern.permute.xlu0 2
  %256 = vperm.xlu0 %255, %v80
  %v257 = vpop.permute.xlu0 %256
  %259 = vset.pattern.permute.xlu0 2
  %260 = vperm.xlu0 %259, %v81
  %v261 = vpop.permute.xlu0 %260
  %263 = vset.pattern.permute.xlu0 2
  %264 = vperm.xlu0 %263, %v82
  %v265 = vpop.permute.xlu0 %264
  %267 = vset.pattern.permute.xlu0 2
  %268 = vperm.xlu0 %267, %v83
  %v269 = vpop.permute.xlu0 %268
  %vm271 = vcmp.le.f32.partialorder %v88, %v209
  %vm272 = vcmp.le.f32.partialorder %v92, %v209
  %vm273 = vcmp.le.f32.partialorder %v88, %v213
  %vm274 = vcmp.le.f32.partialorder %v92, %v213
  %vm275 = vcmp.le.f32.partialorder %v88, %v217
  %vm276 = vcmp.le.f32.partialorder %v92, %v217
  %vm277 = vcmp.le.f32.partialorder %v88, %v221
  %vm278 = vcmp.le.f32.partialorder %v92, %v221
  %vm279 = vcmp.le.f32.partialorder %v88, %v225
  %vm280 = vcmp.le.f32.partialorder %v92, %v225
  %vm281 = vcmp.le.f32.partialorder %v88, %v229
  %vm282 = vcmp.le.f32.partialorder %v92, %v229
  %vm283 = vcmp.le.f32.partialorder %v88, %v233
  %vm284 = vcmp.le.f32.partialorder %v92, %v233
  %vm285 = vcmp.le.f32.partialorder %v88, %v237
  %vm286 = vcmp.le.f32.partialorder %v92, %v237
  %vm287 = vcmp.le.f32.partialorder %v88, %v241
  %vm288 = vcmp.le.f32.partialorder %v92, %v241
  %vm289 = vcmp.le.f32.partialorder %v88, %v245
  %vm290 = vcmp.le.f32.partialorder %v92, %v245
  %vm291 = vcmp.le.f32.partialorder %v88, %v249
  %vm292 = vcmp.le.f32.partialorder %v92, %v249
  %vm293 = vcmp.le.f32.partialorder %v88, %v253
  %vm294 = vcmp.le.f32.partialorder %v92, %v253
  %vm295 = vcmp.le.f32.partialorder %v88, %v257
  %vm296 = vcmp.le.f32.partialorder %v92, %v257
  %vm297 = vcmp.le.f32.partialorder %v88, %v261
  %vm298 = vcmp.le.f32.partialorder %v92, %v261
  %vm299 = vcmp.le.f32.partialorder %v88, %v265
  %vm300 = vcmp.le.f32.partialorder %v92, %v265
  %vm301 = vcmp.le.f32.partialorder %v88, %v269
  %vm302 = vcmp.le.f32.partialorder %v92, %v269
  %vm303 = vmand %vm175, %vm271
  %vm304 = vmand %vm176, %vm272
  %vm305 = vmand %vm177, %vm273
  %vm306 = vmand %vm178, %vm274
  %vm307 = vmand %vm179, %vm275
  %vm308 = vmand %vm180, %vm276
  %vm309 = vmand %vm181, %vm277
  %vm310 = vmand %vm182, %vm278
  %vm311 = vmand %vm183, %vm279
  %vm312 = vmand %vm184, %vm280
  %vm313 = vmand %vm185, %vm281
  %vm314 = vmand %vm186, %vm282
  %vm315 = vmand %vm187, %vm283
  %vm316 = vmand %vm188, %vm284
  %vm317 = vmand %vm189, %vm285
  %vm318 = vmand %vm190, %vm286
  %vm319 = vmand %vm191, %vm287
  %vm320 = vmand %vm192, %vm288
  %vm321 = vmand %vm193, %vm289
  %vm322 = vmand %vm194, %vm290
  %vm323 = vmand %vm195, %vm291
  %vm324 = vmand %vm196, %vm292
  %vm325 = vmand %vm197, %vm293
  %vm326 = vmand %vm198, %vm294
  %vm327 = vmand %vm199, %vm295
  %vm328 = vmand %vm200, %vm296
  %vm329 = vmand %vm201, %vm297
  %vm330 = vmand %vm202, %vm298
  %vm331 = vmand %vm203, %vm299
  %vm332 = vmand %vm204, %vm300
  %vm333 = vmand %vm205, %vm301
  %vm334 = vmand %vm206, %vm302
  %v336 = vlaneseq
  %v337 = vshrl.u32 %v336, 7
  %v338 = vsub.s32 0, %v337
  %v339 = vrot.slane %v67, %v338
  %v340 = vlaneseq
  %v341 = vshrl.u32 %v340, 7
  %v342 = vsub.s32 1, %v341
  %v343 = vrot.slane %v67, %v342
  %346 = vset.pattern.permute.xlu0 1
  %347 = vperm.xlu0 %346, %v68
  %v348 = vpop.permute.xlu0 %347
  %350 = vset.pattern.permute.xlu0 1
  %351 = vperm.xlu0 %350, %v69
  %v352 = vpop.permute.xlu0 %351
  %354 = vset.pattern.permute.xlu0 1
  %355 = vperm.xlu0 %354, %v70
  %v356 = vpop.permute.xlu0 %355
  %358 = vset.pattern.permute.xlu0 1
  %359 = vperm.xlu0 %358, %v71
  %v360 = vpop.permute.xlu0 %359
  %362 = vset.pattern.permute.xlu0 1
  %363 = vperm.xlu0 %362, %v72
  %v364 = vpop.permute.xlu0 %363
  %366 = vset.pattern.permute.xlu0 1
  %367 = vperm.xlu0 %366, %v73
  %v368 = vpop.permute.xlu0 %367
  %370 = vset.pattern.permute.xlu0 1
  %371 = vperm.xlu0 %370, %v74
  %v372 = vpop.permute.xlu0 %371
  %374 = vset.pattern.permute.xlu0 1
  %375 = vperm.xlu0 %374, %v75
  %v376 = vpop.permute.xlu0 %375
  %378 = vset.pattern.permute.xlu0 1
  %379 = vperm.xlu0 %378, %v76
  %v380 = vpop.permute.xlu0 %379
  %382 = vset.pattern.permute.xlu0 1
  %383 = vperm.xlu0 %382, %v77
  %v384 = vpop.permute.xlu0 %383
  %386 = vset.pattern.permute.xlu0 1
  %387 = vperm.xlu0 %386, %v78
  %v388 = vpop.permute.xlu0 %387
  %390 = vset.pattern.permute.xlu0 1
  %391 = vperm.xlu0 %390, %v79
  %v392 = vpop.permute.xlu0 %391
  %394 = vset.pattern.permute.xlu0 1
  %395 = vperm.xlu0 %394, %v80
  %v396 = vpop.permute.xlu0 %395
  %398 = vset.pattern.permute.xlu0 1
  %399 = vperm.xlu0 %398, %v81
  %v400 = vpop.permute.xlu0 %399
  %402 = vset.pattern.permute.xlu0 1
  %403 = vperm.xlu0 %402, %v82
  %v404 = vpop.permute.xlu0 %403
  %406 = vset.pattern.permute.xlu0 1
  %407 = vperm.xlu0 %406, %v83
  %v408 = vpop.permute.xlu0 %407
  %vm410 = vcmp.ge.f32.partialorder %v339, %v348
  %vm411 = vcmp.ge.f32.partialorder %v343, %v348
  %vm412 = vcmp.ge.f32.partialorder %v339, %v352
  %vm413 = vcmp.ge.f32.partialorder %v343, %v352
  %vm414 = vcmp.ge.f32.partialorder %v339, %v356
  %vm415 = vcmp.ge.f32.partialorder %v343, %v356
  %vm416 = vcmp.ge.f32.partialorder %v339, %v360
  %vm417 = vcmp.ge.f32.partialorder %v343, %v360
  %vm418 = vcmp.ge.f32.partialorder %v339, %v364
  %vm419 = vcmp.ge.f32.partialorder %v343, %v364
  %vm420 = vcmp.ge.f32.partialorder %v339, %v368
  %vm421 = vcmp.ge.f32.partialorder %v343, %v368
  %vm422 = vcmp.ge.f32.partialorder %v339, %v372
  %vm423 = vcmp.ge.f32.partialorder %v343, %v372
  %vm424 = vcmp.ge.f32.partialorder %v339, %v376
  %vm425 = vcmp.ge.f32.partialorder %v343, %v376
  %vm426 = vcmp.ge.f32.partialorder %v339, %v380
  %vm427 = vcmp.ge.f32.partialorder %v343, %v380
  %vm428 = vcmp.ge.f32.partialorder %v339, %v384
  %vm429 = vcmp.ge.f32.partialorder %v343, %v384
  %vm430 = vcmp.ge.f32.partialorder %v339, %v388
  %vm431 = vcmp.ge.f32.partialorder %v343, %v388
  %vm432 = vcmp.ge.f32.partialorder %v339, %v392
  %vm433 = vcmp.ge.f32.partialorder %v343, %v392
  %vm434 = vcmp.ge.f32.partialorder %v339, %v396
  %vm435 = vcmp.ge.f32.partialorder %v343, %v396
  %vm436 = vcmp.ge.f32.partialorder %v339, %v400
  %vm437 = vcmp.ge.f32.partialorder %v343, %v400
  %vm438 = vcmp.ge.f32.partialorder %v339, %v404
  %vm439 = vcmp.ge.f32.partialorder %v343, %v404
  %vm440 = vcmp.ge.f32.partialorder %v339, %v408
  %vm441 = vcmp.ge.f32.partialorder %v343, %v408
  %vm442 = vmand %vm303, %vm410
  %vm443 = vmand %vm304, %vm411
  %vm444 = vmand %vm305, %vm412
  %vm445 = vmand %vm306, %vm413
  %vm446 = vmand %vm307, %vm414
  %vm447 = vmand %vm308, %vm415
  %vm448 = vmand %vm309, %vm416
  %vm449 = vmand %vm310, %vm417
  %vm450 = vmand %vm311, %vm418
  %vm451 = vmand %vm312, %vm419
  %vm452 = vmand %vm313, %vm420
  %vm453 = vmand %vm314, %vm421
  %vm454 = vmand %vm315, %vm422
  %vm455 = vmand %vm316, %vm423
  %vm456 = vmand %vm317, %vm424
  %vm457 = vmand %vm318, %vm425
  %vm458 = vmand %vm319, %vm426
  %vm459 = vmand %vm320, %vm427
  %vm460 = vmand %vm321, %vm428
  %vm461 = vmand %vm322, %vm429
  %vm462 = vmand %vm323, %vm430
  %vm463 = vmand %vm324, %vm431
  %vm464 = vmand %vm325, %vm432
  %vm465 = vmand %vm326, %vm433
  %vm466 = vmand %vm327, %vm434
  %vm467 = vmand %vm328, %vm435
  %vm468 = vmand %vm329, %vm436
  %vm469 = vmand %vm330, %vm437
  %vm470 = vmand %vm331, %vm438
  %vm471 = vmand %vm332, %vm439
  %vm472 = vmand %vm333, %vm440
  %vm473 = vmand %vm334, %vm441
  %474 = vset.pattern.permute.xlu0 3
  %475 = vperm.xlu0 %474, %v68
  %v476 = vpop.permute.xlu0 %475
  %478 = vset.pattern.permute.xlu0 3
  %479 = vperm.xlu0 %478, %v69
  %v480 = vpop.permute.xlu0 %479
  %482 = vset.pattern.permute.xlu0 3
  %483 = vperm.xlu0 %482, %v70
  %v484 = vpop.permute.xlu0 %483
  %486 = vset.pattern.permute.xlu0 3
  %487 = vperm.xlu0 %486, %v71
  %v488 = vpop.permute.xlu0 %487
  %490 = vset.pattern.permute.xlu0 3
  %491 = vperm.xlu0 %490, %v72
  %v492 = vpop.permute.xlu0 %491
  %494 = vset.pattern.permute.xlu0 3
  %495 = vperm.xlu0 %494, %v73
  %v496 = vpop.permute.xlu0 %495
  %498 = vset.pattern.permute.xlu0 3
  %499 = vperm.xlu0 %498, %v74
  %v500 = vpop.permute.xlu0 %499
  %502 = vset.pattern.permute.xlu0 3
  %503 = vperm.xlu0 %502, %v75
  %v504 = vpop.permute.xlu0 %503
  %506 = vset.pattern.permute.xlu0 3
  %507 = vperm.xlu0 %506, %v76
  %v508 = vpop.permute.xlu0 %507
  %510 = vset.pattern.permute.xlu0 3
  %511 = vperm.xlu0 %510, %v77
  %v512 = vpop.permute.xlu0 %511
  %514 = vset.pattern.permute.xlu0 3
  %515 = vperm.xlu0 %514, %v78
  %v516 = vpop.permute.xlu0 %515
  %518 = vset.pattern.permute.xlu0 3
  %519 = vperm.xlu0 %518, %v79
  %v520 = vpop.permute.xlu0 %519
  %522 = vset.pattern.permute.xlu0 3
  %523 = vperm.xlu0 %522, %v80
  %v524 = vpop.permute.xlu0 %523
  %526 = vset.pattern.permute.xlu0 3
  %527 = vperm.xlu0 %526, %v81
  %v528 = vpop.permute.xlu0 %527
  %530 = vset.pattern.permute.xlu0 3
  %531 = vperm.xlu0 %530, %v82
  %v532 = vpop.permute.xlu0 %531
  %534 = vset.pattern.permute.xlu0 3
  %535 = vperm.xlu0 %534, %v83
  %v536 = vpop.permute.xlu0 %535
  %vm538 = vcmp.le.f32.partialorder %v339, %v476
  %vm539 = vcmp.le.f32.partialorder %v343, %v476
  %vm540 = vcmp.le.f32.partialorder %v339, %v480
  %vm541 = vcmp.le.f32.partialorder %v343, %v480
  %vm542 = vcmp.le.f32.partialorder %v339, %v484
  %vm543 = vcmp.le.f32.partialorder %v343, %v484
  %vm544 = vcmp.le.f32.partialorder %v339, %v488
  %vm545 = vcmp.le.f32.partialorder %v343, %v488
  %vm546 = vcmp.le.f32.partialorder %v339, %v492
  %vm547 = vcmp.le.f32.partialorder %v343, %v492
  %vm548 = vcmp.le.f32.partialorder %v339, %v496
  %vm549 = vcmp.le.f32.partialorder %v343, %v496
  %vm550 = vcmp.le.f32.partialorder %v339, %v500
  %vm551 = vcmp.le.f32.partialorder %v343, %v500
  %vm552 = vcmp.le.f32.partialorder %v339, %v504
  %vm553 = vcmp.le.f32.partialorder %v343, %v504
  %vm554 = vcmp.le.f32.partialorder %v339, %v508
  %vm555 = vcmp.le.f32.partialorder %v343, %v508
  %vm556 = vcmp.le.f32.partialorder %v339, %v512
  %vm557 = vcmp.le.f32.partialorder %v343, %v512
  %vm558 = vcmp.le.f32.partialorder %v339, %v516
  %vm559 = vcmp.le.f32.partialorder %v343, %v516
  %vm560 = vcmp.le.f32.partialorder %v339, %v520
  %vm561 = vcmp.le.f32.partialorder %v343, %v520
  %vm562 = vcmp.le.f32.partialorder %v339, %v524
  %vm563 = vcmp.le.f32.partialorder %v343, %v524
  %vm564 = vcmp.le.f32.partialorder %v339, %v528
  %vm565 = vcmp.le.f32.partialorder %v343, %v528
  %vm566 = vcmp.le.f32.partialorder %v339, %v532
  %vm567 = vcmp.le.f32.partialorder %v343, %v532
  %vm568 = vcmp.le.f32.partialorder %v339, %v536
  %vm569 = vcmp.le.f32.partialorder %v343, %v536
  %vm570 = vmand %vm442, %vm538
  %vm571 = vmand %vm443, %vm539
  %vm572 = vmand %vm444, %vm540
  %vm573 = vmand %vm445, %vm541
  %vm574 = vmand %vm446, %vm542
  %vm575 = vmand %vm447, %vm543
  %vm576 = vmand %vm448, %vm544
  %vm577 = vmand %vm449, %vm545
  %vm578 = vmand %vm450, %vm546
  %vm579 = vmand %vm451, %vm547
  %vm580 = vmand %vm452, %vm548
  %vm581 = vmand %vm453, %vm549
  %vm582 = vmand %vm454, %vm550
  %vm583 = vmand %vm455, %vm551
  %vm584 = vmand %vm456, %vm552
  %vm585 = vmand %vm457, %vm553
  %vm586 = vmand %vm458, %vm554
  %vm587 = vmand %vm459, %vm555
  %vm588 = vmand %vm460, %vm556
  %vm589 = vmand %vm461, %vm557
  %vm590 = vmand %vm462, %vm558
  %vm591 = vmand %vm463, %vm559
  %vm592 = vmand %vm464, %vm560
  %vm593 = vmand %vm465, %vm561
  %vm594 = vmand %vm466, %vm562
  %vm595 = vmand %vm467, %vm563
  %vm596 = vmand %vm468, %vm564
  %vm597 = vmand %vm469, %vm565
  %vm598 = vmand %vm470, %vm566
  %vm599 = vmand %vm471, %vm567
  %vm600 = vmand %vm472, %vm568
  %vm601 = vmand %vm473, %vm569
  %v602 = vsel %vm570, 1, 0
  %v603 = vsel %vm571, 1, 0
  %v604 = vsel %vm572, 1, 0
  %v605 = vsel %vm573, 1, 0
  %v606 = vsel %vm574, 1, 0
  %v607 = vsel %vm575, 1, 0
  %v608 = vsel %vm576, 1, 0
  %v609 = vsel %vm577, 1, 0
  %v610 = vsel %vm578, 1, 0
  %v611 = vsel %vm579, 1, 0
  %v612 = vsel %vm580, 1, 0
  %v613 = vsel %vm581, 1, 0
  %v614 = vsel %vm582, 1, 0
  %v615 = vsel %vm583, 1, 0
  %v616 = vsel %vm584, 1, 0
  %v617 = vsel %vm585, 1, 0
  %v618 = vsel %vm586, 1, 0
  %v619 = vsel %vm587, 1, 0
  %v620 = vsel %vm588, 1, 0
  %v621 = vsel %vm589, 1, 0
  %v622 = vsel %vm590, 1, 0
  %v623 = vsel %vm591, 1, 0
  %v624 = vsel %vm592, 1, 0
  %v625 = vsel %vm593, 1, 0
  %v626 = vsel %vm594, 1, 0
  %v627 = vsel %vm595, 1, 0
  %v628 = vsel %vm596, 1, 0
  %v629 = vsel %vm597, 1, 0
  %v630 = vsel %vm598, 1, 0
  %v631 = vsel %vm599, 1, 0
  %v632 = vsel %vm600, 1, 0
  %v633 = vsel %vm601, 1, 0
  %v634 = vcvt.s32.f32 %v602
  %v635 = vcvt.s32.f32 %v603
  %v636 = vcvt.s32.f32 %v604
  %v637 = vcvt.s32.f32 %v605
  %v638 = vcvt.s32.f32 %v606
  %v639 = vcvt.s32.f32 %v607
  %v640 = vcvt.s32.f32 %v608
  %v641 = vcvt.s32.f32 %v609
  %v642 = vcvt.s32.f32 %v610
  %v643 = vcvt.s32.f32 %v611
  %v644 = vcvt.s32.f32 %v612
  %v645 = vcvt.s32.f32 %v613
  %v646 = vcvt.s32.f32 %v614
  %v647 = vcvt.s32.f32 %v615
  %v648 = vcvt.s32.f32 %v616
  %v649 = vcvt.s32.f32 %v617
  %v650 = vcvt.s32.f32 %v618
  %v651 = vcvt.s32.f32 %v619
  %v652 = vcvt.s32.f32 %v620
  %v653 = vcvt.s32.f32 %v621
  %v654 = vcvt.s32.f32 %v622
  %v655 = vcvt.s32.f32 %v623
  %v656 = vcvt.s32.f32 %v624
  %v657 = vcvt.s32.f32 %v625
  %v658 = vcvt.s32.f32 %v626
  %v659 = vcvt.s32.f32 %v627
  %v660 = vcvt.s32.f32 %v628
  %v661 = vcvt.s32.f32 %v629
  %v662 = vcvt.s32.f32 %v630
  %v663 = vcvt.s32.f32 %v631
  %v664 = vcvt.s32.f32 %v632
  %v665 = vcvt.s32.f32 %v633
  %v666 = vld [vmem:[#allocation3] sm:$0xff]
  %v667 = vld [vmem:[#allocation3 + $0x8] sm:$0xff]
  %v668 = vld [vmem:[#allocation3 + $0x10] sm:$0xff]
  %v669 = vld [vmem:[#allocation3 + $0x18] sm:$0xff]
  %v670 = vld [vmem:[#allocation3 + $0x20] sm:$0xff]
  %v671 = vld [vmem:[#allocation3 + $0x28] sm:$0xff]
  %v672 = vld [vmem:[#allocation3 + $0x30] sm:$0xff]
  %v673 = vld [vmem:[#allocation3 + $0x38] sm:$0xff]
  %v674 = vld [vmem:[#allocation3 + $0x40] sm:$0xff]
  %v675 = vld [vmem:[#allocation3 + $0x48] sm:$0xff]
  %v676 = vld [vmem:[#allocation3 + $0x50] sm:$0xff]
  %v677 = vld [vmem:[#allocation3 + $0x58] sm:$0xff]
  %v678 = vld [vmem:[#allocation3 + $0x60] sm:$0xff]
  %v679 = vld [vmem:[#allocation3 + $0x68] sm:$0xff]
  %v680 = vld [vmem:[#allocation3 + $0x70] sm:$0xff]
  %v681 = vld [vmem:[#allocation3 + $0x78] sm:$0xff]
  %v682 = vadd.f32 %v634, %v635
  %683 = vadd.xlane.f32.xlu0 %v682
  %v684 = vpop.xlane.xlu0 %683
  %v685 = vadd.f32 %v636, %v637
  %686 = vadd.xlane.f32.xlu0 %v685
  %v687 = vpop.xlane.xlu0 %686
  %v688 = vadd.f32 %v638, %v639
  %689 = vadd.xlane.f32.xlu0 %v688
  %v690 = vpop.xlane.xlu0 %689
  %v691 = vadd.f32 %v640, %v641
  %692 = vadd.xlane.f32.xlu0 %v691
  %v693 = vpop.xlane.xlu0 %692
  %v694 = vadd.f32 %v642, %v643
  %695 = vadd.xlane.f32.xlu0 %v694
  %v696 = vpop.xlane.xlu0 %695
  %v697 = vadd.f32 %v644, %v645
  %698 = vadd.xlane.f32.xlu0 %v697
  %v699 = vpop.xlane.xlu0 %698
  %v700 = vadd.f32 %v646, %v647
  %701 = vadd.xlane.f32.xlu0 %v700
  %v702 = vpop.xlane.xlu0 %701
  %v703 = vadd.f32 %v648, %v649
  %704 = vadd.xlane.f32.xlu0 %v703
  %v705 = vpop.xlane.xlu0 %704
  %v706 = vadd.f32 %v650, %v651
  %707 = vadd.xlane.f32.xlu0 %v706
  %v708 = vpop.xlane.xlu0 %707
  %v709 = vadd.f32 %v652, %v653
  %710 = vadd.xlane.f32.xlu0 %v709
  %v711 = vpop.xlane.xlu0 %710
  %v712 = vadd.f32 %v654, %v655
  %713 = vadd.xlane.f32.xlu0 %v712
  %v714 = vpop.xlane.xlu0 %713
  %v715 = vadd.f32 %v656, %v657
  %716 = vadd.xlane.f32.xlu0 %v715
  %v717 = vpop.xlane.xlu0 %716
  %v718 = vadd.f32 %v658, %v659
  %719 = vadd.xlane.f32.xlu0 %v718
  %v720 = vpop.xlane.xlu0 %719
  %v721 = vadd.f32 %v660, %v661
  %722 = vadd.xlane.f32.xlu0 %v721
  %v723 = vpop.xlane.xlu0 %722
  %v724 = vadd.f32 %v662, %v663
  %725 = vadd.xlane.f32.xlu0 %v724
  %v726 = vpop.xlane.xlu0 %725
  %v727 = vadd.f32 %v664, %v665
  %728 = vadd.xlane.f32.xlu0 %v727
  %v729 = vpop.xlane.xlu0 %728
  %v730 = vadd.f32 %v666, %v684
  %v731 = vadd.f32 %v667, %v687
  %v732 = vadd.f32 %v668, %v690
  %v733 = vadd.f32 %v669, %v693
  %v734 = vadd.f32 %v670, %v696
  %v735 = vadd.f32 %v671, %v699
  %v736 = vadd.f32 %v672, %v702
  %v737 = vadd.f32 %v673, %v705
  %v738 = vadd.f32 %v674, %v708
  %v739 = vadd.f32 %v675, %v711
  %v740 = vadd.f32 %v676, %v714
  %v741 = vadd.f32 %v677, %v717
  %v742 = vadd.f32 %v678, %v720
  %v743 = vadd.f32 %v679, %v723
  %v744 = vadd.f32 %v680, %v726
  %v745 = vadd.f32 %v681, %v729
  %vm746 = vcmask 7168
  %747 = vst.msk [vmem:[#allocation3] sm:$0xff] %vm746, %v730
  %748 = vst.msk [vmem:[#allocation3 + $0x8] sm:$0xff] %vm746, %v731
  %749 = vst.msk [vmem:[#allocation3 + $0x10] sm:$0xff] %vm746, %v732
  %750 = vst.msk [vmem:[#allocation3 + $0x18] sm:$0xff] %vm746, %v733
  %751 = vst.msk [vmem:[#allocation3 + $0x20] sm:$0xff] %vm746, %v734
  %752 = vst.msk [vmem:[#allocation3 + $0x28] sm:$0xff] %vm746, %v735
  %753 = vst.msk [vmem:[#allocation3 + $0x30] sm:$0xff] %vm746, %v736
  %754 = vst.msk [vmem:[#allocation3 + $0x38] sm:$0xff] %vm746, %v737
  %755 = vst.msk [vmem:[#allocation3 + $0x40] sm:$0xff] %vm746, %v738
  %756 = vst.msk [vmem:[#allocation3 + $0x48] sm:$0xff] %vm746, %v739
  %757 = vst.msk [vmem:[#allocation3 + $0x50] sm:$0xff] %vm746, %v740
  %758 = vst.msk [vmem:[#allocation3 + $0x58] sm:$0xff] %vm746, %v741
  %759 = vst.msk [vmem:[#allocation3 + $0x60] sm:$0xff] %vm746, %v742
  %760 = vst.msk [vmem:[#allocation3 + $0x68] sm:$0xff] %vm746, %v743
  %761 = vst.msk [vmem:[#allocation3 + $0x70] sm:$0xff] %vm746, %v744
  %762 = vst.msk [vmem:[#allocation3 + $0x78] sm:$0xff] %vm746, %v745
  %v763 = vld [vmem:[#allocation2] sm:$0xff]
  %v764 = vld [vmem:[#allocation2 + $0x8] sm:$0xff]
  %v765 = vld [vmem:[#allocation2 + $0x10] sm:$0xff]
  %v766 = vld [vmem:[#allocation2 + $0x18] sm:$0xff]
  %v767 = vld [vmem:[#allocation2 + $0x20] sm:$0xff]
  %v768 = vld [vmem:[#allocation2 + $0x28] sm:$0xff]
  %v769 = vld [vmem:[#allocation2 + $0x30] sm:$0xff]
  %v770 = vld [vmem:[#allocation2 + $0x38] sm:$0xff]
  %v771 = vld [vmem:[#allocation2 + $0x40] sm:$0xff]
  %v772 = vld [vmem:[#allocation2 + $0x48] sm:$0xff]
  %v773 = vld [vmem:[#allocation2 + $0x50] sm:$0xff]
  %v774 = vld [vmem:[#allocation2 + $0x58] sm:$0xff]
  %v775 = vld [vmem:[#allocation2 + $0x60] sm:$0xff]
  %v776 = vld [vmem:[#allocation2 + $0x68] sm:$0xff]
  %v777 = vld [vmem:[#allocation2 + $0x70] sm:$0xff]
  %v778 = vld [vmem:[#allocation2 + $0x78] sm:$0xff]
  %v779 = vpack.c.bf16 %v636, %v634
  %v780 = vpack.c.bf16 %v637, %v635
  %v781 = vpack.c.bf16 %v640, %v638
  %v782 = vpack.c.bf16 %v641, %v639
  %v783 = vpack.c.bf16 %v644, %v642
  %v784 = vpack.c.bf16 %v645, %v643
  %v785 = vpack.c.bf16 %v648, %v646
  %v786 = vpack.c.bf16 %v649, %v647
  %v787 = vpack.c.bf16 %v652, %v650
  %v788 = vpack.c.bf16 %v653, %v651
  %v789 = vpack.c.bf16 %v656, %v654
  %v790 = vpack.c.bf16 %v657, %v655
  %v791 = vpack.c.bf16 %v660, %v658
  %v792 = vpack.c.bf16 %v661, %v659
  %v793 = vpack.c.bf16 %v664, %v662
  %v794 = vpack.c.bf16 %v665, %v663
  %v795 = vld [vmem:[%s2] sm:$0xf]
  %v796 = vld [vmem:[%s2 + $0x4] sm:$0xf]
  %v797 = vld [vmem:[%s2 + $0x8] sm:$0xf]
  %v798 = vld [vmem:[%s2 + $0xc] sm:$0xf]
  %v799 = vld [vmem:[%s2 + $0x10] sm:$0xf]
  %v800 = vld [vmem:[%s2 + $0x14] sm:$0xf]
  %v801 = vld [vmem:[%s2 + $0x18] sm:$0xf]
  %v802 = vld [vmem:[%s2 + $0x1c] sm:$0xf]
  %v803 = vld [vmem:[%s2 + $0x20] sm:$0xf]
  %v804 = vld [vmem:[%s2 + $0x24] sm:$0xf]
  %v805 = vld [vmem:[%s2 + $0x28] sm:$0xf]
  %v806 = vld [vmem:[%s2 + $0x2c] sm:$0xf]
  %v807 = vld [vmem:[%s2 + $0x30] sm:$0xf]
  %v808 = vld [vmem:[%s2 + $0x34] sm:$0xf]
  %v809 = vld [vmem:[%s2 + $0x38] sm:$0xf]
  %v810 = vld [vmem:[%s2 + $0x3c] sm:$0xf]
  %v811 = vld [vmem:[%s2 + $0x40] sm:$0xf]
  %v812 = vld [vmem:[%s2 + $0x44] sm:$0xf]
  %v813 = vld [vmem:[%s2 + $0x48] sm:$0xf]
  %v814 = vld [vmem:[%s2 + $0x4c] sm:$0xf]
  %v815 = vld [vmem:[%s2 + $0x50] sm:$0xf]
  %v816 = vld [vmem:[%s2 + $0x54] sm:$0xf]
  %v817 = vld [vmem:[%s2 + $0x58] sm:$0xf]
  %v818 = vld [vmem:[%s2 + $0x5c] sm:$0xf]
  %v819 = vld [vmem:[%s2 + $0x60] sm:$0xf]
  %v820 = vld [vmem:[%s2 + $0x64] sm:$0xf]
  %v821 = vld [vmem:[%s2 + $0x68] sm:$0xf]
  %v822 = vld [vmem:[%s2 + $0x6c] sm:$0xf]
  %v823 = vld [vmem:[%s2 + $0x70] sm:$0xf]
  %v824 = vld [vmem:[%s2 + $0x74] sm:$0xf]
  %v825 = vld [vmem:[%s2 + $0x78] sm:$0xf]
  %v826 = vld [vmem:[%s2 + $0x7c] sm:$0xf]
  %v859 = vunpack.c.l.b16 %v795
  %v860 = vunpack.c.l.b16 %v796
  %v861 = vunpack.c.l.b16 %v797
  %v862 = vunpack.c.l.b16 %v798
  %v863 = vunpack.c.l.b16 %v799
  %v864 = vunpack.c.l.b16 %v800
  %v865 = vunpack.c.l.b16 %v801
  %v866 = vunpack.c.l.b16 %v802
  %v867 = vunpack.c.l.b16 %v803
  %v868 = vunpack.c.l.b16 %v804
  %v869 = vunpack.c.l.b16 %v805
  %v870 = vunpack.c.l.b16 %v806
  %v871 = vunpack.c.l.b16 %v807
  %v872 = vunpack.c.l.b16 %v808
  %v873 = vunpack.c.l.b16 %v809
  %v874 = vunpack.c.l.b16 %v810
  %v875 = vunpack.c.l.b16 %v811
  %v876 = vunpack.c.l.b16 %v812
  %v877 = vunpack.c.l.b16 %v813
  %v878 = vunpack.c.l.b16 %v814
  %v879 = vunpack.c.l.b16 %v815
  %v880 = vunpack.c.l.b16 %v816
  %v881 = vunpack.c.l.b16 %v817
  %v882 = vunpack.c.l.b16 %v818
  %v883 = vunpack.c.l.b16 %v819
  %v884 = vunpack.c.l.b16 %v820
  %v885 = vunpack.c.l.b16 %v821
  %v886 = vunpack.c.l.b16 %v822
  %v887 = vunpack.c.l.b16 %v823
  %v888 = vunpack.c.l.b16 %v824
  %v889 = vunpack.c.l.b16 %v825
  %v890 = vunpack.c.l.b16 %v826
  %v891 = vpack.c.b16 %v860, %v859
  %v892 = vpack.c.b16 %v862, %v861
  %v893 = vpack.c.b16 %v864, %v863
  %v894 = vpack.c.b16 %v866, %v865
  %v895 = vpack.c.b16 %v868, %v867
  %v896 = vpack.c.b16 %v870, %v869
  %v897 = vpack.c.b16 %v872, %v871
  %v898 = vpack.c.b16 %v874, %v873
  %v899 = vpack.c.b16 %v876, %v875
  %v900 = vpack.c.b16 %v878, %v877
  %v901 = vpack.c.b16 %v880, %v879
  %v902 = vpack.c.b16 %v882, %v881
  %v903 = vpack.c.b16 %v884, %v883
  %v904 = vpack.c.b16 %v886, %v885
  %v905 = vpack.c.b16 %v888, %v887
  %v906 = vpack.c.b16 %v890, %v889
  %923 = vmatprep.subr.bf16.mxu0 0
  %924 = vmatpush1.bf16.msra.mxu0 %v898
  %925 = vmatprep.subr.bf16.mxu0 0
  %926 = vmatpush1.bf16.msra.mxu0 %v897
  %927 = vmatprep.subr.bf16.mxu0 0
  %928 = vmatpush1.bf16.msra.mxu0 %v896
  %929 = vmatprep.subr.bf16.mxu0 0
  %930 = vmatpush1.bf16.msra.mxu0 %v895
  %931 = vmatprep.subr.bf16.mxu0 0
  %932 = vmatpush1.bf16.msra.mxu0 %v894
  %933 = vmatprep.subr.bf16.mxu0 0
  %934 = vmatpush1.bf16.msra.mxu0 %v893
  %935 = vmatprep.subr.bf16.mxu0 0
  %936 = vmatpush1.bf16.msra.mxu0 %v892
  %937 = vmatprep.subr.bf16.mxu0 0
  %938 = vmatpush1.bf16.msra.mxu0 %v891
  %939 = vmatprep.subr.bf16.mxu0 0
  %940 = vmatpush2.bf16.msra.mxu0 %v906
  %941 = vmatprep.subr.bf16.mxu0 0
  %942 = vmatpush2.bf16.msra.mxu0 %v905
  %943 = vmatprep.subr.bf16.mxu0 0
  %944 = vmatpush2.bf16.msra.mxu0 %v904
  %945 = vmatprep.subr.bf16.mxu0 0
  %946 = vmatpush2.bf16.msra.mxu0 %v903
  %947 = vmatprep.subr.bf16.mxu0 0
  %948 = vmatpush2.bf16.msra.mxu0 %v902
  %949 = vmatprep.subr.bf16.mxu0 0
  %950 = vmatpush2.bf16.msra.mxu0 %v901
  %951 = vmatprep.subr.bf16.mxu0 0
  %952 = vmatpush2.bf16.msra.mxu0 %v900
  %953 = vmatprep.subr.bf16.mxu0 0
  %954 = vmatpush2.bf16.msra.mxu0 %v899
  %955 = vmatprep.mubr.bf16.mxu0 %v780
  %956 = vmatmul.mubr.bf16.gmra.mxu0 %v779
  %v957 = vpop.f32.mrf.mxu0
  %v958 = vadd.f32 0.0, %v957
  %v959 = vpop.f32.mrf.mxu0
  %v960 = vpop.f32.mrf.mxu0
  %v961 = vadd.f32 0.0, %v960
  %v962 = vpop.f32.mrf.mxu0
  %963 = vmatprep.mubr.bf16.mxu0 %v782
  %964 = vmatmul.mubr.bf16.gmra.mxu0 %v781
  %v965 = vpop.f32.mrf.mxu0
  %v966 = vadd.f32 0.0, %v965
  %v967 = vpop.f32.mrf.mxu0
  %v968 = vpop.f32.mrf.mxu0
  %v969 = vadd.f32 0.0, %v968
  %v970 = vpop.f32.mrf.mxu0
  %971 = vmatprep.mubr.bf16.mxu0 %v784
  %972 = vmatmul.mubr.bf16.gmra.mxu0 %v783
  %v973 = vpop.f32.mrf.mxu0
  %v974 = vadd.f32 0.0, %v973
  %v975 = vpop.f32.mrf.mxu0
  %v976 = vpop.f32.mrf.mxu0
  %v977 = vadd.f32 0.0, %v976
  %v978 = vpop.f32.mrf.mxu0
  %979 = vmatprep.mubr.bf16.mxu0 %v786
  %980 = vmatmul.mubr.bf16.gmra.mxu0 %v785
  %v981 = vpop.f32.mrf.mxu0
  %v982 = vadd.f32 0.0, %v981
  %v983 = vpop.f32.mrf.mxu0
  %v984 = vpop.f32.mrf.mxu0
  %v985 = vadd.f32 0.0, %v984
  %v986 = vpop.f32.mrf.mxu0
  %987 = vmatprep.mubr.bf16.mxu0 %v788
  %988 = vmatmul.mubr.bf16.gmra.mxu0 %v787
  %v989 = vpop.f32.mrf.mxu0
  %v990 = vadd.f32 0.0, %v989
  %v991 = vpop.f32.mrf.mxu0
  %v992 = vpop.f32.mrf.mxu0
  %v993 = vadd.f32 0.0, %v992
  %v994 = vpop.f32.mrf.mxu0
  %995 = vmatprep.mubr.bf16.mxu0 %v790
  %996 = vmatmul.mubr.bf16.gmra.mxu0 %v789
  %v997 = vpop.f32.mrf.mxu0
  %v998 = vadd.f32 0.0, %v997
  %v999 = vpop.f32.mrf.mxu0
  %v1000 = vpop.f32.mrf.mxu0
  %v1001 = vadd.f32 0.0, %v1000
  %v1002 = vpop.f32.mrf.mxu0
  %1003 = vmatprep.mubr.bf16.mxu0 %v792
  %1004 = vmatmul.mubr.bf16.gmra.mxu0 %v791
  %v1005 = vpop.f32.mrf.mxu0
  %v1006 = vadd.f32 0.0, %v1005
  %v1007 = vpop.f32.mrf.mxu0
  %v1008 = vpop.f32.mrf.mxu0
  %v1009 = vadd.f32 0.0, %v1008
  %v1010 = vpop.f32.mrf.mxu0
  %1011 = vmatprep.mubr.bf16.mxu0 %v794
  %1012 = vmatmul.mubr.bf16.gmra.mxu0 %v793
  %v1013 = vpop.f32.mrf.mxu0
  %v1014 = vadd.f32 0.0, %v1013
  %v1015 = vpop.f32.mrf.mxu0
  %v1016 = vpop.f32.mrf.mxu0
  %v1017 = vadd.f32 0.0, %v1016
  %v1018 = vpop.f32.mrf.mxu0
  %1019 = vdwg.mxu0
  %v1020 = vadd.f32 %v763, %v958
  %v1021 = vadd.f32 %v764, %v961
  %v1022 = vadd.f32 %v765, %v966
  %v1023 = vadd.f32 %v766, %v969
  %v1024 = vadd.f32 %v767, %v974
  %v1025 = vadd.f32 %v768, %v977
  %v1026 = vadd.f32 %v769, %v982
  %v1027 = vadd.f32 %v770, %v985
  %v1028 = vadd.f32 %v771, %v990
  %v1029 = vadd.f32 %v772, %v993
  %v1030 = vadd.f32 %v773, %v998
  %v1031 = vadd.f32 %v774, %v1001
  %v1032 = vadd.f32 %v775, %v1006
  %v1033 = vadd.f32 %v776, %v1009
  %v1034 = vadd.f32 %v777, %v1014
  %v1035 = vadd.f32 %v778, %v1017
  %vm1036 = vcmask 261120
  %1037 = vst.msk [vmem:[#allocation2] sm:$0xff] %vm1036, %v1020
  %1038 = vst.msk [vmem:[#allocation2 + $0x8] sm:$0xff] %vm1036, %v1021
  %1039 = vst.msk [vmem:[#allocation2 + $0x10] sm:$0xff] %vm1036, %v1022
  %1040 = vst.msk [vmem:[#allocation2 + $0x18] sm:$0xff] %vm1036, %v1023
  %1041 = vst.msk [vmem:[#allocation2 + $0x20] sm:$0xff] %vm1036, %v1024
  %1042 = vst.msk [vmem:[#allocation2 + $0x28] sm:$0xff] %vm1036, %v1025
  %1043 = vst.msk [vmem:[#allocation2 + $0x30] sm:$0xff] %vm1036, %v1026
  %1044 = vst.msk [vmem:[#allocation2 + $0x38] sm:$0xff] %vm1036, %v1027
  %1045 = vst.msk [vmem:[#allocation2 + $0x40] sm:$0xff] %vm1036, %v1028
  %1046 = vst.msk [vmem:[#allocation2 + $0x48] sm:$0xff] %vm1036, %v1029
  %1047 = vst.msk [vmem:[#allocation2 + $0x50] sm:$0xff] %vm1036, %v1030
  %1048 = vst.msk [vmem:[#allocation2 + $0x58] sm:$0xff] %vm1036, %v1031
  %1049 = vst.msk [vmem:[#allocation2 + $0x60] sm:$0xff] %vm1036, %v1032
  %1050 = vst.msk [vmem:[#allocation2 + $0x68] sm:$0xff] %vm1036, %v1033
  %1051 = vst.msk [vmem:[#allocation2 + $0x70] sm:$0xff] %vm1036, %v1034
  %1052 = vst.msk [vmem:[#allocation2 + $0x78] sm:$0xff] %vm1036, %v1035
  // Predicated region
  $region34: #{_lambda_.9} parent=0 // pred_check
    %p1053 = pneg %p27
  $region35: #{_lambda_.9} parent=0 // pred_check_branch
    %1055 = sbr.rel (%p1053) target = $region37
  $region36: #{_lambda_.9} parent=0 // pred_region
    %v1056 = vld [vmem:[#allocation2] sm:$0xff]
    %v1057 = vld [vmem:[#allocation2 + $0x8] sm:$0xff]
    %v1058 = vld [vmem:[#allocation2 + $0x10] sm:$0xff]
    %v1059 = vld [vmem:[#allocation2 + $0x18] sm:$0xff]
    %v1060 = vld [vmem:[#allocation2 + $0x20] sm:$0xff]
    %v1061 = vld [vmem:[#allocation2 + $0x28] sm:$0xff]
    %v1062 = vld [vmem:[#allocation2 + $0x30] sm:$0xff]
    %v1063 = vld [vmem:[#allocation2 + $0x38] sm:$0xff]
    %v1064 = vld [vmem:[#allocation2 + $0x40] sm:$0xff]
    %v1065 = vld [vmem:[#allocation2 + $0x48] sm:$0xff]
    %v1066 = vld [vmem:[#allocation2 + $0x50] sm:$0xff]
    %v1067 = vld [vmem:[#allocation2 + $0x58] sm:$0xff]
    %v1068 = vld [vmem:[#allocation2 + $0x60] sm:$0xff]
    %v1069 = vld [vmem:[#allocation2 + $0x68] sm:$0xff]
    %v1070 = vld [vmem:[#allocation2 + $0x70] sm:$0xff]
    %v1071 = vld [vmem:[#allocation2 + $0x78] sm:$0xff]
    %v1072 = vld [vmem:[#allocation3] sm:$0xff]
    %v1073 = vld [vmem:[#allocation3 + $0x8] sm:$0xff]
    %v1074 = vld [vmem:[#allocation3 + $0x10] sm:$0xff]
    %v1075 = vld [vmem:[#allocation3 + $0x18] sm:$0xff]
    %v1076 = vld [vmem:[#allocation3 + $0x20] sm:$0xff]
    %v1077 = vld [vmem:[#allocation3 + $0x28] sm:$0xff]
    %v1078 = vld [vmem:[#allocation3 + $0x30] sm:$0xff]
    %v1079 = vld [vmem:[#allocation3 + $0x38] sm:$0xff]
    %v1080 = vld [vmem:[#allocation3 + $0x40] sm:$0xff]
    %v1081 = vld [vmem:[#allocation3 + $0x48] sm:$0xff]
    %v1082 = vld [vmem:[#allocation3 + $0x50] sm:$0xff]
    %v1083 = vld [vmem:[#allocation3 + $0x58] sm:$0xff]
    %v1084 = vld [vmem:[#allocation3 + $0x60] sm:$0xff]
    %v1085 = vld [vmem:[#allocation3 + $0x68] sm:$0xff]
    %v1086 = vld [vmem:[#allocation3 + $0x70] sm:$0xff]
    %v1087 = vld [vmem:[#allocation3 + $0x78] sm:$0xff]
    %v1088 = vmax.f32 %v1072, 1.0
    %v1089 = vmax.f32 %v1073, 1.0
    %v1090 = vmax.f32 %v1074, 1.0
    %v1091 = vmax.f32 %v1075, 1.0
    %v1092 = vmax.f32 %v1076, 1.0
    %v1093 = vmax.f32 %v1077, 1.0
    %v1094 = vmax.f32 %v1078, 1.0
    %v1095 = vmax.f32 %v1079, 1.0
    %v1096 = vmax.f32 %v1080, 1.0
    %v1097 = vmax.f32 %v1081, 1.0
    %v1098 = vmax.f32 %v1082, 1.0
    %v1099 = vmax.f32 %v1083, 1.0
    %v1100 = vmax.f32 %v1084, 1.0
    %v1101 = vmax.f32 %v1085, 1.0
    %v1102 = vmax.f32 %v1086, 1.0
    %v1103 = vmax.f32 %v1087, 1.0
    %1105 = vset.pattern.permute.xlu0 0
    %1106 = vperm.xlu0 %1105, %v1088
    %v1107 = vpop.permute.xlu0 %1106
    %1110 = vset.pattern.permute.xlu0 0
    %1111 = vperm.xlu0 %1110, %v1089
    %v1112 = vpop.permute.xlu0 %1111
    %1115 = vset.pattern.permute.xlu0 0
    %1116 = vperm.xlu0 %1115, %v1090
    %v1117 = vpop.permute.xlu0 %1116
    %1120 = vset.pattern.permute.xlu0 0
    %1121 = vperm.xlu0 %1120, %v1091
    %v1122 = vpop.permute.xlu0 %1121
    %1125 = vset.pattern.permute.xlu0 0
    %1126 = vperm.xlu0 %1125, %v1092
    %v1127 = vpop.permute.xlu0 %1126
    %1130 = vset.pattern.permute.xlu0 0
    %1131 = vperm.xlu0 %1130, %v1093
    %v1132 = vpop.permute.xlu0 %1131
    %1135 = vset.pattern.permute.xlu0 0
    %1136 = vperm.xlu0 %1135, %v1094
    %v1137 = vpop.permute.xlu0 %1136
    %1140 = vset.pattern.permute.xlu0 0
    %1141 = vperm.xlu0 %1140, %v1095
    %v1142 = vpop.permute.xlu0 %1141
    %1145 = vset.pattern.permute.xlu0 0
    %1146 = vperm.xlu0 %1145, %v1096
    %v1147 = vpop.permute.xlu0 %1146
    %1150 = vset.pattern.permute.xlu0 0
    %1151 = vperm.xlu0 %1150, %v1097
    %v1152 = vpop.permute.xlu0 %1151
    %1155 = vset.pattern.permute.xlu0 0
    %1156 = vperm.xlu0 %1155, %v1098
    %v1157 = vpop.permute.xlu0 %1156
    %1160 = vset.pattern.permute.xlu0 0
    %1161 = vperm.xlu0 %1160, %v1099
    %v1162 = vpop.permute.xlu0 %1161
    %1165 = vset.pattern.permute.xlu0 0
    %1166 = vperm.xlu0 %1165, %v1100
    %v1167 = vpop.permute.xlu0 %1166
    %1170 = vset.pattern.permute.xlu0 0
    %1171 = vperm.xlu0 %1170, %v1101
    %v1172 = vpop.permute.xlu0 %1171
    %1175 = vset.pattern.permute.xlu0 0
    %1176 = vperm.xlu0 %1175, %v1102
    %v1177 = vpop.permute.xlu0 %1176
    %1180 = vset.pattern.permute.xlu0 0
    %1181 = vperm.xlu0 %1180, %v1103
    %v1182 = vpop.permute.xlu0 %1181
    %v1184 = vrcp.pop %v1107
    %v1185 = vmul.f32 %v1056, %v1184
    %v1186 = vrcp.pop %v1112
    %v1187 = vmul.f32 %v1057, %v1186
    %v1188 = vrcp.pop %v1117
    %v1189 = vmul.f32 %v1058, %v1188
    %v1190 = vrcp.pop %v1122
    %v1191 = vmul.f32 %v1059, %v1190
    %v1192 = vrcp.pop %v1127
    %v1193 = vmul.f32 %v1060, %v1192
    %v1194 = vrcp.pop %v1132
    %v1195 = vmul.f32 %v1061, %v1194
    %v1196 = vrcp.pop %v1137
    %v1197 = vmul.f32 %v1062, %v1196
    %v1198 = vrcp.pop %v1142
    %v1199 = vmul.f32 %v1063, %v1198
    %v1200 = vrcp.pop %v1147
    %v1201 = vmul.f32 %v1064, %v1200
    %v1202 = vrcp.pop %v1152
    %v1203 = vmul.f32 %v1065, %v1202
    %v1204 = vrcp.pop %v1157
    %v1205 = vmul.f32 %v1066, %v1204
    %v1206 = vrcp.pop %v1162
    %v1207 = vmul.f32 %v1067, %v1206
    %v1208 = vrcp.pop %v1167
    %v1209 = vmul.f32 %v1068, %v1208
    %v1210 = vrcp.pop %v1172
    %v1211 = vmul.f32 %v1069, %v1210
    %v1212 = vrcp.pop %v1177
    %v1213 = vmul.f32 %v1070, %v1212
    %v1214 = vrcp.pop %v1182
    %v1215 = vmul.f32 %v1071, %v1214
    %v1216 = vpack.c.bf16 %v1187, %v1185
    %v1217 = vpack.c.bf16 %v1191, %v1189
    %v1218 = vpack.c.bf16 %v1195, %v1193
    %v1219 = vpack.c.bf16 %v1199, %v1197
    %v1220 = vpack.c.bf16 %v1203, %v1201
    %v1221 = vpack.c.bf16 %v1207, %v1205
    %v1222 = vpack.c.bf16 %v1211, %v1209
    %v1223 = vpack.c.bf16 %v1215, %v1213
    %v1224 = vld [vmem:[%s3] sm:$0xf]
    %v1225 = vld [vmem:[%s3 + $0x4] sm:$0xf]
    %v1226 = vld [vmem:[%s3 + $0x8] sm:$0xf]
    %v1227 = vld [vmem:[%s3 + $0xc] sm:$0xf]
    %v1228 = vld [vmem:[%s4] sm:$0x1]
    %v1230 = vlaneseq
    %v1231 = vshrl.u32 %v1230, 7
    %v1232 = vsub.s32 0, %v1231
    %v1233 = vrot.slane %v1228, %v1232
    %v1239 = vunpack.c.l.b16 %v1224
    %v1240 = vunpack.c.l.b16 %v1225
    %v1241 = vunpack.c.l.b16 %v1226
    %v1242 = vunpack.c.l.b16 %v1227
    %v1243 = vpack.c.b16 %v1240, %v1239
    %v1244 = vpack.c.b16 %v1242, %v1241
    %v1248 = vsel %vm1036, %v1216, 0
    %v1251 = vsel %vm1036, %v1217, 0
    %v1254 = vsel %vm1036, %v1218, 0
    %v1257 = vsel %vm1036, %v1219, 0
    %v1260 = vsel %vm1036, %v1220, 0
    %v1263 = vsel %vm1036, %v1221, 0
    %v1266 = vsel %vm1036, %v1222, 0
    %v1269 = vsel %vm1036, %v1223, 0
    %1271 = vmatprep.subr.bf16.mxu0 0
    %1272 = vmatpush1.bf16.msra.mxu0 0
    %1273 = vmatprep.subr.bf16.mxu0 0
    %1274 = vmatpush1.bf16.msra.mxu0 0
    %1275 = vmatprep.subr.bf16.mxu0 0
    %1276 = vmatpush1.bf16.msra.mxu0 0
    %1277 = vmatprep.subr.bf16.mxu0 0
    %1278 = vmatpush1.bf16.msra.mxu0 0
    %1279 = vmatprep.subr.bf16.mxu0 0
    %1280 = vmatpush1.bf16.msra.mxu0 0
    %1281 = vmatprep.subr.bf16.mxu0 0
    %1282 = vmatpush1.bf16.msra.mxu0 0
    %1283 = vmatprep.subr.bf16.mxu0 0
    %1284 = vmatpush1.bf16.msra.mxu0 %v1244
    %1285 = vmatprep.subr.bf16.mxu0 0
    %1286 = vmatpush1.bf16.msra.mxu0 %v1243
    %1287 = vmatprep.subr.bf16.mxu0 0
    %1288 = vmatpush2.bf16.msra.mxu0 0
    %1289 = vmatprep.subr.bf16.mxu0 0
    %1290 = vmatpush2.bf16.msra.mxu0 0
    %1291 = vmatprep.subr.bf16.mxu0 0
    %1292 = vmatpush2.bf16.msra.mxu0 0
    %1293 = vmatprep.subr.bf16.mxu0 0
    %1294 = vmatpush2.bf16.msra.mxu0 0
    %1295 = vmatprep.subr.bf16.mxu0 0
    %1296 = vmatpush2.bf16.msra.mxu0 0
    %1297 = vmatprep.subr.bf16.mxu0 0
    %1298 = vmatpush2.bf16.msra.mxu0 0
    %1299 = vmatprep.subr.bf16.mxu0 0
    %1300 = vmatpush2.bf16.msra.mxu0 0
    %1301 = vmatprep.subr.bf16.mxu0 0
    %1302 = vmatpush2.bf16.msra.mxu0 0
    %1303 = vmatprep.mubr.bf16.mxu0 0
    %1304 = vmatmul.mubr.bf16.gmra.mxu0 %v1248
    %v1305 = vpop.f32.mrf.mxu0
    %v1306 = vadd.f32 %v1233, %v1305
    %v1307 = vpop.f32.mrf.mxu0
    %v1308 = vpop.f32.mrf.mxu0
    %v1309 = vadd.f32 %v1233, %v1308
    %v1310 = vpop.f32.mrf.mxu0
    %1311 = vmatprep.mubr.bf16.mxu0 0
    %1312 = vmatmul.mubr.bf16.gmra.mxu0 %v1251
    %v1313 = vpop.f32.mrf.mxu0
    %v1314 = vadd.f32 %v1233, %v1313
    %v1315 = vpop.f32.mrf.mxu0
    %v1316 = vpop.f32.mrf.mxu0
    %v1317 = vadd.f32 %v1233, %v1316
    %v1318 = vpop.f32.mrf.mxu0
    %1319 = vmatprep.mubr.bf16.mxu0 0
    %1320 = vmatmul.mubr.bf16.gmra.mxu0 %v1254
    %v1321 = vpop.f32.mrf.mxu0
    %v1322 = vadd.f32 %v1233, %v1321
    %v1323 = vpop.f32.mrf.mxu0
    %v1324 = vpop.f32.mrf.mxu0
    %v1325 = vadd.f32 %v1233, %v1324
    %v1326 = vpop.f32.mrf.mxu0
    %1327 = vmatprep.mubr.bf16.mxu0 0
    %1328 = vmatmul.mubr.bf16.gmra.mxu0 %v1257
    %v1329 = vpop.f32.mrf.mxu0
    %v1330 = vadd.f32 %v1233, %v1329
    %v1331 = vpop.f32.mrf.mxu0
    %v1332 = vpop.f32.mrf.mxu0
    %v1333 = vadd.f32 %v1233, %v1332
    %v1334 = vpop.f32.mrf.mxu0
    %1335 = vmatprep.mubr.bf16.mxu0 0
    %1336 = vmatmul.mubr.bf16.gmra.mxu0 %v1260
    %v1337 = vpop.f32.mrf.mxu0
    %v1338 = vadd.f32 %v1233, %v1337
    %v1339 = vpop.f32.mrf.mxu0
    %v1340 = vpop.f32.mrf.mxu0
    %v1341 = vadd.f32 %v1233, %v1340
    %v1342 = vpop.f32.mrf.mxu0
    %1343 = vmatprep.mubr.bf16.mxu0 0
    %1344 = vmatmul.mubr.bf16.gmra.mxu0 %v1263
    %v1345 = vpop.f32.mrf.mxu0
    %v1346 = vadd.f32 %v1233, %v1345
    %v1347 = vpop.f32.mrf.mxu0
    %v1348 = vpop.f32.mrf.mxu0
    %v1349 = vadd.f32 %v1233, %v1348
    %v1350 = vpop.f32.mrf.mxu0
    %1351 = vmatprep.mubr.bf16.mxu0 0
    %1352 = vmatmul.mubr.bf16.gmra.mxu0 %v1266
    %v1353 = vpop.f32.mrf.mxu0
    %v1354 = vadd.f32 %v1233, %v1353
    %v1355 = vpop.f32.mrf.mxu0
    %v1356 = vpop.f32.mrf.mxu0
    %v1357 = vadd.f32 %v1233, %v1356
    %v1358 = vpop.f32.mrf.mxu0
    %1359 = vmatprep.mubr.bf16.mxu0 0
    %1360 = vmatmul.mubr.bf16.gmra.mxu0 %v1269
    %v1361 = vpop.f32.mrf.mxu0
    %v1362 = vadd.f32 %v1233, %v1361
    %v1363 = vpop.f32.mrf.mxu0
    %v1364 = vpop.f32.mrf.mxu0
    %v1365 = vadd.f32 %v1233, %v1364
    %v1366 = vpop.f32.mrf.mxu0
    %1367 = vdwg.mxu0
    %v1368 = vmax.f32 %v1306, 0.0
    %v1369 = vmax.f32 %v1309, 0.0
    %v1370 = vmax.f32 %v1314, 0.0
    %v1371 = vmax.f32 %v1317, 0.0
    %v1372 = vmax.f32 %v1322, 0.0
    %v1373 = vmax.f32 %v1325, 0.0
    %v1374 = vmax.f32 %v1330, 0.0
    %v1375 = vmax.f32 %v1333, 0.0
    %v1376 = vmax.f32 %v1338, 0.0
    %v1377 = vmax.f32 %v1341, 0.0
    %v1378 = vmax.f32 %v1346, 0.0
    %v1379 = vmax.f32 %v1349, 0.0
    %v1380 = vmax.f32 %v1354, 0.0
    %v1381 = vmax.f32 %v1357, 0.0
    %v1382 = vmax.f32 %v1362, 0.0
    %v1383 = vmax.f32 %v1365, 0.0
    %v1384 = vld [vmem:[%s5] sm:$0xff]
    %v1385 = vld [vmem:[%s5 + $0x8] sm:$0x7f]
    %v1386 = vld [vmem:[%s6] sm:$0xff]
    %v1387 = vld [vmem:[%s6 + $0x8] sm:$0x7f]
    %1389 = vset.pattern.permute.xlu0 0
    %1390 = vperm.xlu0 %1389, %v1386
    %v1391 = vpop.permute.xlu0 %1390
    %1394 = vset.pattern.permute.xlu0 0
    %1395 = vperm.xlu0 %1394, %v1387
    %v1396 = vpop.permute.xlu0 %1395
    %vm1398 = vcmask 523264
    %v1400 = vsel %vm1398, %v1384, 0
    %v1403 = vsel %vm1398, %v1385, 0
    %v1406 = vsel %vm1398, %v1368, 0
    %v1409 = vsel %vm1398, %v1369, 0
    %v1412 = vsel %vm1398, %v1370, 0
    %v1415 = vsel %vm1398, %v1371, 0
    %v1418 = vsel %vm1398, %v1372, 0
    %v1421 = vsel %vm1398, %v1373, 0
    %v1424 = vsel %vm1398, %v1374, 0
    %v1427 = vsel %vm1398, %v1375, 0
    %v1430 = vsel %vm1398, %v1376, 0
    %v1433 = vsel %vm1398, %v1377, 0
    %v1436 = vsel %vm1398, %v1378, 0
    %v1439 = vsel %vm1398, %v1379, 0
    %v1442 = vsel %vm1398, %v1380, 0
    %v1445 = vsel %vm1398, %v1381, 0
    %v1448 = vsel %vm1398, %v1382, 0
    %v1451 = vsel %vm1398, %v1383, 0
    %1453 = vmatprep.subr.mxu0 0.0
    %1454 = vmatpush1.xpose.msra.mxu0 %v1451
    %1455 = vmatprep.subr.mxu0 0.0
    %1456 = vmatpush1.xpose.msra.mxu0 %v1448
    %1457 = vmatprep.subr.mxu0 0.0
    %1458 = vmatpush1.xpose.msra.mxu0 %v1445
    %1459 = vmatprep.subr.mxu0 0.0
    %1460 = vmatpush1.xpose.msra.mxu0 %v1442
    %1461 = vmatprep.subr.mxu0 0.0
    %1462 = vmatpush1.xpose.msra.mxu0 %v1439
    %1463 = vmatprep.subr.mxu0 0.0
    %1464 = vmatpush1.xpose.msra.mxu0 %v1436
    %1465 = vmatprep.subr.mxu0 0.0
    %1466 = vmatpush1.xpose.msra.mxu0 %v1433
    %1467 = vmatprep.subr.mxu0 0.0
    %1468 = vmatpush1.xpose.msra.mxu0 %v1430
    %1469 = vmatprep.subr.mxu0 0.0
    %1470 = vmatpush1.xpose.msra.mxu0 %v1427
    %1471 = vmatprep.subr.mxu0 0.0
    %1472 = vmatpush1.xpose.msra.mxu0 %v1424
    %1473 = vmatprep.subr.mxu0 0.0
    %1474 = vmatpush1.xpose.msra.mxu0 %v1421
    %1475 = vmatprep.subr.mxu0 0.0
    %1476 = vmatpush1.xpose.msra.mxu0 %v1418
    %1477 = vmatprep.subr.mxu0 0.0
    %1478 = vmatpush1.xpose.msra.mxu0 %v1415
    %1479 = vmatprep.subr.mxu0 0.0
    %1480 = vmatpush1.xpose.msra.mxu0 %v1412
    %1481 = vmatprep.subr.mxu0 0.0
    %1482 = vmatpush1.xpose.msra.mxu0 %v1409
    %1483 = vmatprep.subr.mxu0 0.0
    %1484 = vmatpush1.xpose.msra.mxu0 %v1406
    %1485 = vmatprep.subr.mxu0 0.0
    %1486 = vmatpush2.xpose.msra.mxu0 0.0
    %1487 = vmatprep.subr.mxu0 0.0
    %1488 = vmatpush2.xpose.msra.mxu0 0.0
    %1489 = vmatprep.subr.mxu0 0.0
    %1490 = vmatpush2.xpose.msra.mxu0 0.0
    %1491 = vmatprep.subr.mxu0 0.0
    %1492 = vmatpush2.xpose.msra.mxu0 0.0
    %1493 = vmatprep.subr.mxu0 0.0
    %1494 = vmatpush2.xpose.msra.mxu0 0.0
    %1495 = vmatprep.subr.mxu0 0.0
    %1496 = vmatpush2.xpose.msra.mxu0 0.0
    %1497 = vmatprep.subr.mxu0 0.0
    %1498 = vmatpush2.xpose.msra.mxu0 0.0
    %1499 = vmatprep.subr.mxu0 0.0
    %1500 = vmatpush2.xpose.msra.mxu0 0.0
    %1501 = vmatprep.subr.mxu0 0.0
    %1502 = vmatpush2.xpose.msra.mxu0 0.0
    %1503 = vmatprep.subr.mxu0 0.0
    %1504 = vmatpush2.xpose.msra.mxu0 0.0
    %1505 = vmatprep.subr.mxu0 0.0
    %1506 = vmatpush2.xpose.msra.mxu0 0.0
    %1507 = vmatprep.subr.mxu0 0.0
    %1508 = vmatpush2.xpose.msra.mxu0 0.0
    %1509 = vmatprep.subr.mxu0 0.0
    %1510 = vmatpush2.xpose.msra.mxu0 0.0
    %1511 = vmatprep.subr.mxu0 0.0
    %1512 = vmatpush2.xpose.msra.mxu0 0.0
    %1513 = vmatprep.subr.mxu0 0.0
    %1514 = vmatpush2.xpose.msra.mxu0 0.0
    %1515 = vmatprep.subr.mxu0 0.0
    %1516 = vmatpush2.xpose.msra.mxu0 0.0
    %1517 = vmatprep.mubr.f32.mxu0 0.0
    %1518 = vmatmul.mubr.f32.gmra.mxu0 %v1400
    %v1519 = vpop.f32.mrf.mxu0
    %v1520 = vadd.f32 %v1391, %v1519
    %v1521 = vpop.f32.mrf.mxu0
    %1522 = vmatprep.mubr.f32.mxu0 0.0
    %1523 = vmatmul.mubr.f32.gmra.mxu0 %v1403
    %v1524 = vpop.f32.mrf.mxu0
    %v1525 = vadd.f32 %v1396, %v1524
    %v1526 = vpop.f32.mrf.mxu0
    %1527 = vdwg.mxu0
    %1528 = vst [vmem:[%s7] sm:$0xff] %v1520
    %1529 = vst [vmem:[%s7 + $0x8] sm:$0x7f] %v1525
  $region37: #{_lambda_.9} parent=0 // pred_fallthru
    _
  // Predicated region
  $region38: #{_lambda_.9} parent=0 // pred_check
    _
  $region39: #{_lambda_.9} parent=0 // pred_check_branch
    %1531 = sbr.rel (0) target = $region41
  $region40: #{_lambda_.9} parent=0 // pred_region
    _
  $region41: #{_lambda_.9} parent=0 // pred_fallthru
    _
  // Predicated region
  $region42: #{_lambda_.9} parent=0 // pred_check
    _
  $region43: #{_lambda_.9} parent=0 // pred_check_branch
    %1533 = sbr.rel (0) target = $region45
  $region44: #{_lambda_.9} parent=0 // pred_region
    _
  $region45: #{_lambda_.9} parent=0 // pred_fallthru
    _

// kernel: _lambda_.11
$region0: #{_lambda_.11}
  #allocation0 [shape = 'u32[]', space=smem, size = 0x4, offset = 0x4, fixed_abs, tag = 'smem constant byte address 0x4 - core index']
  #allocation1 [shape = 'u32[144,128]{1,0:T(1,128)}', space=vmem, size = 0x12000, scoped, tag = 'internal scratch']
  %s0 = inlined_call_operand.vmem [shape: f32[4,256], index: 0, kind: input, shape index: {}]
  %s1 = inlined_call_operand.vmem [shape: f32[4,256], index: 1, kind: input, shape index: {}]
  %s2 = inlined_call_operand.vmem [shape: s32[1,256], index: 2, kind: input, shape index: {}]
  %s3 = inlined_call_operand.vmem [shape: f32[2,256], index: 3, kind: input, shape index: {}]
  %s4 = inlined_call_operand.vmem [shape: f32[4,128], index: 4, kind: input, shape index: {}]
  %s5 = inlined_call_operand.vmem [shape: f32[4,128], index: 5, kind: input, shape index: {}]
  %s6 = inlined_call_operand.vmem [shape: s32[1,128], index: 6, kind: input, shape index: {}]
  %s7 = inlined_call_operand.vmem [shape: f32[3,128], index: 7, kind: input, shape index: {}]
  %s8 = inlined_call_operand.hbm [shape: f32[1,1], index: 8, kind: output, shape index: {0}]
  %s9 = inlined_call_operand.hbm [shape: f32[1,1], index: 9, kind: output, shape index: {1}]
  %s10 = inlined_call_operand.hbm [shape: f32[1,1], index: 10, kind: output, shape index: {2}]
  %s11 = inlined_call_operand.hbm [shape: f32[1,1], index: 11, kind: output, shape index: {3}]
  %12 = xla_tuple %s8, %s9, %s10, %s11
  %s13 = sld [smem:[#allocation0]]
  $region66: #{_lambda_.11} parent=0
    _
  %s15 = ssub.s32 1, %s13
  %s16 = scalar_select 0, %s15, %s13
  $region1: #{_lambda_.11} parent=0
    #allocation2 [shape = 'u8[512]{0}', space=vmem, size = 0x400, scoped, tag = 'output window, operand 0, single buffered']
    #allocation3 [shape = 's32[1]{0}', space=sflag, size = 0x4, scoped, tag = 'scoped memory for _lambda_.11']
    #allocation4 [shape = 'u8[512]{0}', space=vmem, size = 0x400, scoped, tag = 'output window, operand 1, single buffered']
    #allocation5 [shape = 's32[1]{0}', space=sflag, size = 0x4, scoped, tag = 'scoped memory for _lambda_.11']
    #allocation6 [shape = 'u8[512]{0}', space=vmem, size = 0x400, scoped, tag = 'output window, operand 2, single buffered']
    #allocation7 [shape = 'u8[512]{0}', space=vmem, size = 0x400, scoped, tag = 'output window, operand 3, single buffered']
    #allocation8 [shape = 's32[1]{0}', space=sflag, size = 0x4, scoped, tag = 'scoped memory for _lambda_.11']
    %17 = vsyncpa [#allocation3], 0
    %18 = vsyncpa [#allocation5], 0
    %19 = vsyncpa [#allocation8], 0
    // Predicated region
    $region2: #{_lambda_.11} parent=1 // pred_check
      _
    $region3: #{_lambda_.11} parent=1 // pred_check_branch
      %21 = sbr.rel (0) target = $region5
    $region4: #{_lambda_.11} parent=1 // pred_region
      _
    $region5: #{_lambda_.11} parent=1 // pred_fallthru
      _
    // Predicated region
    $region6: #{_lambda_.11} parent=1 // pred_check
      _
    $region7: #{_lambda_.11} parent=1 // pred_check_branch
      %23 = sbr.rel (0) target = $region9
    $region8: #{_lambda_.11} parent=1 // pred_region
      _
    $region9: #{_lambda_.11} parent=1 // pred_fallthru
      _
    // Predicated region
    $region10: #{_lambda_.11} parent=1 // pred_check
      _
    $region11: #{_lambda_.11} parent=1 // pred_check_branch
      %25 = sbr.rel (0) target = $region13
    $region12: #{_lambda_.11} parent=1 // pred_region
      _
    $region13: #{_lambda_.11} parent=1 // pred_fallthru
      _
    // Predicated region
    $region14: #{_lambda_.11} parent=1 // pred_check
      _
    $region15: #{_lambda_.11} parent=1 // pred_check_branch
      %27 = sbr.rel (0) target = $region17
    $region16: #{_lambda_.11} parent=1 // pred_region
      _
    $region17: #{_lambda_.11} parent=1 // pred_fallthru
      _
    // Predicated region
    $region18: #{_lambda_.11} parent=1 // pred_check
      _
    $region19: #{_lambda_.11} parent=1 // pred_check_branch
      %29 = sbr.rel (0) target = $region21
    $region20: #{_lambda_.11} parent=1 // pred_region
      _
    $region21: #{_lambda_.11} parent=1 // pred_fallthru
      _
    // Predicated region
    $region22: #{_lambda_.11} parent=1 // pred_check
      _
    $region23: #{_lambda_.11} parent=1 // pred_check_branch
      %31 = sbr.rel (0) target = $region25
    $region24: #{_lambda_.11} parent=1 // pred_region
      _
    $region25: #{_lambda_.11} parent=1 // pred_fallthru
      _
    // Predicated region
    $region26: #{_lambda_.11} parent=1 // pred_check
      _
    $region27: #{_lambda_.11} parent=1 // pred_check_branch
      %33 = sbr.rel (0) target = $region29
    $region28: #{_lambda_.11} parent=1 // pred_region
      _
    $region29: #{_lambda_.11} parent=1 // pred_fallthru
      _
    // Predicated region
    $region30: #{_lambda_.11} parent=1 // pred_check
      _
    $region31: #{_lambda_.11} parent=1 // pred_check_branch
      %35 = sbr.rel (0) target = $region33
    $region32: #{_lambda_.11} parent=1 // pred_region
      _
    $region33: #{_lambda_.11} parent=1 // pred_fallthru
      _
    %v36 = vld [vmem:[%s2] sm:$0x3]
    %v37 = vld [vmem:[%s6] sm:$0x1]
    %v38 = vld [vmem:[%s0] sm:$0xff]
    %v39 = vld [vmem:[%s1] sm:$0xff]
    %vm40 = vcmp.gt.s32.totalorder %v36, 0
    %v41 = vsel %vm40, 1, 0
    %v42 = vcvt.s32.f32 %v41
    %v43 = vsub.f32 %v38, %v39
    %v45 = vlaneseq
    %v46 = vshrl.u32 %v45, 7
    %v47 = vsub.s32 0, %v46
    %v48 = vrot.slane %v42, %v47
    %v49 = vlaneseq
    %v50 = vshrl.u32 %v49, 7
    %v51 = vsub.s32 1, %v50
    %v52 = vrot.slane %v42, %v51
    %v56 = vcombine.high %v43, %v43
    %v58 = vmul.f32 %v48, %v43
    %v59 = vmul.f32 %v52, %v56
    %v60 = vand.u32 2147483647, %v58
    %v61 = vand.u32 2147483647, %v59
    %vm62 = vcmp.lt.f32.partialorder %v60, 0.11111111
    %vm63 = vcmp.lt.f32.partialorder %v61, 0.11111111
    %v64 = vsel %vm62, 1, 0
    %v65 = vsel %vm63, 1, 0
    %v66 = vcvt.s32.f32 %v64
    %v67 = vcvt.s32.f32 %v65
    %v68 = vmul.f32 %v66, 4.5
    %v69 = vmul.f32 %v67, 4.5
    %v70 = vmul.f32 %v68, %v58
    %v71 = vmul.f32 %v69, %v59
    %v72 = vmul.f32 %v70, %v58
    %v73 = vmul.f32 %v71, %v59
    %v74 = vsub.f32 1.0, %v66
    %v75 = vsub.f32 1.0, %v67
    %v76 = vsub.f32 %v60, 0.055555556
    %v77 = vsub.f32 %v61, 0.055555556
    %v78 = vmul.f32 %v74, %v76
    %v79 = vmul.f32 %v75, %v77
    %v80 = vadd.f32 %v72, %v78
    %v81 = vadd.f32 %v73, %v79
    %vm82 = vcmp.ge.s32.totalorder %v36, 0
    %v83 = vsel %vm82, 1, 0
    %v84 = vcvt.s32.f32 %v83
    %v86 = vlaneseq
    %v87 = vshrl.u32 %v86, 7
    %v88 = vsub.s32 0, %v87
    %v89 = vrot.slane %v84, %v88
    %v90 = vlaneseq
    %v91 = vshrl.u32 %v90, 7
    %v92 = vsub.s32 1, %v91
    %v93 = vrot.slane %v84, %v92
    %vm96 = vcmask 1040384
    %v97 = vsel %vm96, %v89, 0.0
    %v98 = vsel %vm96, %v93, 0.0
    %v99 = vadd.f32 %v97, %v98
    %100 = vadd.xlane.f32.xlu0 %v99
    %v101 = vpop.xlane.xlu0 %100
    %v102 = vrot.slane %v101, 4
    %v103 = vadd.f32 %v101, %v102
    %v104 = vrot.slane %v103, 2
    %v105 = vadd.f32 %v103, %v104
    %v106 = vrot.slane %v105, 1
    %v107 = vadd.f32 %v105, %v106
    %s108 = vtos %v107
    %s109 = smax.f32 %s108, 1.0
    %vm110 = vcmask 1043456
    %v111 = vsel %vm110, %v80, 0.0
    %v112 = vsel %vm110, %v81, 0.0
    %v113 = vadd.f32 %v111, %v112
    %114 = vadd.xlane.f32.xlu0 %v113
    %v115 = vpop.xlane.xlu0 %114
    %v116 = vrot.slane %v115, 4
    %v117 = vadd.f32 %v115, %v116
    %v118 = vrot.slane %v117, 2
    %v119 = vadd.f32 %v117, %v118
    %v120 = vrot.slane %v119, 1
    %v121 = vadd.f32 %v119, %v120
    %s122 = vtos %v121
    %v123 = vstv %s109
    %v124 = vrcp.pop %v123
    %s125 = vtos %v124
    %s126 = smul.f32 %s122, %s125
    %v127 = vstv %s126
    %vm128 = vcmask 0
    %129 = vst.msk [vmem:[#allocation2] sm:$0x1] %vm128, %v127
    %v130 = vld [vmem:[%s3] sm:$0xf]
    %v133 = vunpack.c.l.s4 1983009808
    %v134 = vunpack.c.0.s8 %v133
    %v135 = vlaneseq
    %v136 = vshrl.u32 %v135, 7
    %v137 = vsub.s32 %v134, %v136
    %v138 = vrot.slane %v130, %v137
    %v139 = vcombine.high %v138, %v138
    %vm142 = vcmask 1041408
    %v143 = vsel %vm142, %v138, -inf
    %v144 = vrot.slane %v143, 4
    %v145 = vmax.f32 %v143, %v144
    %v146 = vrot.slane %v145, 2
    %v147 = vmax.f32 %v145, %v146
    %v148 = vrot.slane %v147, 1
    %v149 = vmax.f32 %v147, %v148
    %v150 = vsel %vm142, %v139, -inf
    %v151 = vrot.slane %v150, 4
    %v152 = vmax.f32 %v150, %v151
    %v153 = vrot.slane %v152, 2
    %v154 = vmax.f32 %v152, %v153
    %v155 = vrot.slane %v154, 1
    %v156 = vmax.f32 %v154, %v155
    %v159 = vcombine.low %v149, %v156
    %v161 = vunpack.c.l.s4 1983009808
    %v162 = vunpack.c.0.s8 %v161
    %v163 = vlaneseq
    %v164 = vshrl.u32 %v163, 7
    %v165 = vsub.s32 %v162, %v164
    %v166 = vrot.slane %v159, %v165
    %v168 = vsub.f32 %v130, %v166
    %v169 = vmul.f32 %v168, 1.442695
    %v170 = vpow.pop %v169
    %v173 = vunpack.c.l.s4 1983009808
    %v174 = vunpack.c.0.s8 %v173
    %v175 = vlaneseq
    %v176 = vshrl.u32 %v175, 7
    %v177 = vsub.s32 %v174, %v176
    %v178 = vrot.slane %v170, %v177
    %v179 = vcombine.high %v178, %v178
    %v182 = vsel %vm142, %v178, 0.0
    %v183 = vrot.slane %v182, 4
    %v184 = vadd.f32 %v182, %v183
    %v185 = vrot.slane %v184, 2
    %v186 = vadd.f32 %v184, %v185
    %v187 = vrot.slane %v186, 1
    %v188 = vadd.f32 %v186, %v187
    %v189 = vsel %vm142, %v179, 0.0
    %v190 = vrot.slane %v189, 4
    %v191 = vadd.f32 %v189, %v190
    %v192 = vrot.slane %v191, 2
    %v193 = vadd.f32 %v191, %v192
    %v194 = vrot.slane %v193, 1
    %v195 = vadd.f32 %v193, %v194
    %v196 = vlog2.pop %v188
    %v197 = vmul.f32 %v196, 0.6931472
    %v198 = vlog2.pop %v195
    %v199 = vmul.f32 %v198, 0.6931472
    %v200 = vadd.f32 %v197, %v149
    %v201 = vadd.f32 %v199, %v156
    %v204 = vcombine.low %v200, %v201
    %v206 = vunpack.c.l.s4 1983009808
    %v207 = vunpack.c.0.s8 %v206
    %v208 = vlaneseq
    %v209 = vshrl.u32 %v208, 7
    %v210 = vsub.s32 %v207, %v209
    %v211 = vrot.slane %v204, %v210
    %v213 = vsub.f32 %v130, %v211
    %v214 = vlaneseq
    %v215 = vshrl.u32 %v214, 7
    %v216 = vlaneseq
    %v217 = vshrl.u32 %v216, 7
    %v218 = vsub.s32 0, %v217
    %v219 = vrot.slane %v36, %v218
    %v220 = vlaneseq
    %v221 = vshrl.u32 %v220, 7
    %v222 = vsub.s32 1, %v221
    %v223 = vrot.slane %v36, %v222
    %vm224 = vcmp.eq.s32.totalorder %v215, %v219
    %vm225 = vcmp.eq.s32.totalorder %v215, %v223
    %v226 = vsel %vm224, 1, 0
    %v227 = vsel %vm225, 1, 0
    %v228 = vcvt.s32.f32 %v226
    %v229 = vcvt.s32.f32 %v227
    %v232 = vcombine.low %v228, %v229
    %v234 = vunpack.c.l.s4 1983009808
    %v235 = vunpack.c.0.s8 %v234
    %v236 = vlaneseq
    %v237 = vshrl.u32 %v236, 7
    %v238 = vsub.s32 %v235, %v237
    %v239 = vrot.slane %v232, %v238
    %v241 = vmul.f32 %v213, %v239
    %v244 = vunpack.c.l.s4 1983009808
    %v245 = vunpack.c.0.s8 %v244
    %v246 = vlaneseq
    %v247 = vshrl.u32 %v246, 7
    %v248 = vsub.s32 %v245, %v247
    %v249 = vrot.slane %v241, %v248
    %v250 = vcombine.high %v249, %v249
    %v253 = vsel %vm142, %v249, 0.0
    %v254 = vrot.slane %v253, 4
    %v255 = vadd.f32 %v253, %v254
    %v256 = vrot.slane %v255, 2
    %v257 = vadd.f32 %v255, %v256
    %v258 = vrot.slane %v257, 1
    %v259 = vadd.f32 %v257, %v258
    %v260 = vsel %vm142, %v250, 0.0
    %v261 = vrot.slane %v260, 4
    %v262 = vadd.f32 %v260, %v261
    %v263 = vrot.slane %v262, 2
    %v264 = vadd.f32 %v262, %v263
    %v265 = vrot.slane %v264, 1
    %v266 = vadd.f32 %v264, %v265
    %v267 = vmul.f32 %v259, %v89
    %v268 = vmul.f32 %v266, %v93
    %v269 = vsel %vm96, %v267, 0.0
    %v270 = vsel %vm96, %v268, 0.0
    %v271 = vadd.f32 %v269, %v270
    %272 = vadd.xlane.f32.xlu0 %v271
    %v273 = vpop.xlane.xlu0 %272
    %v274 = vrot.slane %v273, 4
    %v275 = vadd.f32 %v273, %v274
    %v276 = vrot.slane %v275, 2
    %v277 = vadd.f32 %v275, %v276
    %v278 = vrot.slane %v277, 1
    %v279 = vadd.f32 %v277, %v278
    %s280 = vtos %v279
    %s281 = ssub.f32 0.0, %s280
    %v282 = vstv %s109
    %v283 = vrcp.pop %v282
    %s284 = vtos %v283
    %s285 = smul.f32 %s281, %s284
    %v286 = vstv %s285
    %287 = vst.msk [vmem:[#allocation4] sm:$0x1] %vm128, %v286
    %v288 = vld [vmem:[%s4] sm:$0xf]
    %v289 = vld [vmem:[%s5] sm:$0xf]
    %vm290 = vcmp.gt.s32.totalorder %v37, 0
    %v291 = vsel %vm290, 1, 0
    %v292 = vcvt.s32.f32 %v291
    %v293 = vsub.f32 %v288, %v289
    %v295 = vlaneseq
    %v296 = vshrl.u32 %v295, 7
    %v297 = vsub.s32 0, %v296
    %v298 = vrot.slane %v292, %v297
    %v300 = vmul.f32 %v298, %v293
    %v301 = vand.u32 2147483647, %v300
    %vm302 = vcmp.lt.f32.partialorder %v301, 1.0
    %v303 = vsel %vm302, 1, 0
    %v304 = vcvt.s32.f32 %v303
    %v305 = vmul.f32 %v304, 0.5
    %v306 = vmul.f32 %v305, %v300
    %v307 = vmul.f32 %v306, %v300
    %v308 = vsub.f32 1.0, %v304
    %v309 = vsub.f32 %v301, 0.5
    %v310 = vmul.f32 %v308, %v309
    %v311 = vadd.f32 %v307, %v310
    %vm312 = vcmp.ge.s32.totalorder %v37, 0
    %v313 = vsel %vm312, 1, 0
    %v314 = vcvt.s32.f32 %v313
    %v315 = vsel %vm96, %v314, 0.0
    %316 = vadd.xlane.f32.xlu0 %v315
    %v317 = vpop.xlane.xlu0 %316
    %v318 = vrot.slane %v317, 4
    %v319 = vadd.f32 %v317, %v318
    %v320 = vrot.slane %v319, 2
    %v321 = vadd.f32 %v319, %v320
    %v322 = vrot.slane %v321, 1
    %v323 = vadd.f32 %v321, %v322
    %s324 = vtos %v323
    %s325 = smax.f32 %s324, 1.0
    %v326 = vsel %vm110, %v311, 0.0
    %327 = vadd.xlane.f32.xlu0 %v326
    %v328 = vpop.xlane.xlu0 %327
    %v329 = vrot.slane %v328, 4
    %v330 = vadd.f32 %v328, %v329
    %v331 = vrot.slane %v330, 2
    %v332 = vadd.f32 %v330, %v331
    %v333 = vrot.slane %v332, 1
    %v334 = vadd.f32 %v332, %v333
    %s335 = vtos %v334
    %v336 = vstv %s325
    %v337 = vrcp.pop %v336
    %s338 = vtos %v337
    %s339 = smul.f32 %s335, %s338
    %v340 = vstv %s339
    %341 = vst.msk [vmem:[#allocation6] sm:$0x1] %vm128, %v340
    %v342 = vld [vmem:[%s7] sm:$0x7]
    %vm343 = vcmask 1042432
    %v344 = vsel %vm343, %v342, -inf
    %v345 = vrot.slane %v344, 4
    %v346 = vmax.f32 %v344, %v345
    %v347 = vrot.slane %v346, 2
    %v348 = vmax.f32 %v346, %v347
    %v349 = vrot.slane %v348, 1
    %v350 = vmax.f32 %v348, %v349
    %v351 = vsub.f32 %v342, %v350
    %v352 = vmul.f32 %v351, 1.442695
    %v353 = vpow.pop %v352
    %v354 = vsel %vm343, %v353, 0.0
    %v355 = vrot.slane %v354, 4
    %v356 = vadd.f32 %v354, %v355
    %v357 = vrot.slane %v356, 2
    %v358 = vadd.f32 %v356, %v357
    %v359 = vrot.slane %v358, 1
    %v360 = vadd.f32 %v358, %v359
    %v361 = vlog2.pop %v360
    %v362 = vmul.f32 %v361, 0.6931472
    %v363 = vadd.f32 %v362, %v350
    %v364 = vsub.f32 %v342, %v363
    %v365 = vlaneseq
    %v366 = vshrl.u32 %v365, 7
    %v367 = vsub.s32 0, %v366
    %v368 = vrot.slane %v37, %v367
    %vm369 = vcmp.eq.s32.totalorder %v215, %v368
    %v370 = vsel %vm369, 1, 0
    %v371 = vcvt.s32.f32 %v370
    %v372 = vmul.f32 %v364, %v371
    %v373 = vsel %vm343, %v372, 0.0
    %v374 = vrot.slane %v373, 4
    %v375 = vadd.f32 %v373, %v374
    %v376 = vrot.slane %v375, 2
    %v377 = vadd.f32 %v375, %v376
    %v378 = vrot.slane %v377, 1
    %v379 = vadd.f32 %v377, %v378
    %v380 = vsel %vm96, 1.0, 0.0
    %381 = vadd.xlane.f32.xlu0 %v380
    %v382 = vpop.xlane.xlu0 %381
    %v383 = vrot.slane %v382, 4
    %v384 = vadd.f32 %v382, %v383
    %v385 = vrot.slane %v384, 2
    %v386 = vadd.f32 %v384, %v385
    %v387 = vrot.slane %v386, 1
    %v388 = vadd.f32 %v386, %v387
    %s389 = vtos %v388
    %s390 = smax.f32 %s389, 1.0
    %v391 = vsel %vm96, %v379, 0.0
    %392 = vadd.xlane.f32.xlu0 %v391
    %v393 = vpop.xlane.xlu0 %392
    %v394 = vrot.slane %v393, 4
    %v395 = vadd.f32 %v393, %v394
    %v396 = vrot.slane %v395, 2
    %v397 = vadd.f32 %v395, %v396
    %v398 = vrot.slane %v397, 1
    %v399 = vadd.f32 %v397, %v398
    %s400 = vtos %v399
    %s401 = ssub.f32 0.0, %s400
    %v402 = vstv %s390
    %v403 = vrcp.pop %v402
    %s404 = vtos %v403
    %s405 = smul.f32 %s401, %s404
    %v406 = vstv %s405
    %407 = vst.msk [vmem:[#allocation7] sm:$0x1] %vm128, %v406
    // Predicated region
    $region34: #{_lambda_.11} parent=1 // pred_check
      _
    $region35: #{_lambda_.11} parent=1 // pred_check_branch
      %409 = sbr.rel (0) target = $region37
    $region36: #{_lambda_.11} parent=1 // pred_region
      %s411 = ssub.s32 16, 16
      %412 = vsyncadd [#allocation3], %s411
      %s414 = sshll.u32 [#allocation2], 4
      %s415 = int_to_ptr.vmem [resolvable:$true] %s414
      %417 = dma.vmem_to_hbm [thread:$0]  %s415, 16, %s8, [#allocation3]
    $region37: #{_lambda_.11} parent=1 // pred_fallthru
      _
    // Predicated region
    $region38: #{_lambda_.11} parent=1 // pred_check
      _
    $region39: #{_lambda_.11} parent=1 // pred_check_branch
      %419 = sbr.rel (0) target = $region41
    $region40: #{_lambda_.11} parent=1 // pred_region
      %s421 = ssub.s32 16, 16
      %422 = vsyncadd [#allocation5], %s421
      %s424 = sshll.u32 [#allocation4], 4
      %s425 = int_to_ptr.vmem [resolvable:$true] %s424
      %427 = dma.vmem_to_hbm [thread:$0]  %s425, 16, %s9, [#allocation5]
    $region41: #{_lambda_.11} parent=1 // pred_fallthru
      _
    // Predicated region
    $region42: #{_lambda_.11} parent=1 // pred_check
      _
    $region43: #{_lambda_.11} parent=1 // pred_check_branch
      %429 = sbr.rel (0) target = $region45
    $region44: #{_lambda_.11} parent=1 // pred_region
      %s431 = ssub.s32 16, 16
      %432 = vsyncadd [#allocation5], %s431
      %s434 = sshll.u32 [#allocation6], 4
      %s435 = int_to_ptr.vmem [resolvable:$true] %s434
      %437 = dma.vmem_to_hbm [thread:$0]  %s435, 16, %s10, [#allocation5]
    $region45: #{_lambda_.11} parent=1 // pred_fallthru
      _
    // Predicated region
    $region46: #{_lambda_.11} parent=1 // pred_check
      _
    $region47: #{_lambda_.11} parent=1 // pred_check_branch
      %439 = sbr.rel (0) target = $region49
    $region48: #{_lambda_.11} parent=1 // pred_region
      %s441 = ssub.s32 16, 16
      %442 = vsyncadd [#allocation8], %s441
      %s444 = sshll.u32 [#allocation7], 4
      %s445 = int_to_ptr.vmem [resolvable:$true] %s444
      %447 = dma.vmem_to_hbm [thread:$0]  %s445, 16, %s11, [#allocation8]
    $region49: #{_lambda_.11} parent=1 // pred_fallthru
      _
    // Predicated region
    $region50: #{_lambda_.11} parent=1 // pred_check
      _
    $region51: #{_lambda_.11} parent=1 // pred_check_branch
      %449 = sbr.rel (0) target = $region53
    $region52: #{_lambda_.11} parent=1 // pred_region
      %450 = dma.done [#allocation3], 16
    $region53: #{_lambda_.11} parent=1 // pred_fallthru
      _
    // Predicated region
    $region54: #{_lambda_.11} parent=1 // pred_check
      _
    $region55: #{_lambda_.11} parent=1 // pred_check_branch
      %452 = sbr.rel (0) target = $region57
    $region56: #{_lambda_.11} parent=1 // pred_region
      %453 = dma.done [#allocation5], 16
    $region57: #{_lambda_.11} parent=1 // pred_fallthru
      _
    // Predicated region
    $region58: #{_lambda_.11} parent=1 // pred_check
      _
    $region59: #{_lambda_.11} parent=1 // pred_check_branch
      %455 = sbr.rel (0) target = $region61
    $region60: #{_lambda_.11} parent=1 // pred_region
      %456 = dma.done [#allocation5], 16
    $region61: #{_lambda_.11} parent=1 // pred_fallthru
      _
    // Predicated region
    $region62: #{_lambda_.11} parent=1 // pred_check
      _
    $region63: #{_lambda_.11} parent=1 // pred_check_branch
      %458 = sbr.rel (0) target = $region65
    $region64: #{_lambda_.11} parent=1 // pred_region
      %459 = dma.done [#allocation8], 16
    $region65: #{_lambda_.11} parent=1 // pred_fallthru
      _
    %460 = vsyncpa [#allocation3], 1
    %461 = vsyncpa [#allocation5], 1
    %462 = vsyncpa [#allocation8], 1

</llo_original>
